<compile_context>
chip_gen: v6e
topology: v6e:2x2x1
jax: 0.10.0
libtpu: 0.0.40
codegen_flags: <defaults>
</compile_context>

<pallas_src>
import functools
import math

import jax
import jax.numpy as jnp
from jax.experimental import pallas as pl
from jax.experimental.pallas import tpu as pltpu


# ------------------------------ fused kernel -------------------------------
#
# In-kernel layouts (TB = batch tile, all static):
#   patches p_ref : (144*TB, 768) bf16, rows (hi, wi, pw, po, b) with conv1
#                   output position (ho, wo) = (2*po+hi, 2*pw+wi); cols
#                   (ki, kj, cin).  Row order makes maxpool1 two half-maxima.
#   x2f scratch   : (10*TB, 640) bf16 = pooled conv1 output zero padded by 2,
#                   row = h_pad*TB + b, lanes = w_pad*64 + c (no cin padding).
#   c2  scratch   : (16*TB, 1024) bf16 = conv2 im2col, rows (ho2, wo2, b),
#                   cols (ki, kj, cin).
#   w3_ref        : (512, 1024) "positional" conv3 weights, rows (po2,pw2,ci),
#                   cols (ho3, wo3, co)  (3x3 conv on a 2x2 input, pad 1).
#   lw1_ref       : (1024, 256) rows permuted to (ho3, wo3, co) so the torch
#                   NCHW flatten is absorbed into the weight layout.
#   lw2_ref       : (256, 128) zero-padded to 128 output lanes.

def _net_fused_kernel(p_ref, w1_ref, b1_ref, w2_ref, b2_ref, w3_ref, b3_ref,
                      lw1_ref, lb1_ref, lw2_ref, lb2_ref,
                      o_ref, x2f_ref, c2_ref):
    f32 = jnp.float32
    bf16 = jnp.bfloat16
    TB = o_ref.shape[0]                                   # batch tile

    # ---- conv1: relu(patches @ W1 + b1) on the MXU (bf16 in, f32 acc) ----
    y1 = jnp.dot(p_ref[...], w1_ref[...], preferred_element_type=f32)
    y1 = jnp.maximum(y1 + b1_ref[...], 0.0)               # (144*TB, 64)

    # ---- maxpool1 (2x2/2): two whole-array maxima on contiguous halves ----
    v = jnp.maximum(y1[:72 * TB], y1[72 * TB:])           # reduce hi -> (wi,pw,po,b)
    u = jnp.maximum(v[:36 * TB], v[36 * TB:])             # reduce wi -> (pw,po,b), (36*TB,64)

    # ---- zero only the padding border of x2f (h<2, h>=8, w<2, w>=8) ----
    x2f_ref[pl.ds(0, 2 * TB), :] = jnp.zeros((2 * TB, 640), bf16)
    x2f_ref[pl.ds(8 * TB, 2 * TB), :] = jnp.zeros((2 * TB, 640), bf16)
    x2f_ref[pl.ds(2 * TB, 6 * TB), pl.ds(0, 128)] = jnp.zeros((6 * TB, 128), bf16)
    x2f_ref[pl.ds(2 * TB, 6 * TB), pl.ds(512, 128)] = jnp.zeros((6 * TB, 128), bf16)

    # ---- scatter pooled conv1 into x2f interior ----
    # u rows (pw, po, b) -> x2f row (2+po)*TB + b, lanes (2+pw)*64 + c.
    # pw pairs give three aligned 128-lane block stores of (6*TB, 128).
    for p2 in range(3):
        left = u[(2 * p2) * 6 * TB:(2 * p2 + 1) * 6 * TB, :]
        right = u[(2 * p2 + 1) * 6 * TB:(2 * p2 + 2) * 6 * TB, :]
        x2f_ref[pl.ds(2 * TB, 6 * TB), pl.ds(128 + p2 * 128, 128)] = (
            jnp.concatenate([left, right], axis=1).astype(bf16))

    # ---- conv2 im2col: coalesced rectangular copies (16 loads, 64 stores) ----
    for ho2 in range(4):
        for ki in range(4):
            src = x2f_ref[pl.ds((2 * ho2 + ki) * TB, TB), :]       # (TB, 640)
            for wo2 in range(4):
                c2_ref[pl.ds((ho2 * 4 + wo2) * TB, TB),
                       pl.ds(ki * 256, 256)] = src[:, wo2 * 128:wo2 * 128 + 256]

    # ---- conv2: relu(c2 @ W2 + b2), K = 1024 (no cin zero padding) ----
    y2 = jnp.dot(c2_ref[...], w2_ref[...], preferred_element_type=f32)
    y2 = jnp.maximum(y2 + b2_ref[...], 0.0)               # (16*TB, 128) rows (ho2,wo2,b)

    # ---- maxpool2 (2x2/2): constant number of block maxima ----
    t0 = jnp.maximum(y2[0:4 * TB], y2[4 * TB:8 * TB])     # ho2 pair (0,1) -> rows (wo2,b)
    t1 = jnp.maximum(y2[8 * TB:12 * TB], y2[12 * TB:16 * TB])
    p00 = jnp.maximum(t0[0:TB], t0[TB:2 * TB])            # (po2=0, pw2=0)
    p01 = jnp.maximum(t0[2 * TB:3 * TB], t0[3 * TB:4 * TB])
    p10 = jnp.maximum(t1[0:TB], t1[TB:2 * TB])
    p11 = jnp.maximum(t1[2 * TB:3 * TB], t1[3 * TB:4 * TB])
    x3 = jnp.concatenate([p00, p01, p10, p11], axis=1)    # (TB, 512) cols (po2,pw2,ci)

    # ---- whole-batch-tile tail: conv3 -> linear1 -> linear2 ----
    y3 = jnp.dot(x3.astype(bf16), w3_ref[...], preferred_element_type=f32)
    y3 = jnp.maximum(y3 + b3_ref[...], 0.0)               # (TB, 1024) cols (ho3,wo3,co)

    h = jnp.dot(y3.astype(bf16), lw1_ref[...], preferred_element_type=f32)
    h = jnp.maximum(h + lb1_ref[...], 0.0)                # (TB, 256)

    o = jnp.dot(h.astype(bf16), lw2_ref[...], preferred_element_type=f32)
    o_ref[...] = o + lb2_ref[...]                         # one lane-dense (TB,128) store


# ------------------------------- forward ------------------------------------

def _pick_batch_tile(B, target=32):
    """Batch tile: whole batch if small, else a multiple-of-8 divisor <= target."""
    if B <= target:
        return B
    tb = (target // 8) * 8
    while tb >= 8:
        if B % tb == 0:
            return tb
        tb -= 8
    return B  # fallback: single tile


def net_forward(pp, x_nchw, *, action_dim, block_b=None):
    """pp = prepare_params(...) output; x_nchw: (B, 12, 44, 44)."""
    B = x_nchw.shape[0]
    C = 12
    TB = _pick_batch_tile(B) if block_b is None else block_b
    assert B % TB == 0
    NT = B // TB

    x = jnp.transpose(x_nchw, (0, 2, 3, 1)).astype(jnp.float32)   # NHWC
    xp = jnp.pad(x, ((0, 0), (4, 4), (4, 4), (0, 0)))             # (B,52,52,12)

    # conv1 im2col (K=8, S=4, P=4) via the 4-block trick: 4 slices + 3 concats.
    xb = xp.reshape(B, 13, 4, 13, 4, C)
    p00 = xb[:, 0:12, :, 0:12, :, :]
    p01 = xb[:, 0:12, :, 1:13, :, :]
    p10 = xb[:, 1:13, :, 0:12, :, :]
    p11 = xb[:, 1:13, :, 1:13, :, :]
    top = jnp.concatenate([p00, p01], axis=4)           # kj 0..7
    bot = jnp.concatenate([p10, p11], axis=4)
    pat = jnp.concatenate([top, bot], axis=2)           # (B,12,8,12,8,12) [b,ho,ki,wo,kj,c]
    # b=(t,bl), ho=(po,hi), wo=(pw,wi)  ->  rows (t, hi, wi, pw, po, bl)
    pat = pat.reshape(NT, TB, 6, 2, 8, 6, 2, 8, C)      # [t,bl,po,hi,ki,pw,wi,kj,c]
    pat = pat.transpose(0, 3, 6, 5, 2, 1, 4, 7, 8)      # [t,hi,wi,pw,po,bl,ki,kj,c]
    patches = pat.reshape(NT * 144 * TB, 8 * 8 * C).astype(jnp.bfloat16)

    flops = 2 * B * (144 * 768 * 64 + 16 * 1024 * 128
                     + 512 * 1024 + 1024 * 256 + 256 * 128)
    bytes_accessed = int(patches.size) * 2 + B * 128 * 4
    for v in pp.values():
        bytes_accessed += int(v.size) * int(v.dtype.itemsize)

    def _w_spec(arr):   # resident weight/bias: full block, constant index
        return pl.BlockSpec(arr.shape, lambda i: (0, 0))

    weight_keys = ("w1", "b1", "w2", "b2", "w3", "b3", "lw1", "lb1", "lw2", "lb2")
    grid_spec = pltpu.PrefetchScalarGridSpec(
        num_scalar_prefetch=0,
        grid=(NT,),
        in_specs=[pl.BlockSpec((144 * TB, 768), lambda i: (i, 0))]
                 + [_w_spec(pp[k]) for k in weight_keys],
        out_specs=pl.BlockSpec((TB, 128), lambda i: (i, 0)),
        scratch_shapes=[pltpu.VMEM((10 * TB, 640), jnp.bfloat16),    # pooled+padded conv1
                        pltpu.VMEM((16 * TB, 1024), jnp.bfloat16)],  # conv2 im2col
    )

    out_pad = pl.pallas_call(
        _net_fused_kernel,
        out_shape=jax.ShapeDtypeStruct((B, 128), jnp.float32),
        grid_spec=grid_spec,
        compiler_params=pltpu.CompilerParams(
            dimension_semantics=("parallel",),
            # raise further when using large batch tiles (TB ~ 96-128 on v6e/v5e)
            vmem_limit_bytes=32 * 1024 * 1024),
        cost_estimate=pl.CostEstimate(flops=flops, transcendentals=0,
                                      bytes_accessed=bytes_accessed),
    )(patches, *[pp[k] for k in weight_keys])
    return out_pad[:, :action_dim]


# -------------------- one-time weight repacking (hoisted) --------------------

def prepare_params(params, action_dim):
    bf16, f32 = jnp.bfloat16, jnp.float32
    cw1, cb1 = params["cw1"], params["cb1"]
    cw2, cb2 = params["cw2"], params["cb2"]
    cw3, cb3 = params["cw3"], params["cb3"]
    lw1, lb1 = params["lw1"], params["lb1"]
    lw2, lb2 = params["lw2"], params["lb2"]

    # conv1: (64,12,8,8) -> rows (ki,kj,cin), cols cout
    w1 = jnp.transpose(cw1, (2, 3, 1, 0)).reshape(8 * 8 * 12, 64).astype(bf16)
    b1 = cb1.reshape(1, 64).astype(f32)

    # conv2: (128,64,4,4) -> rows (ki,kj,cin) with NO cin padding (K = 1024)
    w2 = jnp.transpose(cw2, (2, 3, 1, 0)).reshape(1024, 128).astype(bf16)
    b2 = cb2.reshape(1, 128).astype(f32)

    # conv3 "positional" weights: rows (po,pw,ci) -> cols (ho3,wo3,co).
    # 3x3 conv, pad 1, on a 2x2 input: ki = po+1-ho3, kj = pw+1-wo3.
    col_blocks = []
    for ho3 in range(2):
        for wo3 in range(2):
            row_blocks = []
            for po in range(2):
                for pw in range(2):
                    row_blocks.append(
                        jnp.transpose(cw3[:, :, po + 1 - ho3, pw + 1 - wo3]))  # (128,256)
            col_blocks.append(jnp.concatenate(row_blocks, axis=0))             # (512,256)
    w3 = jnp.concatenate(col_blocks, axis=1).astype(bf16)                      # (512,1024)
    b3 = jnp.tile(cb3, 4).reshape(1, 1024).astype(f32)

    # linear1: torch flatten order is (co, ho3, wo3); reorder rows to (ho3,wo3,co)
    lw1p = jnp.transpose(lw1.reshape(256, 256, 2, 2),
                         (2, 3, 1, 0)).reshape(1024, 256).astype(bf16)
    lb1p = lb1.reshape(1, 256).astype(f32)

    # linear2: (in,out) layout, output padded to 128 lanes (sliced in wrapper)
    lw2p = jnp.zeros((256, 128), f32).at[:, :action_dim].set(lw2.T).astype(bf16)
    lb2p = jnp.zeros((1, 128), f32).at[0, :action_dim].set(lb2)

    return {"w1": w1, "b1": b1, "w2": w2, "b2": b2, "w3": w3, "b3": b3,
            "lw1": lw1p, "lb1": lb1p, "lw2": lw2p, "lb2": lb2p}


# -------------------------- pure-JAX reference -------------------------------

def reference_forward(params, x):
    def conv(x, w, b, stride, pad):
        y = jax.lax.conv_general_dilated(
            x, w, window_strides=(stride, stride),
            padding=((pad, pad), (pad, pad)),
            dimension_numbers=("NCHW", "OIHW", "NCHW"))
        return jax.nn.relu(y + b.reshape(1, -1, 1, 1))

    def pool(x):
        return jax.lax.reduce_window(x, -jnp.inf, jax.lax.max,
                                     (1, 1, 2, 2), (1, 1, 2, 2), "VALID")

    y = conv(x, params["cw1"], params["cb1"], 4, 4)
    y = pool(y)
    y = conv(y, params["cw2"], params["cb2"], 2, 2)
    y = pool(y)
    y = conv(y, params["cw3"], params["cb3"], 1, 1)
    y = y.reshape(y.shape[0], -1)
    y = jax.nn.relu(y @ params["lw1"].T + params["lb1"])
    return y @ params["lw2"].T + params["lb2"]


# --------------------------- deterministic init ------------------------------

def orthogonal_init(key, shape):
    rows = shape[0]
    cols = math.prod(shape[1:])
    n = max(rows, cols)
    a = jax.random.normal(key, (n, n), dtype=jnp.float32)
    q, r = jnp.linalg.qr(a)
    q = q * jnp.sign(jnp.diag(r))
    return q[:rows, :cols].reshape(shape)


def init_params(key, action_dim):
    ks = jax.random.split(key, 5)
    return {
        "cw1": orthogonal_init(ks[0], (64, 12, 8, 8)),
        "cb1": jnp.zeros((64,), jnp.float32),
        "cw2": orthogonal_init(ks[1], (128, 64, 4, 4)),
        "cb2": jnp.zeros((128,), jnp.float32),
        "cw3": orthogonal_init(ks[2], (256, 128, 3, 3)),
        "cb3": jnp.zeros((256,), jnp.float32),
        "lw1": orthogonal_init(ks[3], (256, 1024)),   # torch Linear: (out, in)
        "lb1": jnp.zeros((256,), jnp.float32),
        "lw2": orthogonal_init(ks[4], (action_dim, 256)),
        "lb2": jnp.zeros((action_dim,), jnp.float32),
    }


# ----------------------------------- main ------------------------------------

if __name__ == "__main__":
    key = jax.random.PRNGKey(0)
    k_params, k_x = jax.random.split(key)

    action_dim = 6
    batch = 2
    params = init_params(k_params, action_dim)
    pp = prepare_params(params, action_dim)        # one-time repacking (hoisted)

    # 44x44 input -> 2x2x256 = 1024 features, matching Linear(1024, .)
    x = jax.random.normal(k_x, (batch, 12, 44, 44), dtype=jnp.float32)

    fwd = jax.jit(functools.partial(net_forward, action_dim=action_dim))
    out = jax.block_until_ready(fwd(pp, x))
    assert out.shape == (batch, action_dim)
    assert bool(jnp.all(jnp.isfinite(out)))

    # sanity check vs an f32 pure-JAX reference (bf16 MXU operands => loose tol)
    ref = jax.block_until_ready(jax.jit(reference_forward)(params, x))
    err = float(jnp.max(jnp.abs(out - ref)))
    scale = 1.0 + float(jnp.max(jnp.abs(ref)))
    assert err <= 0.08 * scale, f"mismatch: max abs err {err} vs scale {scale}"

    print("KERNEL_OK")
</pallas_src>

<mosaic_0001>
module attributes {stable_mosaic.version = 11 : i64} {
  func.func @_net_fused_kernel(%arg0: i32, %arg1: memref<288x768xbf16, #tpu.memory_space<vmem>>, %arg2: memref<768x64xbf16, #tpu.memory_space<vmem>>, %arg3: memref<1x64xf32, #tpu.memory_space<vmem>>, %arg4: memref<1024x128xbf16, #tpu.memory_space<vmem>>, %arg5: memref<1x128xf32, #tpu.memory_space<vmem>>, %arg6: memref<512x1024xbf16, #tpu.memory_space<vmem>>, %arg7: memref<1x1024xf32, #tpu.memory_space<vmem>>, %arg8: memref<1024x256xbf16, #tpu.memory_space<vmem>>, %arg9: memref<1x256xf32, #tpu.memory_space<vmem>>, %arg10: memref<256x128xbf16, #tpu.memory_space<vmem>>, %arg11: memref<1x128xf32, #tpu.memory_space<vmem>>, %arg12: memref<2x128xf32, #tpu.memory_space<vmem>>, %arg13: memref<20x640xbf16, #tpu.memory_space<vmem>>, %arg14: memref<32x1024xbf16, #tpu.memory_space<vmem>>) attributes {dimension_semantics = [#tpu.dimension_semantics<parallel>], iteration_bounds = array<i64: 1>, scalar_prefetch = 0 : i64, scratch_operands = 2 : i64, tpu.core_type = #tpu.core_type<tc>, window_params = [{transform_indices = @transform_0, window_bounds = array<i64: 288, 768>}, {pipeline_mode = #tpu.pipeline_mode<synchronous>, transform_indices = @transform_1, window_bounds = array<i64: 768, 64>}, {pipeline_mode = #tpu.pipeline_mode<synchronous>, transform_indices = @transform_2, window_bounds = array<i64: 1, 64>}, {pipeline_mode = #tpu.pipeline_mode<synchronous>, transform_indices = @transform_3, window_bounds = array<i64: 1024, 128>}, {pipeline_mode = #tpu.pipeline_mode<synchronous>, transform_indices = @transform_4, window_bounds = array<i64: 1, 128>}, {pipeline_mode = #tpu.pipeline_mode<synchronous>, transform_indices = @transform_5, window_bounds = array<i64: 512, 1024>}, {pipeline_mode = #tpu.pipeline_mode<synchronous>, transform_indices = @transform_6, window_bounds = array<i64: 1, 1024>}, {pipeline_mode = #tpu.pipeline_mode<synchronous>, transform_indices = @transform_7, window_bounds = array<i64: 1024, 256>}, {pipeline_mode = #tpu.pipeline_mode<synchronous>, transform_indices = @transform_8, window_bounds = array<i64: 1, 256>}, {pipeline_mode = #tpu.pipeline_mode<synchronous>, transform_indices = @transform_9, window_bounds = array<i64: 256, 128>}, {pipeline_mode = #tpu.pipeline_mode<synchronous>, transform_indices = @transform_10, window_bounds = array<i64: 1, 128>}, {transform_indices = @transform_11, window_bounds = array<i64: 2, 128>}]} {
    %c0 = arith.constant 0 : index
    %c0_0 = arith.constant 0 : index
    %0 = vector.load %arg1[%c0, %c0_0] : memref<288x768xbf16, #tpu.memory_space<vmem>>, vector<288x768xbf16>
    %c0_1 = arith.constant 0 : index
    %c0_2 = arith.constant 0 : index
    %1 = vector.load %arg2[%c0_1, %c0_2] : memref<768x64xbf16, #tpu.memory_space<vmem>>, vector<768x64xbf16>
    %cst = arith.constant dense<0.000000e+00> : vector<288x64xf32>
    %2 = tpu.matmul %0, %1, %cst {dimension_numbers = #tpu.dot_dimension_numbers<[1], [0], [0], [1], [0, 0, 1, 1], [], []>} : vector<288x768xbf16>, vector<768x64xbf16>, vector<288x64xf32> -> vector<288x64xf32>
    %c0_3 = arith.constant 0 : index
    %c0_4 = arith.constant 0 : index
    %3 = vector.load %arg3[%c0_3, %c0_4] : memref<1x64xf32, #tpu.memory_space<vmem>>, vector<1x64xf32>
    %4 = vector.broadcast %3 : vector<1x64xf32> to vector<288x64xf32>
    %5 = arith.addf %2, %4 : vector<288x64xf32>
    %cst_5 = arith.constant 0.000000e+00 : f32
    %6 = vector.broadcast %cst_5 : f32 to vector<288x64xf32>
    %7 = arith.maximumf %5, %6 : vector<288x64xf32>
    %8 = vector.extract_strided_slice %7 {offsets = [0, 0], sizes = [144, 64], strides = [1, 1]} : vector<288x64xf32> to vector<144x64xf32>
    %9 = vector.extract_strided_slice %7 {offsets = [144, 0], sizes = [144, 64], strides = [1, 1]} : vector<288x64xf32> to vector<144x64xf32>
    %10 = arith.maximumf %8, %9 : vector<144x64xf32>
    %11 = vector.extract_strided_slice %10 {offsets = [0, 0], sizes = [72, 64], strides = [1, 1]} : vector<144x64xf32> to vector<72x64xf32>
    %12 = vector.extract_strided_slice %10 {offsets = [72, 0], sizes = [72, 64], strides = [1, 1]} : vector<144x64xf32> to vector<72x64xf32>
    %13 = arith.maximumf %11, %12 : vector<72x64xf32>
    %cst_6 = arith.constant 0.000000e+00 : bf16
    %14 = vector.broadcast %cst_6 : bf16 to vector<4x640xbf16>
    %c0_7 = arith.constant 0 : index
    %c0_8 = arith.constant 0 : index
    %15 = vector.load %arg13[%c0_7, %c0_8] : memref<20x640xbf16, #tpu.memory_space<vmem>>, vector<4x640xbf16>
    tpu.vector_store %arg13[%c0_7, %c0_8], %14 {strides = array<i32>} : memref<20x640xbf16, #tpu.memory_space<vmem>>, vector<4x640xbf16>,
    %cst_9 = arith.constant 0.000000e+00 : bf16
    %16 = vector.broadcast %cst_9 : bf16 to vector<4x640xbf16>
    %c16 = arith.constant 16 : index
    %c0_10 = arith.constant 0 : index
    %17 = vector.load %arg13[%c16, %c0_10] : memref<20x640xbf16, #tpu.memory_space<vmem>>, vector<4x640xbf16>
    tpu.vector_store %arg13[%c16, %c0_10], %16 {strides = array<i32>} : memref<20x640xbf16, #tpu.memory_space<vmem>>, vector<4x640xbf16>,
    %cst_11 = arith.constant 0.000000e+00 : bf16
    %18 = vector.broadcast %cst_11 : bf16 to vector<12x128xbf16>
    %c4 = arith.constant 4 : index
    %c0_12 = arith.constant 0 : index
    %19 = vector.load %arg13[%c4, %c0_12] : memref<20x640xbf16, #tpu.memory_space<vmem>>, vector<12x128xbf16>
    tpu.vector_store %arg13[%c4, %c0_12], %18 {strides = array<i32>} : memref<20x640xbf16, #tpu.memory_space<vmem>>, vector<12x128xbf16>,
    %cst_13 = arith.constant 0.000000e+00 : bf16
    %20 = vector.broadcast %cst_13 : bf16 to vector<12x128xbf16>
    %c4_14 = arith.constant 4 : index
    %c512 = arith.constant 512 : index
    %21 = vector.load %arg13[%c4_14, %c512] : memref<20x640xbf16, #tpu.memory_space<vmem>>, vector<12x128xbf16>
    tpu.vector_store %arg13[%c4_14, %c512], %20 {strides = array<i32>} : memref<20x640xbf16, #tpu.memory_space<vmem>>, vector<12x128xbf16>,
    %22 = vector.extract_strided_slice %13 {offsets = [0, 0], sizes = [12, 64], strides = [1, 1]} : vector<72x64xf32> to vector<12x64xf32>
    %23 = vector.extract_strided_slice %13 {offsets = [12, 0], sizes = [12, 64], strides = [1, 1]} : vector<72x64xf32> to vector<12x64xf32>
    %24 = tpu.concatenate %22, %23 in 1 : vector<12x64xf32>, vector<12x64xf32> -> vector<12x128xf32>
    %25 = arith.truncf %24 : vector<12x128xf32> to vector<12x128xbf16>
    %c4_15 = arith.constant 4 : index
    %c128 = arith.constant 128 : index
    %26 = vector.load %arg13[%c4_15, %c128] : memref<20x640xbf16, #tpu.memory_space<vmem>>, vector<12x128xbf16>
    tpu.vector_store %arg13[%c4_15, %c128], %25 {strides = array<i32>} : memref<20x640xbf16, #tpu.memory_space<vmem>>, vector<12x128xbf16>,
    %27 = vector.extract_strided_slice %13 {offsets = [24, 0], sizes = [12, 64], strides = [1, 1]} : vector<72x64xf32> to vector<12x64xf32>
    %28 = vector.extract_strided_slice %13 {offsets = [36, 0], sizes = [12, 64], strides = [1, 1]} : vector<72x64xf32> to vector<12x64xf32>
    %29 = tpu.concatenate %27, %28 in 1 : vector<12x64xf32>, vector<12x64xf32> -> vector<12x128xf32>
    %30 = arith.truncf %29 : vector<12x128xf32> to vector<12x128xbf16>
    %c4_16 = arith.constant 4 : index
    %c256 = arith.constant 256 : index
    %31 = vector.load %arg13[%c4_16, %c256] : memref<20x640xbf16, #tpu.memory_space<vmem>>, vector<12x128xbf16>
    tpu.vector_store %arg13[%c4_16, %c256], %30 {strides = array<i32>} : memref<20x640xbf16, #tpu.memory_space<vmem>>, vector<12x128xbf16>,
    %32 = vector.extract_strided_slice %13 {offsets = [48, 0], sizes = [12, 64], strides = [1, 1]} : vector<72x64xf32> to vector<12x64xf32>
    %33 = vector.extract_strided_slice %13 {offsets = [60, 0], sizes = [12, 64], strides = [1, 1]} : vector<72x64xf32> to vector<12x64xf32>
    %34 = tpu.concatenate %32, %33 in 1 : vector<12x64xf32>, vector<12x64xf32> -> vector<12x128xf32>
    %35 = arith.truncf %34 : vector<12x128xf32> to vector<12x128xbf16>
    %c4_17 = arith.constant 4 : index
    %c384 = arith.constant 384 : index
    %36 = vector.load %arg13[%c4_17, %c384] : memref<20x640xbf16, #tpu.memory_space<vmem>>, vector<12x128xbf16>
    tpu.vector_store %arg13[%c4_17, %c384], %35 {strides = array<i32>} : memref<20x640xbf16, #tpu.memory_space<vmem>>, vector<12x128xbf16>,
    %c0_18 = arith.constant 0 : index
    %c0_19 = arith.constant 0 : index
    %37 = vector.load %arg13[%c0_18, %c0_19] : memref<20x640xbf16, #tpu.memory_space<vmem>>, vector<2x640xbf16>
    %38 = vector.extract_strided_slice %37 {offsets = [0, 0], sizes = [2, 256], strides = [1, 1]} : vector<2x640xbf16> to vector<2x256xbf16>
    %c0_20 = arith.constant 0 : index
    %c0_21 = arith.constant 0 : index
    %39 = vector.load %arg14[%c0_20, %c0_21] : memref<32x1024xbf16, #tpu.memory_space<vmem>>, vector<2x256xbf16>
    tpu.vector_store %arg14[%c0_20, %c0_21], %38 {strides = array<i32>} : memref<32x1024xbf16, #tpu.memory_space<vmem>>, vector<2x256xbf16>,
    %40 = vector.extract_strided_slice %37 {offsets = [0, 128], sizes = [2, 256], strides = [1, 1]} : vector<2x640xbf16> to vector<2x256xbf16>
    %c2 = arith.constant 2 : index
    %c0_22 = arith.constant 0 : index
    %41 = vector.load %arg14[%c2, %c0_22] : memref<32x1024xbf16, #tpu.memory_space<vmem>>, vector<2x256xbf16>
    tpu.vector_store %arg14[%c2, %c0_22], %40 {strides = array<i32>} : memref<32x1024xbf16, #tpu.memory_space<vmem>>, vector<2x256xbf16>,
    %42 = vector.extract_strided_slice %37 {offsets = [0, 256], sizes = [2, 256], strides = [1, 1]} : vector<2x640xbf16> to vector<2x256xbf16>
    %c4_23 = arith.constant 4 : index
    %c0_24 = arith.constant 0 : index
    %43 = vector.load %arg14[%c4_23, %c0_24] : memref<32x1024xbf16, #tpu.memory_space<vmem>>, vector<2x256xbf16>
    tpu.vector_store %arg14[%c4_23, %c0_24], %42 {strides = array<i32>} : memref<32x1024xbf16, #tpu.memory_space<vmem>>, vector<2x256xbf16>,
    %44 = vector.extract_strided_slice %37 {offsets = [0, 384], sizes = [2, 256], strides = [1, 1]} : vector<2x640xbf16> to vector<2x256xbf16>
    %c6 = arith.constant 6 : index
    %c0_25 = arith.constant 0 : index
    %45 = vector.load %arg14[%c6, %c0_25] : memref<32x1024xbf16, #tpu.memory_space<vmem>>, vector<2x256xbf16>
    tpu.vector_store %arg14[%c6, %c0_25], %44 {strides = array<i32>} : memref<32x1024xbf16, #tpu.memory_space<vmem>>, vector<2x256xbf16>,
    %c2_26 = arith.constant 2 : index
    %c0_27 = arith.constant 0 : index
    %46 = vector.load %arg13[%c2_26, %c0_27] : memref<20x640xbf16, #tpu.memory_space<vmem>>, vector<2x640xbf16>
    %47 = vector.extract_strided_slice %46 {offsets = [0, 0], sizes = [2, 256], strides = [1, 1]} : vector<2x640xbf16> to vector<2x256xbf16>
    %c0_28 = arith.constant 0 : index
    %c256_29 = arith.constant 256 : index
    %48 = vector.load %arg14[%c0_28, %c256_29] : memref<32x1024xbf16, #tpu.memory_space<vmem>>, vector<2x256xbf16>
    tpu.vector_store %arg14[%c0_28, %c256_29], %47 {strides = array<i32>} : memref<32x1024xbf16, #tpu.memory_space<vmem>>, vector<2x256xbf16>,
    %49 = vector.extract_strided_slice %46 {offsets = [0, 128], sizes = [2, 256], strides = [1, 1]} : vector<2x640xbf16> to vector<2x256xbf16>
    %c2_30 = arith.constant 2 : index
    %c256_31 = arith.constant 256 : index
    %50 = vector.load %arg14[%c2_30, %c256_31] : memref<32x1024xbf16, #tpu.memory_space<vmem>>, vector<2x256xbf16>
    tpu.vector_store %arg14[%c2_30, %c256_31], %49 {strides = array<i32>} : memref<32x1024xbf16, #tpu.memory_space<vmem>>, vector<2x256xbf16>,
    %51 = vector.extract_strided_slice %46 {offsets = [0, 256], sizes = [2, 256], strides = [1, 1]} : vector<2x640xbf16> to vector<2x256xbf16>
    %c4_32 = arith.constant 4 : index
    %c256_33 = arith.constant 256 : index
    %52 = vector.load %arg14[%c4_32, %c256_33] : memref<32x1024xbf16, #tpu.memory_space<vmem>>, vector<2x256xbf16>
    tpu.vector_store %arg14[%c4_32, %c256_33], %51 {strides = array<i32>} : memref<32x1024xbf16, #tpu.memory_space<vmem>>, vector<2x256xbf16>,
    %53 = vector.extract_strided_slice %46 {offsets = [0, 384], sizes = [2, 256], strides = [1, 1]} : vector<2x640xbf16> to vector<2x256xbf16>
    %c6_34 = arith.constant 6 : index
    %c256_35 = arith.constant 256 : index
    %54 = vector.load %arg14[%c6_34, %c256_35] : memref<32x1024xbf16, #tpu.memory_space<vmem>>, vector<2x256xbf16>
    tpu.vector_store %arg14[%c6_34, %c256_35], %53 {strides = array<i32>} : memref<32x1024xbf16, #tpu.memory_space<vmem>>, vector<2x256xbf16>,
    %c4_36 = arith.constant 4 : index
    %c0_37 = arith.constant 0 : index
    %55 = vector.load %arg13[%c4_36, %c0_37] : memref<20x640xbf16, #tpu.memory_space<vmem>>, vector<2x640xbf16>
    %56 = vector.extract_strided_slice %55 {offsets = [0, 0], sizes = [2, 256], strides = [1, 1]} : vector<2x640xbf16> to vector<2x256xbf16>
    %c0_38 = arith.constant 0 : index
    %c512_39 = arith.constant 512 : index
    %57 = vector.load %arg14[%c0_38, %c512_39] : memref<32x1024xbf16, #tpu.memory_space<vmem>>, vector<2x256xbf16>
    tpu.vector_store %arg14[%c0_38, %c512_39], %56 {strides = array<i32>} : memref<32x1024xbf16, #tpu.memory_space<vmem>>, vector<2x256xbf16>,
    %58 = vector.extract_strided_slice %55 {offsets = [0, 128], sizes = [2, 256], strides = [1, 1]} : vector<2x640xbf16> to vector<2x256xbf16>
    %c2_40 = arith.constant 2 : index
    %c512_41 = arith.constant 512 : index
    %59 = vector.load %arg14[%c2_40, %c512_41] : memref<32x1024xbf16, #tpu.memory_space<vmem>>, vector<2x256xbf16>
    tpu.vector_store %arg14[%c2_40, %c512_41], %58 {strides = array<i32>} : memref<32x1024xbf16, #tpu.memory_space<vmem>>, vector<2x256xbf16>,
    %60 = vector.extract_strided_slice %55 {offsets = [0, 256], sizes = [2, 256], strides = [1, 1]} : vector<2x640xbf16> to vector<2x256xbf16>
    %c4_42 = arith.constant 4 : index
    %c512_43 = arith.constant 512 : index
    %61 = vector.load %arg14[%c4_42, %c512_43] : memref<32x1024xbf16, #tpu.memory_space<vmem>>, vector<2x256xbf16>
    tpu.vector_store %arg14[%c4_42, %c512_43], %60 {strides = array<i32>} : memref<32x1024xbf16, #tpu.memory_space<vmem>>, vector<2x256xbf16>,
    %62 = vector.extract_strided_slice %55 {offsets = [0, 384], sizes = [2, 256], strides = [1, 1]} : vector<2x640xbf16> to vector<2x256xbf16>
    %c6_44 = arith.constant 6 : index
    %c512_45 = arith.constant 512 : index
    %63 = vector.load %arg14[%c6_44, %c512_45] : memref<32x1024xbf16, #tpu.memory_space<vmem>>, vector<2x256xbf16>
    tpu.vector_store %arg14[%c6_44, %c512_45], %62 {strides = array<i32>} : memref<32x1024xbf16, #tpu.memory_space<vmem>>, vector<2x256xbf16>,
    %c6_46 = arith.constant 6 : index
    %c0_47 = arith.constant 0 : index
    %64 = vector.load %arg13[%c6_46, %c0_47] : memref<20x640xbf16, #tpu.memory_space<vmem>>, vector<2x640xbf16>
    %65 = vector.extract_strided_slice %64 {offsets = [0, 0], sizes = [2, 256], strides = [1, 1]} : vector<2x640xbf16> to vector<2x256xbf16>
    %c0_48 = arith.constant 0 : index
    %c768 = arith.constant 768 : index
    %66 = vector.load %arg14[%c0_48, %c768] : memref<32x1024xbf16, #tpu.memory_space<vmem>>, vector<2x256xbf16>
    tpu.vector_store %arg14[%c0_48, %c768], %65 {strides = array<i32>} : memref<32x1024xbf16, #tpu.memory_space<vmem>>, vector<2x256xbf16>,
    %67 = vector.extract_strided_slice %64 {offsets = [0, 128], sizes = [2, 256], strides = [1, 1]} : vector<2x640xbf16> to vector<2x256xbf16>
    %c2_49 = arith.constant 2 : index
    %c768_50 = arith.constant 768 : index
    %68 = vector.load %arg14[%c2_49, %c768_50] : memref<32x1024xbf16, #tpu.memory_space<vmem>>, vector<2x256xbf16>
    tpu.vector_store %arg14[%c2_49, %c768_50], %67 {strides = array<i32>} : memref<32x1024xbf16, #tpu.memory_space<vmem>>, vector<2x256xbf16>,
    %69 = vector.extract_strided_slice %64 {offsets = [0, 256], sizes = [2, 256], strides = [1, 1]} : vector<2x640xbf16> to vector<2x256xbf16>
    %c4_51 = arith.constant 4 : index
    %c768_52 = arith.constant 768 : index
    %70 = vector.load %arg14[%c4_51, %c768_52] : memref<32x1024xbf16, #tpu.memory_space<vmem>>, vector<2x256xbf16>
    tpu.vector_store %arg14[%c4_51, %c768_52], %69 {strides = array<i32>} : memref<32x1024xbf16, #tpu.memory_space<vmem>>, vector<2x256xbf16>,
    %71 = vector.extract_strided_slice %64 {offsets = [0, 384], sizes = [2, 256], strides = [1, 1]} : vector<2x640xbf16> to vector<2x256xbf16>
    %c6_53 = arith.constant 6 : index
    %c768_54 = arith.constant 768 : index
    %72 = vector.load %arg14[%c6_53, %c768_54] : memref<32x1024xbf16, #tpu.memory_space<vmem>>, vector<2x256xbf16>
    tpu.vector_store %arg14[%c6_53, %c768_54], %71 {strides = array<i32>} : memref<32x1024xbf16, #tpu.memory_space<vmem>>, vector<2x256xbf16>,
    %c4_55 = arith.constant 4 : index
    %c0_56 = arith.constant 0 : index
    %73 = vector.load %arg13[%c4_55, %c0_56] : memref<20x640xbf16, #tpu.memory_space<vmem>>, vector<2x640xbf16>
    %74 = vector.extract_strided_slice %73 {offsets = [0, 0], sizes = [2, 256], strides = [1, 1]} : vector<2x640xbf16> to vector<2x256xbf16>
    %c8 = arith.constant 8 : index
    %c0_57 = arith.constant 0 : index
    %75 = vector.load %arg14[%c8, %c0_57] : memref<32x1024xbf16, #tpu.memory_space<vmem>>, vector<2x256xbf16>
    tpu.vector_store %arg14[%c8, %c0_57], %74 {strides = array<i32>} : memref<32x1024xbf16, #tpu.memory_space<vmem>>, vector<2x256xbf16>,
    %76 = vector.extract_strided_slice %73 {offsets = [0, 128], sizes = [2, 256], strides = [1, 1]} : vector<2x640xbf16> to vector<2x256xbf16>
    %c10 = arith.constant 10 : index
    %c0_58 = arith.constant 0 : index
    %77 = vector.load %arg14[%c10, %c0_58] : memref<32x1024xbf16, #tpu.memory_space<vmem>>, vector<2x256xbf16>
    tpu.vector_store %arg14[%c10, %c0_58], %76 {strides = array<i32>} : memref<32x1024xbf16, #tpu.memory_space<vmem>>, vector<2x256xbf16>,
    %78 = vector.extract_strided_slice %73 {offsets = [0, 256], sizes = [2, 256], strides = [1, 1]} : vector<2x640xbf16> to vector<2x256xbf16>
    %c12 = arith.constant 12 : index
    %c0_59 = arith.constant 0 : index
    %79 = vector.load %arg14[%c12, %c0_59] : memref<32x1024xbf16, #tpu.memory_space<vmem>>, vector<2x256xbf16>
    tpu.vector_store %arg14[%c12, %c0_59], %78 {strides = array<i32>} : memref<32x1024xbf16, #tpu.memory_space<vmem>>, vector<2x256xbf16>,
    %80 = vector.extract_strided_slice %73 {offsets = [0, 384], sizes = [2, 256], strides = [1, 1]} : vector<2x640xbf16> to vector<2x256xbf16>
    %c14 = arith.constant 14 : index
    %c0_60 = arith.constant 0 : index
    %81 = vector.load %arg14[%c14, %c0_60] : memref<32x1024xbf16, #tpu.memory_space<vmem>>, vector<2x256xbf16>
    tpu.vector_store %arg14[%c14, %c0_60], %80 {strides = array<i32>} : memref<32x1024xbf16, #tpu.memory_space<vmem>>, vector<2x256xbf16>,
    %c6_61 = arith.constant 6 : index
    %c0_62 = arith.constant 0 : index
    %82 = vector.load %arg13[%c6_61, %c0_62] : memref<20x640xbf16, #tpu.memory_space<vmem>>, vector<2x640xbf16>
    %83 = vector.extract_strided_slice %82 {offsets = [0, 0], sizes = [2, 256], strides = [1, 1]} : vector<2x640xbf16> to vector<2x256xbf16>
    %c8_63 = arith.constant 8 : index
    %c256_64 = arith.constant 256 : index
    %84 = vector.load %arg14[%c8_63, %c256_64] : memref<32x1024xbf16, #tpu.memory_space<vmem>>, vector<2x256xbf16>
    tpu.vector_store %arg14[%c8_63, %c256_64], %83 {strides = array<i32>} : memref<32x1024xbf16, #tpu.memory_space<vmem>>, vector<2x256xbf16>,
    %85 = vector.extract_strided_slice %82 {offsets = [0, 128], sizes = [2, 256], strides = [1, 1]} : vector<2x640xbf16> to vector<2x256xbf16>
    %c10_65 = arith.constant 10 : index
    %c256_66 = arith.constant 256 : index
    %86 = vector.load %arg14[%c10_65, %c256_66] : memref<32x1024xbf16, #tpu.memory_space<vmem>>, vector<2x256xbf16>
    tpu.vector_store %arg14[%c10_65, %c256_66], %85 {strides = array<i32>} : memref<32x1024xbf16, #tpu.memory_space<vmem>>, vector<2x256xbf16>,
    %87 = vector.extract_strided_slice %82 {offsets = [0, 256], sizes = [2, 256], strides = [1, 1]} : vector<2x640xbf16> to vector<2x256xbf16>
    %c12_67 = arith.constant 12 : index
    %c256_68 = arith.constant 256 : index
    %88 = vector.load %arg14[%c12_67, %c256_68] : memref<32x1024xbf16, #tpu.memory_space<vmem>>, vector<2x256xbf16>
    tpu.vector_store %arg14[%c12_67, %c256_68], %87 {strides = array<i32>} : memref<32x1024xbf16, #tpu.memory_space<vmem>>, vector<2x256xbf16>,
    %89 = vector.extract_strided_slice %82 {offsets = [0, 384], sizes = [2, 256], strides = [1, 1]} : vector<2x640xbf16> to vector<2x256xbf16>
    %c14_69 = arith.constant 14 : index
    %c256_70 = arith.constant 256 : index
    %90 = vector.load %arg14[%c14_69, %c256_70] : memref<32x1024xbf16, #tpu.memory_space<vmem>>, vector<2x256xbf16>
    tpu.vector_store %arg14[%c14_69, %c256_70], %89 {strides = array<i32>} : memref<32x1024xbf16, #tpu.memory_space<vmem>>, vector<2x256xbf16>,
    %c8_71 = arith.constant 8 : index
    %c0_72 = arith.constant 0 : index
    %91 = vector.load %arg13[%c8_71, %c0_72] : memref<20x640xbf16, #tpu.memory_space<vmem>>, vector<2x640xbf16>
    %92 = vector.extract_strided_slice %91 {offsets = [0, 0], sizes = [2, 256], strides = [1, 1]} : vector<2x640xbf16> to vector<2x256xbf16>
    %c8_73 = arith.constant 8 : index
    %c512_74 = arith.constant 512 : index
    %93 = vector.load %arg14[%c8_73, %c512_74] : memref<32x1024xbf16, #tpu.memory_space<vmem>>, vector<2x256xbf16>
    tpu.vector_store %arg14[%c8_73, %c512_74], %92 {strides = array<i32>} : memref<32x1024xbf16, #tpu.memory_space<vmem>>, vector<2x256xbf16>,
    %94 = vector.extract_strided_slice %91 {offsets = [0, 128], sizes = [2, 256], strides = [1, 1]} : vector<2x640xbf16> to vector<2x256xbf16>
    %c10_75 = arith.constant 10 : index
    %c512_76 = arith.constant 512 : index
    %95 = vector.load %arg14[%c10_75, %c512_76] : memref<32x1024xbf16, #tpu.memory_space<vmem>>, vector<2x256xbf16>
    tpu.vector_store %arg14[%c10_75, %c512_76], %94 {strides = array<i32>} : memref<32x1024xbf16, #tpu.memory_space<vmem>>, vector<2x256xbf16>,
    %96 = vector.extract_strided_slice %91 {offsets = [0, 256], sizes = [2, 256], strides = [1, 1]} : vector<2x640xbf16> to vector<2x256xbf16>
    %c12_77 = arith.constant 12 : index
    %c512_78 = arith.constant 512 : index
    %97 = vector.load %arg14[%c12_77, %c512_78] : memref<32x1024xbf16, #tpu.memory_space<vmem>>, vector<2x256xbf16>
    tpu.vector_store %arg14[%c12_77, %c512_78], %96 {strides = array<i32>} : memref<32x1024xbf16, #tpu.memory_space<vmem>>, vector<2x256xbf16>,
    %98 = vector.extract_strided_slice %91 {offsets = [0, 384], sizes = [2, 256], strides = [1, 1]} : vector<2x640xbf16> to vector<2x256xbf16>
    %c14_79 = arith.constant 14 : index
    %c512_80 = arith.constant 512 : index
    %99 = vector.load %arg14[%c14_79, %c512_80] : memref<32x1024xbf16, #tpu.memory_space<vmem>>, vector<2x256xbf16>
    tpu.vector_store %arg14[%c14_79, %c512_80], %98 {strides = array<i32>} : memref<32x1024xbf16, #tpu.memory_space<vmem>>, vector<2x256xbf16>,
    %c10_81 = arith.constant 10 : index
    %c0_82 = arith.constant 0 : index
    %100 = vector.load %arg13[%c10_81, %c0_82] : memref<20x640xbf16, #tpu.memory_space<vmem>>, vector<2x640xbf16>
    %101 = vector.extract_strided_slice %100 {offsets = [0, 0], sizes = [2, 256], strides = [1, 1]} : vector<2x640xbf16> to vector<2x256xbf16>
    %c8_83 = arith.constant 8 : index
    %c768_84 = arith.constant 768 : index
    %102 = vector.load %arg14[%c8_83, %c768_84] : memref<32x1024xbf16, #tpu.memory_space<vmem>>, vector<2x256xbf16>
    tpu.vector_store %arg14[%c8_83, %c768_84], %101 {strides = array<i32>} : memref<32x1024xbf16, #tpu.memory_space<vmem>>, vector<2x256xbf16>,
    %103 = vector.extract_strided_slice %100 {offsets = [0, 128], sizes = [2, 256], strides = [1, 1]} : vector<2x640xbf16> to vector<2x256xbf16>
    %c10_85 = arith.constant 10 : index
    %c768_86 = arith.constant 768 : index
    %104 = vector.load %arg14[%c10_85, %c768_86] : memref<32x1024xbf16, #tpu.memory_space<vmem>>, vector<2x256xbf16>
    tpu.vector_store %arg14[%c10_85, %c768_86], %103 {strides = array<i32>} : memref<32x1024xbf16, #tpu.memory_space<vmem>>, vector<2x256xbf16>,
    %105 = vector.extract_strided_slice %100 {offsets = [0, 256], sizes = [2, 256], strides = [1, 1]} : vector<2x640xbf16> to vector<2x256xbf16>
    %c12_87 = arith.constant 12 : index
    %c768_88 = arith.constant 768 : index
    %106 = vector.load %arg14[%c12_87, %c768_88] : memref<32x1024xbf16, #tpu.memory_space<vmem>>, vector<2x256xbf16>
    tpu.vector_store %arg14[%c12_87, %c768_88], %105 {strides = array<i32>} : memref<32x1024xbf16, #tpu.memory_space<vmem>>, vector<2x256xbf16>,
    %107 = vector.extract_strided_slice %100 {offsets = [0, 384], sizes = [2, 256], strides = [1, 1]} : vector<2x640xbf16> to vector<2x256xbf16>
    %c14_89 = arith.constant 14 : index
    %c768_90 = arith.constant 768 : index
    %108 = vector.load %arg14[%c14_89, %c768_90] : memref<32x1024xbf16, #tpu.memory_space<vmem>>, vector<2x256xbf16>
    tpu.vector_store %arg14[%c14_89, %c768_90], %107 {strides = array<i32>} : memref<32x1024xbf16, #tpu.memory_space<vmem>>, vector<2x256xbf16>,
    %c8_91 = arith.constant 8 : index
    %c0_92 = arith.constant 0 : index
    %109 = vector.load %arg13[%c8_91, %c0_92] : memref<20x640xbf16, #tpu.memory_space<vmem>>, vector<2x640xbf16>
    %110 = vector.extract_strided_slice %109 {offsets = [0, 0], sizes = [2, 256], strides = [1, 1]} : vector<2x640xbf16> to vector<2x256xbf16>
    %c16_93 = arith.constant 16 : index
    %c0_94 = arith.constant 0 : index
    %111 = vector.load %arg14[%c16_93, %c0_94] : memref<32x1024xbf16, #tpu.memory_space<vmem>>, vector<2x256xbf16>
    tpu.vector_store %arg14[%c16_93, %c0_94], %110 {strides = array<i32>} : memref<32x1024xbf16, #tpu.memory_space<vmem>>, vector<2x256xbf16>,
    %112 = vector.extract_strided_slice %109 {offsets = [0, 128], sizes = [2, 256], strides = [1, 1]} : vector<2x640xbf16> to vector<2x256xbf16>
    %c18 = arith.constant 18 : index
    %c0_95 = arith.constant 0 : index
    %113 = vector.load %arg14[%c18, %c0_95] : memref<32x1024xbf16, #tpu.memory_space<vmem>>, vector<2x256xbf16>
    tpu.vector_store %arg14[%c18, %c0_95], %112 {strides = array<i32>} : memref<32x1024xbf16, #tpu.memory_space<vmem>>, vector<2x256xbf16>,
    %114 = vector.extract_strided_slice %109 {offsets = [0, 256], sizes = [2, 256], strides = [1, 1]} : vector<2x640xbf16> to vector<2x256xbf16>
    %c20 = arith.constant 20 : index
    %c0_96 = arith.constant 0 : index
    %115 = vector.load %arg14[%c20, %c0_96] : memref<32x1024xbf16, #tpu.memory_space<vmem>>, vector<2x256xbf16>
    tpu.vector_store %arg14[%c20, %c0_96], %114 {strides = array<i32>} : memref<32x1024xbf16, #tpu.memory_space<vmem>>, vector<2x256xbf16>,
    %116 = vector.extract_strided_slice %109 {offsets = [0, 384], sizes = [2, 256], strides = [1, 1]} : vector<2x640xbf16> to vector<2x256xbf16>
    %c22 = arith.constant 22 : index
    %c0_97 = arith.constant 0 : index
    %117 = vector.load %arg14[%c22, %c0_97] : memref<32x1024xbf16, #tpu.memory_space<vmem>>, vector<2x256xbf16>
    tpu.vector_store %arg14[%c22, %c0_97], %116 {strides = array<i32>} : memref<32x1024xbf16, #tpu.memory_space<vmem>>, vector<2x256xbf16>,
    %c10_98 = arith.constant 10 : index
    %c0_99 = arith.constant 0 : index
    %118 = vector.load %arg13[%c10_98, %c0_99] : memref<20x640xbf16, #tpu.memory_space<vmem>>, vector<2x640xbf16>
    %119 = vector.extract_strided_slice %118 {offsets = [0, 0], sizes = [2, 256], strides = [1, 1]} : vector<2x640xbf16> to vector<2x256xbf16>
    %c16_100 = arith.constant 16 : index
    %c256_101 = arith.constant 256 : index
    %120 = vector.load %arg14[%c16_100, %c256_101] : memref<32x1024xbf16, #tpu.memory_space<vmem>>, vector<2x256xbf16>
    tpu.vector_store %arg14[%c16_100, %c256_101], %119 {strides = array<i32>} : memref<32x1024xbf16, #tpu.memory_space<vmem>>, vector<2x256xbf16>,
    %121 = vector.extract_strided_slice %118 {offsets = [0, 128], sizes = [2, 256], strides = [1, 1]} : vector<2x640xbf16> to vector<2x256xbf16>
    %c18_102 = arith.constant 18 : index
    %c256_103 = arith.constant 256 : index
    %122 = vector.load %arg14[%c18_102, %c256_103] : memref<32x1024xbf16, #tpu.memory_space<vmem>>, vector<2x256xbf16>
    tpu.vector_store %arg14[%c18_102, %c256_103], %121 {strides = array<i32>} : memref<32x1024xbf16, #tpu.memory_space<vmem>>, vector<2x256xbf16>,
    %123 = vector.extract_strided_slice %118 {offsets = [0, 256], sizes = [2, 256], strides = [1, 1]} : vector<2x640xbf16> to vector<2x256xbf16>
    %c20_104 = arith.constant 20 : index
    %c256_105 = arith.constant 256 : index
    %124 = vector.load %arg14[%c20_104, %c256_105] : memref<32x1024xbf16, #tpu.memory_space<vmem>>, vector<2x256xbf16>
    tpu.vector_store %arg14[%c20_104, %c256_105], %123 {strides = array<i32>} : memref<32x1024xbf16, #tpu.memory_space<vmem>>, vector<2x256xbf16>,
    %125 = vector.extract_strided_slice %118 {offsets = [0, 384], sizes = [2, 256], strides = [1, 1]} : vector<2x640xbf16> to vector<2x256xbf16>
    %c22_106 = arith.constant 22 : index
    %c256_107 = arith.constant 256 : index
    %126 = vector.load %arg14[%c22_106, %c256_107] : memref<32x1024xbf16, #tpu.memory_space<vmem>>, vector<2x256xbf16>
    tpu.vector_store %arg14[%c22_106, %c256_107], %125 {strides = array<i32>} : memref<32x1024xbf16, #tpu.memory_space<vmem>>, vector<2x256xbf16>,
    %c12_108 = arith.constant 12 : index
    %c0_109 = arith.constant 0 : index
    %127 = vector.load %arg13[%c12_108, %c0_109] : memref<20x640xbf16, #tpu.memory_space<vmem>>, vector<2x640xbf16>
    %128 = vector.extract_strided_slice %127 {offsets = [0, 0], sizes = [2, 256], strides = [1, 1]} : vector<2x640xbf16> to vector<2x256xbf16>
    %c16_110 = arith.constant 16 : index
    %c512_111 = arith.constant 512 : index
    %129 = vector.load %arg14[%c16_110, %c512_111] : memref<32x1024xbf16, #tpu.memory_space<vmem>>, vector<2x256xbf16>
    tpu.vector_store %arg14[%c16_110, %c512_111], %128 {strides = array<i32>} : memref<32x1024xbf16, #tpu.memory_space<vmem>>, vector<2x256xbf16>,
    %130 = vector.extract_strided_slice %127 {offsets = [0, 128], sizes = [2, 256], strides = [1, 1]} : vector<2x640xbf16> to vector<2x256xbf16>
    %c18_112 = arith.constant 18 : index
    %c512_113 = arith.constant 512 : index
    %131 = vector.load %arg14[%c18_112, %c512_113] : memref<32x1024xbf16, #tpu.memory_space<vmem>>, vector<2x256xbf16>
    tpu.vector_store %arg14[%c18_112, %c512_113], %130 {strides = array<i32>} : memref<32x1024xbf16, #tpu.memory_space<vmem>>, vector<2x256xbf16>,
    %132 = vector.extract_strided_slice %127 {offsets = [0, 256], sizes = [2, 256], strides = [1, 1]} : vector<2x640xbf16> to vector<2x256xbf16>
    %c20_114 = arith.constant 20 : index
    %c512_115 = arith.constant 512 : index
    %133 = vector.load %arg14[%c20_114, %c512_115] : memref<32x1024xbf16, #tpu.memory_space<vmem>>, vector<2x256xbf16>
    tpu.vector_store %arg14[%c20_114, %c512_115], %132 {strides = array<i32>} : memref<32x1024xbf16, #tpu.memory_space<vmem>>, vector<2x256xbf16>,
    %134 = vector.extract_strided_slice %127 {offsets = [0, 384], sizes = [2, 256], strides = [1, 1]} : vector<2x640xbf16> to vector<2x256xbf16>
    %c22_116 = arith.constant 22 : index
    %c512_117 = arith.constant 512 : index
    %135 = vector.load %arg14[%c22_116, %c512_117] : memref<32x1024xbf16, #tpu.memory_space<vmem>>, vector<2x256xbf16>
    tpu.vector_store %arg14[%c22_116, %c512_117], %134 {strides = array<i32>} : memref<32x1024xbf16, #tpu.memory_space<vmem>>, vector<2x256xbf16>,
    %c14_118 = arith.constant 14 : index
    %c0_119 = arith.constant 0 : index
    %136 = vector.load %arg13[%c14_118, %c0_119] : memref<20x640xbf16, #tpu.memory_space<vmem>>, vector<2x640xbf16>
    %137 = vector.extract_strided_slice %136 {offsets = [0, 0], sizes = [2, 256], strides = [1, 1]} : vector<2x640xbf16> to vector<2x256xbf16>
    %c16_120 = arith.constant 16 : index
    %c768_121 = arith.constant 768 : index
    %138 = vector.load %arg14[%c16_120, %c768_121] : memref<32x1024xbf16, #tpu.memory_space<vmem>>, vector<2x256xbf16>
    tpu.vector_store %arg14[%c16_120, %c768_121], %137 {strides = array<i32>} : memref<32x1024xbf16, #tpu.memory_space<vmem>>, vector<2x256xbf16>,
    %139 = vector.extract_strided_slice %136 {offsets = [0, 128], sizes = [2, 256], strides = [1, 1]} : vector<2x640xbf16> to vector<2x256xbf16>
    %c18_122 = arith.constant 18 : index
    %c768_123 = arith.constant 768 : index
    %140 = vector.load %arg14[%c18_122, %c768_123] : memref<32x1024xbf16, #tpu.memory_space<vmem>>, vector<2x256xbf16>
    tpu.vector_store %arg14[%c18_122, %c768_123], %139 {strides = array<i32>} : memref<32x1024xbf16, #tpu.memory_space<vmem>>, vector<2x256xbf16>,
    %141 = vector.extract_strided_slice %136 {offsets = [0, 256], sizes = [2, 256], strides = [1, 1]} : vector<2x640xbf16> to vector<2x256xbf16>
    %c20_124 = arith.constant 20 : index
    %c768_125 = arith.constant 768 : index
    %142 = vector.load %arg14[%c20_124, %c768_125] : memref<32x1024xbf16, #tpu.memory_space<vmem>>, vector<2x256xbf16>
    tpu.vector_store %arg14[%c20_124, %c768_125], %141 {strides = array<i32>} : memref<32x1024xbf16, #tpu.memory_space<vmem>>, vector<2x256xbf16>,
    %143 = vector.extract_strided_slice %136 {offsets = [0, 384], sizes = [2, 256], strides = [1, 1]} : vector<2x640xbf16> to vector<2x256xbf16>
    %c22_126 = arith.constant 22 : index
    %c768_127 = arith.constant 768 : index
    %144 = vector.load %arg14[%c22_126, %c768_127] : memref<32x1024xbf16, #tpu.memory_space<vmem>>, vector<2x256xbf16>
    tpu.vector_store %arg14[%c22_126, %c768_127], %143 {strides = array<i32>} : memref<32x1024xbf16, #tpu.memory_space<vmem>>, vector<2x256xbf16>,
    %c12_128 = arith.constant 12 : index
    %c0_129 = arith.constant 0 : index
    %145 = vector.load %arg13[%c12_128, %c0_129] : memref<20x640xbf16, #tpu.memory_space<vmem>>, vector<2x640xbf16>
    %146 = vector.extract_strided_slice %145 {offsets = [0, 0], sizes = [2, 256], strides = [1, 1]} : vector<2x640xbf16> to vector<2x256xbf16>
    %c24 = arith.constant 24 : index
    %c0_130 = arith.constant 0 : index
    %147 = vector.load %arg14[%c24, %c0_130] : memref<32x1024xbf16, #tpu.memory_space<vmem>>, vector<2x256xbf16>
    tpu.vector_store %arg14[%c24, %c0_130], %146 {strides = array<i32>} : memref<32x1024xbf16, #tpu.memory_space<vmem>>, vector<2x256xbf16>,
    %148 = vector.extract_strided_slice %145 {offsets = [0, 128], sizes = [2, 256], strides = [1, 1]} : vector<2x640xbf16> to vector<2x256xbf16>
    %c26 = arith.constant 26 : index
    %c0_131 = arith.constant 0 : index
    %149 = vector.load %arg14[%c26, %c0_131] : memref<32x1024xbf16, #tpu.memory_space<vmem>>, vector<2x256xbf16>
    tpu.vector_store %arg14[%c26, %c0_131], %148 {strides = array<i32>} : memref<32x1024xbf16, #tpu.memory_space<vmem>>, vector<2x256xbf16>,
    %150 = vector.extract_strided_slice %145 {offsets = [0, 256], sizes = [2, 256], strides = [1, 1]} : vector<2x640xbf16> to vector<2x256xbf16>
    %c28 = arith.constant 28 : index
    %c0_132 = arith.constant 0 : index
    %151 = vector.load %arg14[%c28, %c0_132] : memref<32x1024xbf16, #tpu.memory_space<vmem>>, vector<2x256xbf16>
    tpu.vector_store %arg14[%c28, %c0_132], %150 {strides = array<i32>} : memref<32x1024xbf16, #tpu.memory_space<vmem>>, vector<2x256xbf16>,
    %152 = vector.extract_strided_slice %145 {offsets = [0, 384], sizes = [2, 256], strides = [1, 1]} : vector<2x640xbf16> to vector<2x256xbf16>
    %c30 = arith.constant 30 : index
    %c0_133 = arith.constant 0 : index
    %153 = vector.load %arg14[%c30, %c0_133] : memref<32x1024xbf16, #tpu.memory_space<vmem>>, vector<2x256xbf16>
    tpu.vector_store %arg14[%c30, %c0_133], %152 {strides = array<i32>} : memref<32x1024xbf16, #tpu.memory_space<vmem>>, vector<2x256xbf16>,
    %c14_134 = arith.constant 14 : index
    %c0_135 = arith.constant 0 : index
    %154 = vector.load %arg13[%c14_134, %c0_135] : memref<20x640xbf16, #tpu.memory_space<vmem>>, vector<2x640xbf16>
    %155 = vector.extract_strided_slice %154 {offsets = [0, 0], sizes = [2, 256], strides = [1, 1]} : vector<2x640xbf16> to vector<2x256xbf16>
    %c24_136 = arith.constant 24 : index
    %c256_137 = arith.constant 256 : index
    %156 = vector.load %arg14[%c24_136, %c256_137] : memref<32x1024xbf16, #tpu.memory_space<vmem>>, vector<2x256xbf16>
    tpu.vector_store %arg14[%c24_136, %c256_137], %155 {strides = array<i32>} : memref<32x1024xbf16, #tpu.memory_space<vmem>>, vector<2x256xbf16>,
    %157 = vector.extract_strided_slice %154 {offsets = [0, 128], sizes = [2, 256], strides = [1, 1]} : vector<2x640xbf16> to vector<2x256xbf16>
    %c26_138 = arith.constant 26 : index
    %c256_139 = arith.constant 256 : index
    %158 = vector.load %arg14[%c26_138, %c256_139] : memref<32x1024xbf16, #tpu.memory_space<vmem>>, vector<2x256xbf16>
    tpu.vector_store %arg14[%c26_138, %c256_139], %157 {strides = array<i32>} : memref<32x1024xbf16, #tpu.memory_space<vmem>>, vector<2x256xbf16>,
    %159 = vector.extract_strided_slice %154 {offsets = [0, 256], sizes = [2, 256], strides = [1, 1]} : vector<2x640xbf16> to vector<2x256xbf16>
    %c28_140 = arith.constant 28 : index
    %c256_141 = arith.constant 256 : index
    %160 = vector.load %arg14[%c28_140, %c256_141] : memref<32x1024xbf16, #tpu.memory_space<vmem>>, vector<2x256xbf16>
    tpu.vector_store %arg14[%c28_140, %c256_141], %159 {strides = array<i32>} : memref<32x1024xbf16, #tpu.memory_space<vmem>>, vector<2x256xbf16>,
    %161 = vector.extract_strided_slice %154 {offsets = [0, 384], sizes = [2, 256], strides = [1, 1]} : vector<2x640xbf16> to vector<2x256xbf16>
    %c30_142 = arith.constant 30 : index
    %c256_143 = arith.constant 256 : index
    %162 = vector.load %arg14[%c30_142, %c256_143] : memref<32x1024xbf16, #tpu.memory_space<vmem>>, vector<2x256xbf16>
    tpu.vector_store %arg14[%c30_142, %c256_143], %161 {strides = array<i32>} : memref<32x1024xbf16, #tpu.memory_space<vmem>>, vector<2x256xbf16>,
    %c16_144 = arith.constant 16 : index
    %c0_145 = arith.constant 0 : index
    %163 = vector.load %arg13[%c16_144, %c0_145] : memref<20x640xbf16, #tpu.memory_space<vmem>>, vector<2x640xbf16>
    %164 = vector.extract_strided_slice %163 {offsets = [0, 0], sizes = [2, 256], strides = [1, 1]} : vector<2x640xbf16> to vector<2x256xbf16>
    %c24_146 = arith.constant 24 : index
    %c512_147 = arith.constant 512 : index
    %165 = vector.load %arg14[%c24_146, %c512_147] : memref<32x1024xbf16, #tpu.memory_space<vmem>>, vector<2x256xbf16>
    tpu.vector_store %arg14[%c24_146, %c512_147], %164 {strides = array<i32>} : memref<32x1024xbf16, #tpu.memory_space<vmem>>, vector<2x256xbf16>,
    %166 = vector.extract_strided_slice %163 {offsets = [0, 128], sizes = [2, 256], strides = [1, 1]} : vector<2x640xbf16> to vector<2x256xbf16>
    %c26_148 = arith.constant 26 : index
    %c512_149 = arith.constant 512 : index
    %167 = vector.load %arg14[%c26_148, %c512_149] : memref<32x1024xbf16, #tpu.memory_space<vmem>>, vector<2x256xbf16>
    tpu.vector_store %arg14[%c26_148, %c512_149], %166 {strides = array<i32>} : memref<32x1024xbf16, #tpu.memory_space<vmem>>, vector<2x256xbf16>,
    %168 = vector.extract_strided_slice %163 {offsets = [0, 256], sizes = [2, 256], strides = [1, 1]} : vector<2x640xbf16> to vector<2x256xbf16>
    %c28_150 = arith.constant 28 : index
    %c512_151 = arith.constant 512 : index
    %169 = vector.load %arg14[%c28_150, %c512_151] : memref<32x1024xbf16, #tpu.memory_space<vmem>>, vector<2x256xbf16>
    tpu.vector_store %arg14[%c28_150, %c512_151], %168 {strides = array<i32>} : memref<32x1024xbf16, #tpu.memory_space<vmem>>, vector<2x256xbf16>,
    %170 = vector.extract_strided_slice %163 {offsets = [0, 384], sizes = [2, 256], strides = [1, 1]} : vector<2x640xbf16> to vector<2x256xbf16>
    %c30_152 = arith.constant 30 : index
    %c512_153 = arith.constant 512 : index
    %171 = vector.load %arg14[%c30_152, %c512_153] : memref<32x1024xbf16, #tpu.memory_space<vmem>>, vector<2x256xbf16>
    tpu.vector_store %arg14[%c30_152, %c512_153], %170 {strides = array<i32>} : memref<32x1024xbf16, #tpu.memory_space<vmem>>, vector<2x256xbf16>,
    %c18_154 = arith.constant 18 : index
    %c0_155 = arith.constant 0 : index
    %172 = vector.load %arg13[%c18_154, %c0_155] : memref<20x640xbf16, #tpu.memory_space<vmem>>, vector<2x640xbf16>
    %173 = vector.extract_strided_slice %172 {offsets = [0, 0], sizes = [2, 256], strides = [1, 1]} : vector<2x640xbf16> to vector<2x256xbf16>
    %c24_156 = arith.constant 24 : index
    %c768_157 = arith.constant 768 : index
    %174 = vector.load %arg14[%c24_156, %c768_157] : memref<32x1024xbf16, #tpu.memory_space<vmem>>, vector<2x256xbf16>
    tpu.vector_store %arg14[%c24_156, %c768_157], %173 {strides = array<i32>} : memref<32x1024xbf16, #tpu.memory_space<vmem>>, vector<2x256xbf16>,
    %175 = vector.extract_strided_slice %172 {offsets = [0, 128], sizes = [2, 256], strides = [1, 1]} : vector<2x640xbf16> to vector<2x256xbf16>
    %c26_158 = arith.constant 26 : index
    %c768_159 = arith.constant 768 : index
    %176 = vector.load %arg14[%c26_158, %c768_159] : memref<32x1024xbf16, #tpu.memory_space<vmem>>, vector<2x256xbf16>
    tpu.vector_store %arg14[%c26_158, %c768_159], %175 {strides = array<i32>} : memref<32x1024xbf16, #tpu.memory_space<vmem>>, vector<2x256xbf16>,
    %177 = vector.extract_strided_slice %172 {offsets = [0, 256], sizes = [2, 256], strides = [1, 1]} : vector<2x640xbf16> to vector<2x256xbf16>
    %c28_160 = arith.constant 28 : index
    %c768_161 = arith.constant 768 : index
    %178 = vector.load %arg14[%c28_160, %c768_161] : memref<32x1024xbf16, #tpu.memory_space<vmem>>, vector<2x256xbf16>
    tpu.vector_store %arg14[%c28_160, %c768_161], %177 {strides = array<i32>} : memref<32x1024xbf16, #tpu.memory_space<vmem>>, vector<2x256xbf16>,
    %179 = vector.extract_strided_slice %172 {offsets = [0, 384], sizes = [2, 256], strides = [1, 1]} : vector<2x640xbf16> to vector<2x256xbf16>
    %c30_162 = arith.constant 30 : index
    %c768_163 = arith.constant 768 : index
    %180 = vector.load %arg14[%c30_162, %c768_163] : memref<32x1024xbf16, #tpu.memory_space<vmem>>, vector<2x256xbf16>
    tpu.vector_store %arg14[%c30_162, %c768_163], %179 {strides = array<i32>} : memref<32x1024xbf16, #tpu.memory_space<vmem>>, vector<2x256xbf16>,
    %c0_164 = arith.constant 0 : index
    %c0_165 = arith.constant 0 : index
    %181 = vector.load %arg14[%c0_164, %c0_165] : memref<32x1024xbf16, #tpu.memory_space<vmem>>, vector<32x1024xbf16>
    %c0_166 = arith.constant 0 : index
    %c0_167 = arith.constant 0 : index
    %182 = vector.load %arg4[%c0_166, %c0_167] : memref<1024x128xbf16, #tpu.memory_space<vmem>>, vector<1024x128xbf16>
    %cst_168 = arith.constant dense<0.000000e+00> : vector<32x128xf32>
    %183 = tpu.matmul %181, %182, %cst_168 {dimension_numbers = #tpu.dot_dimension_numbers<[1], [0], [0], [1], [0, 0, 1, 1], [], []>} : vector<32x1024xbf16>, vector<1024x128xbf16>, vector<32x128xf32> -> vector<32x128xf32>
    %c0_169 = arith.constant 0 : index
    %c0_170 = arith.constant 0 : index
    %184 = vector.load %arg5[%c0_169, %c0_170] : memref<1x128xf32, #tpu.memory_space<vmem>>, vector<1x128xf32>
    %185 = vector.broadcast %184 : vector<1x128xf32> to vector<32x128xf32>
    %186 = arith.addf %183, %185 : vector<32x128xf32>
    %cst_171 = arith.constant 0.000000e+00 : f32
    %187 = vector.broadcast %cst_171 : f32 to vector<32x128xf32>
    %188 = arith.maximumf %186, %187 : vector<32x128xf32>
    %189 = vector.extract_strided_slice %188 {offsets = [0, 0], sizes = [8, 128], strides = [1, 1]} : vector<32x128xf32> to vector<8x128xf32>
    %190 = vector.extract_strided_slice %188 {offsets = [8, 0], sizes = [8, 128], strides = [1, 1]} : vector<32x128xf32> to vector<8x128xf32>
    %191 = arith.maximumf %189, %190 : vector<8x128xf32>
    %192 = vector.extract_strided_slice %188 {offsets = [16, 0], sizes = [8, 128], strides = [1, 1]} : vector<32x128xf32> to vector<8x128xf32>
    %193 = vector.extract_strided_slice %188 {offsets = [24, 0], sizes = [8, 128], strides = [1, 1]} : vector<32x128xf32> to vector<8x128xf32>
    %194 = arith.maximumf %192, %193 : vector<8x128xf32>
    %195 = vector.extract_strided_slice %191 {offsets = [0, 0], sizes = [2, 128], strides = [1, 1]} : vector<8x128xf32> to vector<2x128xf32>
    %196 = vector.extract_strided_slice %191 {offsets = [2, 0], sizes = [2, 128], strides = [1, 1]} : vector<8x128xf32> to vector<2x128xf32>
    %197 = arith.maximumf %195, %196 : vector<2x128xf32>
    %198 = vector.extract_strided_slice %191 {offsets = [4, 0], sizes = [2, 128], strides = [1, 1]} : vector<8x128xf32> to vector<2x128xf32>
    %199 = vector.extract_strided_slice %191 {offsets = [6, 0], sizes = [2, 128], strides = [1, 1]} : vector<8x128xf32> to vector<2x128xf32>
    %200 = arith.maximumf %198, %199 : vector<2x128xf32>
    %201 = vector.extract_strided_slice %194 {offsets = [0, 0], sizes = [2, 128], strides = [1, 1]} : vector<8x128xf32> to vector<2x128xf32>
    %202 = vector.extract_strided_slice %194 {offsets = [2, 0], sizes = [2, 128], strides = [1, 1]} : vector<8x128xf32> to vector<2x128xf32>
    %203 = arith.maximumf %201, %202 : vector<2x128xf32>
    %204 = vector.extract_strided_slice %194 {offsets = [4, 0], sizes = [2, 128], strides = [1, 1]} : vector<8x128xf32> to vector<2x128xf32>
    %205 = vector.extract_strided_slice %194 {offsets = [6, 0], sizes = [2, 128], strides = [1, 1]} : vector<8x128xf32> to vector<2x128xf32>
    %206 = arith.maximumf %204, %205 : vector<2x128xf32>
    %207 = tpu.concatenate %197, %200, %203, %206 in 1 : vector<2x128xf32>, vector<2x128xf32>, vector<2x128xf32>, vector<2x128xf32> -> vector<2x512xf32>
    %208 = arith.truncf %207 : vector<2x512xf32> to vector<2x512xbf16>
    %c0_172 = arith.constant 0 : index
    %c0_173 = arith.constant 0 : index
    %209 = vector.load %arg6[%c0_172, %c0_173] : memref<512x1024xbf16, #tpu.memory_space<vmem>>, vector<512x1024xbf16>
    %cst_174 = arith.constant dense<0.000000e+00> : vector<2x1024xf32>
    %210 = tpu.matmul %208, %209, %cst_174 {dimension_numbers = #tpu.dot_dimension_numbers<[1], [0], [0], [1], [0, 0, 1, 1], [], []>} : vector<2x512xbf16>, vector<512x1024xbf16>, vector<2x1024xf32> -> vector<2x1024xf32>
    %c0_175 = arith.constant 0 : index
    %c0_176 = arith.constant 0 : index
    %211 = vector.load %arg7[%c0_175, %c0_176] : memref<1x1024xf32, #tpu.memory_space<vmem>>, vector<1x1024xf32>
    %212 = vector.broadcast %211 : vector<1x1024xf32> to vector<2x1024xf32>
    %213 = arith.addf %210, %212 : vector<2x1024xf32>
    %cst_177 = arith.constant 0.000000e+00 : f32
    %214 = vector.broadcast %cst_177 : f32 to vector<2x1024xf32>
    %215 = arith.maximumf %213, %214 : vector<2x1024xf32>
    %216 = arith.truncf %215 : vector<2x1024xf32> to vector<2x1024xbf16>
    %c0_178 = arith.constant 0 : index
    %c0_179 = arith.constant 0 : index
    %217 = vector.load %arg8[%c0_178, %c0_179] : memref<1024x256xbf16, #tpu.memory_space<vmem>>, vector<1024x256xbf16>
    %cst_180 = arith.constant dense<0.000000e+00> : vector<2x256xf32>
    %218 = tpu.matmul %216, %217, %cst_180 {dimension_numbers = #tpu.dot_dimension_numbers<[1], [0], [0], [1], [0, 0, 1, 1], [], []>} : vector<2x1024xbf16>, vector<1024x256xbf16>, vector<2x256xf32> -> vector<2x256xf32>
    %c0_181 = arith.constant 0 : index
    %c0_182 = arith.constant 0 : index
    %219 = vector.load %arg9[%c0_181, %c0_182] : memref<1x256xf32, #tpu.memory_space<vmem>>, vector<1x256xf32>
    %220 = vector.broadcast %219 : vector<1x256xf32> to vector<2x256xf32>
    %221 = arith.addf %218, %220 : vector<2x256xf32>
    %cst_183 = arith.constant 0.000000e+00 : f32
    %222 = vector.broadcast %cst_183 : f32 to vector<2x256xf32>
    %223 = arith.maximumf %221, %222 : vector<2x256xf32>
    %224 = arith.truncf %223 : vector<2x256xf32> to vector<2x256xbf16>
    %c0_184 = arith.constant 0 : index
    %c0_185 = arith.constant 0 : index
    %225 = vector.load %arg10[%c0_184, %c0_185] : memref<256x128xbf16, #tpu.memory_space<vmem>>, vector<256x128xbf16>
    %cst_186 = arith.constant dense<0.000000e+00> : vector<2x128xf32>
    %226 = tpu.matmul %224, %225, %cst_186 {dimension_numbers = #tpu.dot_dimension_numbers<[1], [0], [0], [1], [0, 0, 1, 1], [], []>} : vector<2x256xbf16>, vector<256x128xbf16>, vector<2x128xf32> -> vector<2x128xf32>
    %c0_187 = arith.constant 0 : index
    %c0_188 = arith.constant 0 : index
    %227 = vector.load %arg11[%c0_187, %c0_188] : memref<1x128xf32, #tpu.memory_space<vmem>>, vector<1x128xf32>
    %228 = vector.broadcast %227 : vector<1x128xf32> to vector<2x128xf32>
    %229 = arith.addf %226, %228 : vector<2x128xf32>
    %c0_189 = arith.constant 0 : index
    %c0_190 = arith.constant 0 : index
    %230 = vector.load %arg12[%c0_189, %c0_190] : memref<2x128xf32, #tpu.memory_space<vmem>>, vector<2x128xf32>
    tpu.vector_store %arg12[%c0_189, %c0_190], %229 {strides = array<i32>} : memref<2x128xf32, #tpu.memory_space<vmem>>, vector<2x128xf32>,
    return
  }
  func.func @transform_0(%arg0: i32) -> (i32, i32) {
    %c0_i32 = arith.constant 0 : i32
    %c0_i32_0 = arith.constant 0 : i32
    return %arg0, %c0_i32 : i32, i32
  }
  func.func @transform_1(%arg0: i32) -> (i32, i32) {
    %c0_i32 = arith.constant 0 : i32
    %c0_i32_0 = arith.constant 0 : i32
    %c0_i32_1 = arith.constant 0 : i32
    return %c0_i32, %c0_i32_0 : i32, i32
  }
  func.func @transform_2(%arg0: i32) -> (i32, i32) {
    %c0_i32 = arith.constant 0 : i32
    %c0_i32_0 = arith.constant 0 : i32
    %c0_i32_1 = arith.constant 0 : i32
    return %c0_i32, %c0_i32_0 : i32, i32
  }
  func.func @transform_3(%arg0: i32) -> (i32, i32) {
    %c0_i32 = arith.constant 0 : i32
    %c0_i32_0 = arith.constant 0 : i32
    %c0_i32_1 = arith.constant 0 : i32
    return %c0_i32, %c0_i32_0 : i32, i32
  }
  func.func @transform_4(%arg0: i32) -> (i32, i32) {
    %c0_i32 = arith.constant 0 : i32
    %c0_i32_0 = arith.constant 0 : i32
    %c0_i32_1 = arith.constant 0 : i32
    return %c0_i32, %c0_i32_0 : i32, i32
  }
  func.func @transform_5(%arg0: i32) -> (i32, i32) {
    %c0_i32 = arith.constant 0 : i32
    %c0_i32_0 = arith.constant 0 : i32
    %c0_i32_1 = arith.constant 0 : i32
    return %c0_i32, %c0_i32_0 : i32, i32
  }
  func.func @transform_6(%arg0: i32) -> (i32, i32) {
    %c0_i32 = arith.constant 0 : i32
    %c0_i32_0 = arith.constant 0 : i32
    %c0_i32_1 = arith.constant 0 : i32
    return %c0_i32, %c0_i32_0 : i32, i32
  }
  func.func @transform_7(%arg0: i32) -> (i32, i32) {
    %c0_i32 = arith.constant 0 : i32
    %c0_i32_0 = arith.constant 0 : i32
    %c0_i32_1 = arith.constant 0 : i32
    return %c0_i32, %c0_i32_0 : i32, i32
  }
  func.func @transform_8(%arg0: i32) -> (i32, i32) {
    %c0_i32 = arith.constant 0 : i32
    %c0_i32_0 = arith.constant 0 : i32
    %c0_i32_1 = arith.constant 0 : i32
    return %c0_i32, %c0_i32_0 : i32, i32
  }
  func.func @transform_9(%arg0: i32) -> (i32, i32) {
    %c0_i32 = arith.constant 0 : i32
    %c0_i32_0 = arith.constant 0 : i32
    %c0_i32_1 = arith.constant 0 : i32
    return %c0_i32, %c0_i32_0 : i32, i32
  }
  func.func @transform_10(%arg0: i32) -> (i32, i32) {
    %c0_i32 = arith.constant 0 : i32
    %c0_i32_0 = arith.constant 0 : i32
    %c0_i32_1 = arith.constant 0 : i32
    return %c0_i32, %c0_i32_0 : i32, i32
  }
  func.func @transform_11(%arg0: i32) -> (i32, i32) {
    %c0_i32 = arith.constant 0 : i32
    %c0_i32_0 = arith.constant 0 : i32
    return %arg0, %c0_i32 : i32, i32
  }
}

</mosaic_0001>

<llo_original>
// kernel: net_forward.1
$region0: #{net_forward.1}
  #allocation0 [shape = 'u32[]', space=smem, size = 0x4, offset = 0x4, fixed_abs, tag = 'smem constant byte address 0x4 - core index']
  #allocation1 [shape = 'u32[144,128]{1,0:T(1,128)}', space=vmem, size = 0x12000, scoped, tag = 'internal scratch']
  #allocation2 [shape = 'bf16[20,640]{1,0:T(8,128)(2,1)}', space=vmem, size = 0x7800, scoped, tag = 'scratch operand']
  #allocation3 [shape = 'bf16[32,1024]{1,0:T(8,128)(2,1)}', space=vmem, size = 0x10000, scoped, tag = 'scratch operand']
  %s0 = inlined_call_operand.vmem [shape: bf16[288,768], index: 0, kind: input, shape index: {}]
  %s1 = inlined_call_operand.vmem [shape: bf16[768,64], index: 1, kind: input, shape index: {}]
  %s2 = inlined_call_operand.vmem [shape: f32[1,64], index: 2, kind: input, shape index: {}]
  %s3 = inlined_call_operand.vmem [shape: bf16[1024,128], index: 3, kind: input, shape index: {}]
  %s4 = inlined_call_operand.vmem [shape: f32[1,128], index: 4, kind: input, shape index: {}]
  %s5 = inlined_call_operand.vmem [shape: bf16[512,1024], index: 5, kind: input, shape index: {}]
  %s6 = inlined_call_operand.vmem [shape: f32[1,1024], index: 6, kind: input, shape index: {}]
  %s7 = inlined_call_operand.vmem [shape: bf16[1024,256], index: 7, kind: input, shape index: {}]
  %s8 = inlined_call_operand.vmem [shape: f32[1,256], index: 8, kind: input, shape index: {}]
  %s9 = inlined_call_operand.vmem [shape: bf16[256,128], index: 9, kind: input, shape index: {}]
  %s10 = inlined_call_operand.vmem [shape: f32[1,128], index: 10, kind: input, shape index: {}]
  %s11 = inlined_call_operand.hbm [shape: f32[2,128], index: 11, kind: output, shape index: {}]
  %s12 = sld [smem:[#allocation0]]
  $region54: #{net_forward.1} parent=0
    _
  %s14 = ssub.s32 1, %s12
  %s15 = scalar_select 0, %s14, %s12
  $region1: #{net_forward.1} parent=0
    #allocation4 [shape = 'u8[1024]{0}', space=vmem, size = 0x400, scoped, tag = 'output window, operand 0, single buffered']
    #allocation5 [shape = 's32[1]{0}', space=sflag, size = 0x4, scoped, tag = 'scoped memory for net_forward.1']
    %16 = vsyncpa [#allocation5], 0
    // Predicated region
    $region2: #{net_forward.1} parent=1 // pred_check
      _
    $region3: #{net_forward.1} parent=1 // pred_check_branch
      %18 = sbr.rel (0) target = $region5
    $region4: #{net_forward.1} parent=1 // pred_region
      _
    $region5: #{net_forward.1} parent=1 // pred_fallthru
      _
    // Predicated region
    $region6: #{net_forward.1} parent=1 // pred_check
      _
    $region7: #{net_forward.1} parent=1 // pred_check_branch
      %20 = sbr.rel (0) target = $region9
    $region8: #{net_forward.1} parent=1 // pred_region
      _
    $region9: #{net_forward.1} parent=1 // pred_fallthru
      _
    // Predicated region
    $region10: #{net_forward.1} parent=1 // pred_check
      _
    $region11: #{net_forward.1} parent=1 // pred_check_branch
      %22 = sbr.rel (0) target = $region13
    $region12: #{net_forward.1} parent=1 // pred_region
      _
    $region13: #{net_forward.1} parent=1 // pred_fallthru
      _
    // Predicated region
    $region14: #{net_forward.1} parent=1 // pred_check
      _
    $region15: #{net_forward.1} parent=1 // pred_check_branch
      %24 = sbr.rel (0) target = $region17
    $region16: #{net_forward.1} parent=1 // pred_region
      _
    $region17: #{net_forward.1} parent=1 // pred_fallthru
      _
    // Predicated region
    $region18: #{net_forward.1} parent=1 // pred_check
      _
    $region19: #{net_forward.1} parent=1 // pred_check_branch
      %26 = sbr.rel (0) target = $region21
    $region20: #{net_forward.1} parent=1 // pred_region
      _
    $region21: #{net_forward.1} parent=1 // pred_fallthru
      _
    // Predicated region
    $region22: #{net_forward.1} parent=1 // pred_check
      _
    $region23: #{net_forward.1} parent=1 // pred_check_branch
      %28 = sbr.rel (0) target = $region25
    $region24: #{net_forward.1} parent=1 // pred_region
      _
    $region25: #{net_forward.1} parent=1 // pred_fallthru
      _
    // Predicated region
    $region26: #{net_forward.1} parent=1 // pred_check
      _
    $region27: #{net_forward.1} parent=1 // pred_check_branch
      %30 = sbr.rel (0) target = $region29
    $region28: #{net_forward.1} parent=1 // pred_region
      _
    $region29: #{net_forward.1} parent=1 // pred_fallthru
      _
    // Predicated region
    $region30: #{net_forward.1} parent=1 // pred_check
      _
    $region31: #{net_forward.1} parent=1 // pred_check_branch
      %32 = sbr.rel (0) target = $region33
    $region32: #{net_forward.1} parent=1 // pred_region
      _
    $region33: #{net_forward.1} parent=1 // pred_fallthru
      _
    // Predicated region
    $region34: #{net_forward.1} parent=1 // pred_check
      _
    $region35: #{net_forward.1} parent=1 // pred_check_branch
      %34 = sbr.rel (0) target = $region37
    $region36: #{net_forward.1} parent=1 // pred_region
      _
    $region37: #{net_forward.1} parent=1 // pred_fallthru
      _
    // Predicated region
    $region38: #{net_forward.1} parent=1 // pred_check
      _
    $region39: #{net_forward.1} parent=1 // pred_check_branch
      %36 = sbr.rel (0) target = $region41
    $region40: #{net_forward.1} parent=1 // pred_region
      _
    $region41: #{net_forward.1} parent=1 // pred_fallthru
      _
    // Predicated region
    $region42: #{net_forward.1} parent=1 // pred_check
      _
    $region43: #{net_forward.1} parent=1 // pred_check_branch
      %38 = sbr.rel (0) target = $region45
    $region44: #{net_forward.1} parent=1 // pred_region
      _
    $region45: #{net_forward.1} parent=1 // pred_fallthru
      _
    %v40 = vld [vmem:[%s0] sm:$0xff]
    %v41 = vld [vmem:[%s0 + $0x8] sm:$0xff]
    %v42 = vld [vmem:[%s0 + $0x10] sm:$0xff]
    %v43 = vld [vmem:[%s0 + $0x18] sm:$0xff]
    %v44 = vld [vmem:[%s0 + $0x20] sm:$0xff]
    %v45 = vld [vmem:[%s0 + $0x28] sm:$0xff]
    %v46 = vld [vmem:[%s0 + $0x30] sm:$0xff]
    %v47 = vld [vmem:[%s0 + $0x38] sm:$0xff]
    %v48 = vld [vmem:[%s0 + $0x40] sm:$0xff]
    %v49 = vld [vmem:[%s0 + $0x48] sm:$0xff]
    %v50 = vld [vmem:[%s0 + $0x50] sm:$0xff]
    %v51 = vld [vmem:[%s0 + $0x58] sm:$0xff]
    %v52 = vld [vmem:[%s0 + $0x60] sm:$0xff]
    %v53 = vld [vmem:[%s0 + $0x68] sm:$0xff]
    %v54 = vld [vmem:[%s0 + $0x70] sm:$0xff]
    %v55 = vld [vmem:[%s0 + $0x78] sm:$0xff]
    %v56 = vld [vmem:[%s0 + $0x80] sm:$0xff]
    %v57 = vld [vmem:[%s0 + $0x88] sm:$0xff]
    %v58 = vld [vmem:[%s0 + $0x90] sm:$0xff]
    %v59 = vld [vmem:[%s0 + $0x98] sm:$0xff]
    %v60 = vld [vmem:[%s0 + $0xa0] sm:$0xff]
    %v61 = vld [vmem:[%s0 + $0xa8] sm:$0xff]
    %v62 = vld [vmem:[%s0 + $0xb0] sm:$0xff]
    %v63 = vld [vmem:[%s0 + $0xb8] sm:$0xff]
    %v64 = vld [vmem:[%s0 + $0xc0] sm:$0xff]
    %v65 = vld [vmem:[%s0 + $0xc8] sm:$0xff]
    %v66 = vld [vmem:[%s0 + $0xd0] sm:$0xff]
    %v67 = vld [vmem:[%s0 + $0xd8] sm:$0xff]
    %v68 = vld [vmem:[%s0 + $0xe0] sm:$0xff]
    %v69 = vld [vmem:[%s0 + $0xe8] sm:$0xff]
    %v70 = vld [vmem:[%s0 + $0xf0] sm:$0xff]
    %v71 = vld [vmem:[%s0 + $0xf8] sm:$0xff]
    %v72 = vld [vmem:[%s0 + $0x100] sm:$0xff]
    %v73 = vld [vmem:[%s0 + $0x108] sm:$0xff]
    %v74 = vld [vmem:[%s0 + $0x110] sm:$0xff]
    %v75 = vld [vmem:[%s0 + $0x118] sm:$0xff]
    %v76 = vld [vmem:[%s0 + $0x120] sm:$0xff]
    %v77 = vld [vmem:[%s0 + $0x128] sm:$0xff]
    %v78 = vld [vmem:[%s0 + $0x130] sm:$0xff]
    %v79 = vld [vmem:[%s0 + $0x138] sm:$0xff]
    %v80 = vld [vmem:[%s0 + $0x140] sm:$0xff]
    %v81 = vld [vmem:[%s0 + $0x148] sm:$0xff]
    %v82 = vld [vmem:[%s0 + $0x150] sm:$0xff]
    %v83 = vld [vmem:[%s0 + $0x158] sm:$0xff]
    %v84 = vld [vmem:[%s0 + $0x160] sm:$0xff]
    %v85 = vld [vmem:[%s0 + $0x168] sm:$0xff]
    %v86 = vld [vmem:[%s0 + $0x170] sm:$0xff]
    %v87 = vld [vmem:[%s0 + $0x178] sm:$0xff]
    %v88 = vld [vmem:[%s0 + $0x180] sm:$0xff]
    %v89 = vld [vmem:[%s0 + $0x188] sm:$0xff]
    %v90 = vld [vmem:[%s0 + $0x190] sm:$0xff]
    %v91 = vld [vmem:[%s0 + $0x198] sm:$0xff]
    %v92 = vld [vmem:[%s0 + $0x1a0] sm:$0xff]
    %v93 = vld [vmem:[%s0 + $0x1a8] sm:$0xff]
    %v94 = vld [vmem:[%s0 + $0x1b0] sm:$0xff]
    %v95 = vld [vmem:[%s0 + $0x1b8] sm:$0xff]
    %v96 = vld [vmem:[%s0 + $0x1c0] sm:$0xff]
    %v97 = vld [vmem:[%s0 + $0x1c8] sm:$0xff]
    %v98 = vld [vmem:[%s0 + $0x1d0] sm:$0xff]
    %v99 = vld [vmem:[%s0 + $0x1d8] sm:$0xff]
    %v100 = vld [vmem:[%s0 + $0x1e0] sm:$0xff]
    %v101 = vld [vmem:[%s0 + $0x1e8] sm:$0xff]
    %v102 = vld [vmem:[%s0 + $0x1f0] sm:$0xff]
    %v103 = vld [vmem:[%s0 + $0x1f8] sm:$0xff]
    %v104 = vld [vmem:[%s0 + $0x200] sm:$0xff]
    %v105 = vld [vmem:[%s0 + $0x208] sm:$0xff]
    %v106 = vld [vmem:[%s0 + $0x210] sm:$0xff]
    %v107 = vld [vmem:[%s0 + $0x218] sm:$0xff]
    %v108 = vld [vmem:[%s0 + $0x220] sm:$0xff]
    %v109 = vld [vmem:[%s0 + $0x228] sm:$0xff]
    %v110 = vld [vmem:[%s0 + $0x230] sm:$0xff]
    %v111 = vld [vmem:[%s0 + $0x238] sm:$0xff]
    %v112 = vld [vmem:[%s0 + $0x240] sm:$0xff]
    %v113 = vld [vmem:[%s0 + $0x248] sm:$0xff]
    %v114 = vld [vmem:[%s0 + $0x250] sm:$0xff]
    %v115 = vld [vmem:[%s0 + $0x258] sm:$0xff]
    %v116 = vld [vmem:[%s0 + $0x260] sm:$0xff]
    %v117 = vld [vmem:[%s0 + $0x268] sm:$0xff]
    %v118 = vld [vmem:[%s0 + $0x270] sm:$0xff]
    %v119 = vld [vmem:[%s0 + $0x278] sm:$0xff]
    %v120 = vld [vmem:[%s0 + $0x280] sm:$0xff]
    %v121 = vld [vmem:[%s0 + $0x288] sm:$0xff]
    %v122 = vld [vmem:[%s0 + $0x290] sm:$0xff]
    %v123 = vld [vmem:[%s0 + $0x298] sm:$0xff]
    %v124 = vld [vmem:[%s0 + $0x2a0] sm:$0xff]
    %v125 = vld [vmem:[%s0 + $0x2a8] sm:$0xff]
    %v126 = vld [vmem:[%s0 + $0x2b0] sm:$0xff]
    %v127 = vld [vmem:[%s0 + $0x2b8] sm:$0xff]
    %v128 = vld [vmem:[%s0 + $0x2c0] sm:$0xff]
    %v129 = vld [vmem:[%s0 + $0x2c8] sm:$0xff]
    %v130 = vld [vmem:[%s0 + $0x2d0] sm:$0xff]
    %v131 = vld [vmem:[%s0 + $0x2d8] sm:$0xff]
    %v132 = vld [vmem:[%s0 + $0x2e0] sm:$0xff]
    %v133 = vld [vmem:[%s0 + $0x2e8] sm:$0xff]
    %v134 = vld [vmem:[%s0 + $0x2f0] sm:$0xff]
    %v135 = vld [vmem:[%s0 + $0x2f8] sm:$0xff]
    %v136 = vld [vmem:[%s0 + $0x300] sm:$0xff]
    %v137 = vld [vmem:[%s0 + $0x308] sm:$0xff]
    %v138 = vld [vmem:[%s0 + $0x310] sm:$0xff]
    %v139 = vld [vmem:[%s0 + $0x318] sm:$0xff]
    %v140 = vld [vmem:[%s0 + $0x320] sm:$0xff]
    %v141 = vld [vmem:[%s0 + $0x328] sm:$0xff]
    %v142 = vld [vmem:[%s0 + $0x330] sm:$0xff]
    %v143 = vld [vmem:[%s0 + $0x338] sm:$0xff]
    %v144 = vld [vmem:[%s0 + $0x340] sm:$0xff]
    %v145 = vld [vmem:[%s0 + $0x348] sm:$0xff]
    %v146 = vld [vmem:[%s0 + $0x350] sm:$0xff]
    %v147 = vld [vmem:[%s0 + $0x358] sm:$0xff]
    %v148 = vld [vmem:[%s1] sm:$0xf]
    %v149 = vld [vmem:[%s1 + $0x4] sm:$0xf]
    %v150 = vld [vmem:[%s1 + $0x8] sm:$0xf]
    %v151 = vld [vmem:[%s1 + $0xc] sm:$0xf]
    %v152 = vld [vmem:[%s1 + $0x10] sm:$0xf]
    %v153 = vld [vmem:[%s1 + $0x14] sm:$0xf]
    %v154 = vld [vmem:[%s1 + $0x18] sm:$0xf]
    %v155 = vld [vmem:[%s1 + $0x1c] sm:$0xf]
    %v156 = vld [vmem:[%s1 + $0x20] sm:$0xf]
    %v157 = vld [vmem:[%s1 + $0x24] sm:$0xf]
    %v158 = vld [vmem:[%s1 + $0x28] sm:$0xf]
    %v159 = vld [vmem:[%s1 + $0x2c] sm:$0xf]
    %v160 = vld [vmem:[%s1 + $0x30] sm:$0xf]
    %v161 = vld [vmem:[%s1 + $0x34] sm:$0xf]
    %v162 = vld [vmem:[%s1 + $0x38] sm:$0xf]
    %v163 = vld [vmem:[%s1 + $0x3c] sm:$0xf]
    %v164 = vld [vmem:[%s1 + $0x40] sm:$0xf]
    %v165 = vld [vmem:[%s1 + $0x44] sm:$0xf]
    %v166 = vld [vmem:[%s1 + $0x48] sm:$0xf]
    %v167 = vld [vmem:[%s1 + $0x4c] sm:$0xf]
    %v168 = vld [vmem:[%s1 + $0x50] sm:$0xf]
    %v169 = vld [vmem:[%s1 + $0x54] sm:$0xf]
    %v170 = vld [vmem:[%s1 + $0x58] sm:$0xf]
    %v171 = vld [vmem:[%s1 + $0x5c] sm:$0xf]
    %v172 = vld [vmem:[%s1 + $0x60] sm:$0xf]
    %v173 = vld [vmem:[%s1 + $0x64] sm:$0xf]
    %v174 = vld [vmem:[%s1 + $0x68] sm:$0xf]
    %v175 = vld [vmem:[%s1 + $0x6c] sm:$0xf]
    %v176 = vld [vmem:[%s1 + $0x70] sm:$0xf]
    %v177 = vld [vmem:[%s1 + $0x74] sm:$0xf]
    %v178 = vld [vmem:[%s1 + $0x78] sm:$0xf]
    %v179 = vld [vmem:[%s1 + $0x7c] sm:$0xf]
    %v180 = vld [vmem:[%s1 + $0x80] sm:$0xf]
    %v181 = vld [vmem:[%s1 + $0x84] sm:$0xf]
    %v182 = vld [vmem:[%s1 + $0x88] sm:$0xf]
    %v183 = vld [vmem:[%s1 + $0x8c] sm:$0xf]
    %v184 = vld [vmem:[%s1 + $0x90] sm:$0xf]
    %v185 = vld [vmem:[%s1 + $0x94] sm:$0xf]
    %v186 = vld [vmem:[%s1 + $0x98] sm:$0xf]
    %v187 = vld [vmem:[%s1 + $0x9c] sm:$0xf]
    %v188 = vld [vmem:[%s1 + $0xa0] sm:$0xf]
    %v189 = vld [vmem:[%s1 + $0xa4] sm:$0xf]
    %v190 = vld [vmem:[%s1 + $0xa8] sm:$0xf]
    %v191 = vld [vmem:[%s1 + $0xac] sm:$0xf]
    %v192 = vld [vmem:[%s1 + $0xb0] sm:$0xf]
    %v193 = vld [vmem:[%s1 + $0xb4] sm:$0xf]
    %v194 = vld [vmem:[%s1 + $0xb8] sm:$0xf]
    %v195 = vld [vmem:[%s1 + $0xbc] sm:$0xf]
    %v196 = vld [vmem:[%s1 + $0xc0] sm:$0xf]
    %v197 = vld [vmem:[%s1 + $0xc4] sm:$0xf]
    %v198 = vld [vmem:[%s1 + $0xc8] sm:$0xf]
    %v199 = vld [vmem:[%s1 + $0xcc] sm:$0xf]
    %v200 = vld [vmem:[%s1 + $0xd0] sm:$0xf]
    %v201 = vld [vmem:[%s1 + $0xd4] sm:$0xf]
    %v202 = vld [vmem:[%s1 + $0xd8] sm:$0xf]
    %v203 = vld [vmem:[%s1 + $0xdc] sm:$0xf]
    %v204 = vld [vmem:[%s1 + $0xe0] sm:$0xf]
    %v205 = vld [vmem:[%s1 + $0xe4] sm:$0xf]
    %v206 = vld [vmem:[%s1 + $0xe8] sm:$0xf]
    %v207 = vld [vmem:[%s1 + $0xec] sm:$0xf]
    %v208 = vld [vmem:[%s1 + $0xf0] sm:$0xf]
    %v209 = vld [vmem:[%s1 + $0xf4] sm:$0xf]
    %v210 = vld [vmem:[%s1 + $0xf8] sm:$0xf]
    %v211 = vld [vmem:[%s1 + $0xfc] sm:$0xf]
    %v212 = vld [vmem:[%s1 + $0x100] sm:$0xf]
    %v213 = vld [vmem:[%s1 + $0x104] sm:$0xf]
    %v214 = vld [vmem:[%s1 + $0x108] sm:$0xf]
    %v215 = vld [vmem:[%s1 + $0x10c] sm:$0xf]
    %v216 = vld [vmem:[%s1 + $0x110] sm:$0xf]
    %v217 = vld [vmem:[%s1 + $0x114] sm:$0xf]
    %v218 = vld [vmem:[%s1 + $0x118] sm:$0xf]
    %v219 = vld [vmem:[%s1 + $0x11c] sm:$0xf]
    %v220 = vld [vmem:[%s1 + $0x120] sm:$0xf]
    %v221 = vld [vmem:[%s1 + $0x124] sm:$0xf]
    %v222 = vld [vmem:[%s1 + $0x128] sm:$0xf]
    %v223 = vld [vmem:[%s1 + $0x12c] sm:$0xf]
    %v224 = vld [vmem:[%s1 + $0x130] sm:$0xf]
    %v225 = vld [vmem:[%s1 + $0x134] sm:$0xf]
    %v226 = vld [vmem:[%s1 + $0x138] sm:$0xf]
    %v227 = vld [vmem:[%s1 + $0x13c] sm:$0xf]
    %v228 = vld [vmem:[%s1 + $0x140] sm:$0xf]
    %v229 = vld [vmem:[%s1 + $0x144] sm:$0xf]
    %v230 = vld [vmem:[%s1 + $0x148] sm:$0xf]
    %v231 = vld [vmem:[%s1 + $0x14c] sm:$0xf]
    %v232 = vld [vmem:[%s1 + $0x150] sm:$0xf]
    %v233 = vld [vmem:[%s1 + $0x154] sm:$0xf]
    %v234 = vld [vmem:[%s1 + $0x158] sm:$0xf]
    %v235 = vld [vmem:[%s1 + $0x15c] sm:$0xf]
    %v236 = vld [vmem:[%s1 + $0x160] sm:$0xf]
    %v237 = vld [vmem:[%s1 + $0x164] sm:$0xf]
    %v238 = vld [vmem:[%s1 + $0x168] sm:$0xf]
    %v239 = vld [vmem:[%s1 + $0x16c] sm:$0xf]
    %v240 = vld [vmem:[%s1 + $0x170] sm:$0xf]
    %v241 = vld [vmem:[%s1 + $0x174] sm:$0xf]
    %v242 = vld [vmem:[%s1 + $0x178] sm:$0xf]
    %v243 = vld [vmem:[%s1 + $0x17c] sm:$0xf]
    %v244 = vld [vmem:[%s2] sm:$0x1]
    %v246 = vlaneseq
    %v247 = vshrl.u32 %v246, 7
    %v248 = vsub.s32 0, %v247
    %v249 = vrot.slane %v244, %v248
    %v359 = vunpack.c.l.b16 %v40
    %v360 = vunpack.c.h.b16 %v40
    %v361 = vunpack.c.l.b16 %v41
    %v362 = vunpack.c.h.b16 %v41
    %v363 = vunpack.c.l.b16 %v42
    %v364 = vunpack.c.h.b16 %v42
    %v365 = vunpack.c.l.b16 %v43
    %v366 = vunpack.c.h.b16 %v43
    %v367 = vunpack.c.l.b16 %v44
    %v368 = vunpack.c.h.b16 %v44
    %v369 = vunpack.c.l.b16 %v45
    %v370 = vunpack.c.h.b16 %v45
    %v371 = vunpack.c.l.b16 %v46
    %v372 = vunpack.c.h.b16 %v46
    %v373 = vunpack.c.l.b16 %v47
    %v374 = vunpack.c.h.b16 %v47
    %v375 = vunpack.c.l.b16 %v48
    %v376 = vunpack.c.h.b16 %v48
    %v377 = vunpack.c.l.b16 %v49
    %v378 = vunpack.c.h.b16 %v49
    %v379 = vunpack.c.l.b16 %v50
    %v380 = vunpack.c.h.b16 %v50
    %v381 = vunpack.c.l.b16 %v51
    %v382 = vunpack.c.h.b16 %v51
    %v383 = vunpack.c.l.b16 %v52
    %v384 = vunpack.c.h.b16 %v52
    %v385 = vunpack.c.l.b16 %v53
    %v386 = vunpack.c.h.b16 %v53
    %v387 = vunpack.c.l.b16 %v54
    %v388 = vunpack.c.h.b16 %v54
    %v389 = vunpack.c.l.b16 %v55
    %v390 = vunpack.c.h.b16 %v55
    %v391 = vunpack.c.l.b16 %v56
    %v392 = vunpack.c.h.b16 %v56
    %v393 = vunpack.c.l.b16 %v57
    %v394 = vunpack.c.h.b16 %v57
    %v395 = vunpack.c.l.b16 %v58
    %v396 = vunpack.c.h.b16 %v58
    %v397 = vunpack.c.l.b16 %v59
    %v398 = vunpack.c.h.b16 %v59
    %v399 = vunpack.c.l.b16 %v60
    %v400 = vunpack.c.h.b16 %v60
    %v401 = vunpack.c.l.b16 %v61
    %v402 = vunpack.c.h.b16 %v61
    %v403 = vunpack.c.l.b16 %v62
    %v404 = vunpack.c.h.b16 %v62
    %v405 = vunpack.c.l.b16 %v63
    %v406 = vunpack.c.h.b16 %v63
    %v407 = vunpack.c.l.b16 %v64
    %v408 = vunpack.c.h.b16 %v64
    %v409 = vunpack.c.l.b16 %v65
    %v410 = vunpack.c.h.b16 %v65
    %v411 = vunpack.c.l.b16 %v66
    %v412 = vunpack.c.h.b16 %v66
    %v413 = vunpack.c.l.b16 %v67
    %v414 = vunpack.c.h.b16 %v67
    %v415 = vunpack.c.l.b16 %v68
    %v416 = vunpack.c.h.b16 %v68
    %v417 = vunpack.c.l.b16 %v69
    %v418 = vunpack.c.h.b16 %v69
    %v419 = vunpack.c.l.b16 %v70
    %v420 = vunpack.c.h.b16 %v70
    %v421 = vunpack.c.l.b16 %v71
    %v422 = vunpack.c.h.b16 %v71
    %v423 = vunpack.c.l.b16 %v72
    %v424 = vunpack.c.h.b16 %v72
    %v425 = vunpack.c.l.b16 %v73
    %v426 = vunpack.c.h.b16 %v73
    %v427 = vunpack.c.l.b16 %v74
    %v428 = vunpack.c.h.b16 %v74
    %v429 = vunpack.c.l.b16 %v75
    %v430 = vunpack.c.h.b16 %v75
    %v431 = vunpack.c.l.b16 %v76
    %v432 = vunpack.c.h.b16 %v76
    %v433 = vunpack.c.l.b16 %v77
    %v434 = vunpack.c.h.b16 %v77
    %v435 = vunpack.c.l.b16 %v78
    %v436 = vunpack.c.h.b16 %v78
    %v437 = vunpack.c.l.b16 %v79
    %v438 = vunpack.c.h.b16 %v79
    %v439 = vunpack.c.l.b16 %v80
    %v440 = vunpack.c.h.b16 %v80
    %v441 = vunpack.c.l.b16 %v81
    %v442 = vunpack.c.h.b16 %v81
    %v443 = vunpack.c.l.b16 %v82
    %v444 = vunpack.c.h.b16 %v82
    %v445 = vunpack.c.l.b16 %v83
    %v446 = vunpack.c.h.b16 %v83
    %v447 = vunpack.c.l.b16 %v84
    %v448 = vunpack.c.h.b16 %v84
    %v449 = vunpack.c.l.b16 %v85
    %v450 = vunpack.c.h.b16 %v85
    %v451 = vunpack.c.l.b16 %v86
    %v452 = vunpack.c.h.b16 %v86
    %v453 = vunpack.c.l.b16 %v87
    %v454 = vunpack.c.h.b16 %v87
    %v455 = vunpack.c.l.b16 %v88
    %v456 = vunpack.c.h.b16 %v88
    %v457 = vunpack.c.l.b16 %v89
    %v458 = vunpack.c.h.b16 %v89
    %v459 = vunpack.c.l.b16 %v90
    %v460 = vunpack.c.h.b16 %v90
    %v461 = vunpack.c.l.b16 %v91
    %v462 = vunpack.c.h.b16 %v91
    %v463 = vunpack.c.l.b16 %v92
    %v464 = vunpack.c.h.b16 %v92
    %v465 = vunpack.c.l.b16 %v93
    %v466 = vunpack.c.h.b16 %v93
    %v467 = vunpack.c.l.b16 %v94
    %v468 = vunpack.c.h.b16 %v94
    %v469 = vunpack.c.l.b16 %v95
    %v470 = vunpack.c.h.b16 %v95
    %v471 = vunpack.c.l.b16 %v96
    %v472 = vunpack.c.h.b16 %v96
    %v473 = vunpack.c.l.b16 %v97
    %v474 = vunpack.c.h.b16 %v97
    %v475 = vunpack.c.l.b16 %v98
    %v476 = vunpack.c.h.b16 %v98
    %v477 = vunpack.c.l.b16 %v99
    %v478 = vunpack.c.h.b16 %v99
    %v479 = vunpack.c.l.b16 %v100
    %v480 = vunpack.c.h.b16 %v100
    %v481 = vunpack.c.l.b16 %v101
    %v482 = vunpack.c.h.b16 %v101
    %v483 = vunpack.c.l.b16 %v102
    %v484 = vunpack.c.h.b16 %v102
    %v485 = vunpack.c.l.b16 %v103
    %v486 = vunpack.c.h.b16 %v103
    %v487 = vunpack.c.l.b16 %v104
    %v488 = vunpack.c.h.b16 %v104
    %v489 = vunpack.c.l.b16 %v105
    %v490 = vunpack.c.h.b16 %v105
    %v491 = vunpack.c.l.b16 %v106
    %v492 = vunpack.c.h.b16 %v106
    %v493 = vunpack.c.l.b16 %v107
    %v494 = vunpack.c.h.b16 %v107
    %v495 = vunpack.c.l.b16 %v108
    %v496 = vunpack.c.h.b16 %v108
    %v497 = vunpack.c.l.b16 %v109
    %v498 = vunpack.c.h.b16 %v109
    %v499 = vunpack.c.l.b16 %v110
    %v500 = vunpack.c.h.b16 %v110
    %v501 = vunpack.c.l.b16 %v111
    %v502 = vunpack.c.h.b16 %v111
    %v503 = vunpack.c.l.b16 %v112
    %v504 = vunpack.c.h.b16 %v112
    %v505 = vunpack.c.l.b16 %v113
    %v506 = vunpack.c.h.b16 %v113
    %v507 = vunpack.c.l.b16 %v114
    %v508 = vunpack.c.h.b16 %v114
    %v509 = vunpack.c.l.b16 %v115
    %v510 = vunpack.c.h.b16 %v115
    %v511 = vunpack.c.l.b16 %v116
    %v512 = vunpack.c.h.b16 %v116
    %v513 = vunpack.c.l.b16 %v117
    %v514 = vunpack.c.h.b16 %v117
    %v515 = vunpack.c.l.b16 %v118
    %v516 = vunpack.c.h.b16 %v118
    %v517 = vunpack.c.l.b16 %v119
    %v518 = vunpack.c.h.b16 %v119
    %v519 = vunpack.c.l.b16 %v120
    %v520 = vunpack.c.h.b16 %v120
    %v521 = vunpack.c.l.b16 %v121
    %v522 = vunpack.c.h.b16 %v121
    %v523 = vunpack.c.l.b16 %v122
    %v524 = vunpack.c.h.b16 %v122
    %v525 = vunpack.c.l.b16 %v123
    %v526 = vunpack.c.h.b16 %v123
    %v527 = vunpack.c.l.b16 %v124
    %v528 = vunpack.c.h.b16 %v124
    %v529 = vunpack.c.l.b16 %v125
    %v530 = vunpack.c.h.b16 %v125
    %v531 = vunpack.c.l.b16 %v126
    %v532 = vunpack.c.h.b16 %v126
    %v533 = vunpack.c.l.b16 %v127
    %v534 = vunpack.c.h.b16 %v127
    %v535 = vunpack.c.l.b16 %v128
    %v536 = vunpack.c.h.b16 %v128
    %v537 = vunpack.c.l.b16 %v129
    %v538 = vunpack.c.h.b16 %v129
    %v539 = vunpack.c.l.b16 %v130
    %v540 = vunpack.c.h.b16 %v130
    %v541 = vunpack.c.l.b16 %v131
    %v542 = vunpack.c.h.b16 %v131
    %v543 = vunpack.c.l.b16 %v132
    %v544 = vunpack.c.h.b16 %v132
    %v545 = vunpack.c.l.b16 %v133
    %v546 = vunpack.c.h.b16 %v133
    %v547 = vunpack.c.l.b16 %v134
    %v548 = vunpack.c.h.b16 %v134
    %v549 = vunpack.c.l.b16 %v135
    %v550 = vunpack.c.h.b16 %v135
    %v551 = vunpack.c.l.b16 %v136
    %v552 = vunpack.c.h.b16 %v136
    %v553 = vunpack.c.l.b16 %v137
    %v554 = vunpack.c.h.b16 %v137
    %v555 = vunpack.c.l.b16 %v138
    %v556 = vunpack.c.h.b16 %v138
    %v557 = vunpack.c.l.b16 %v139
    %v558 = vunpack.c.h.b16 %v139
    %v559 = vunpack.c.l.b16 %v140
    %v560 = vunpack.c.h.b16 %v140
    %v561 = vunpack.c.l.b16 %v141
    %v562 = vunpack.c.h.b16 %v141
    %v563 = vunpack.c.l.b16 %v142
    %v564 = vunpack.c.h.b16 %v142
    %v565 = vunpack.c.l.b16 %v143
    %v566 = vunpack.c.h.b16 %v143
    %v567 = vunpack.c.l.b16 %v144
    %v568 = vunpack.c.h.b16 %v144
    %v569 = vunpack.c.l.b16 %v145
    %v570 = vunpack.c.h.b16 %v145
    %v571 = vunpack.c.l.b16 %v146
    %v572 = vunpack.c.h.b16 %v146
    %v573 = vunpack.c.l.b16 %v147
    %v574 = vunpack.c.h.b16 %v147
    %v575 = vpack.c.b16 %v365, %v359
    %v576 = vpack.c.b16 %v366, %v360
    %v577 = vpack.c.b16 %v367, %v361
    %v578 = vpack.c.b16 %v368, %v362
    %v579 = vpack.c.b16 %v369, %v363
    %v580 = vpack.c.b16 %v370, %v364
    %v581 = vpack.c.b16 %v377, %v371
    %v582 = vpack.c.b16 %v378, %v372
    %v583 = vpack.c.b16 %v379, %v373
    %v584 = vpack.c.b16 %v380, %v374
    %v585 = vpack.c.b16 %v381, %v375
    %v586 = vpack.c.b16 %v382, %v376
    %v587 = vpack.c.b16 %v389, %v383
    %v588 = vpack.c.b16 %v390, %v384
    %v589 = vpack.c.b16 %v391, %v385
    %v590 = vpack.c.b16 %v392, %v386
    %v591 = vpack.c.b16 %v393, %v387
    %v592 = vpack.c.b16 %v394, %v388
    %v593 = vpack.c.b16 %v401, %v395
    %v594 = vpack.c.b16 %v402, %v396
    %v595 = vpack.c.b16 %v403, %v397
    %v596 = vpack.c.b16 %v404, %v398
    %v597 = vpack.c.b16 %v405, %v399
    %v598 = vpack.c.b16 %v406, %v400
    %v599 = vpack.c.b16 %v413, %v407
    %v600 = vpack.c.b16 %v414, %v408
    %v601 = vpack.c.b16 %v415, %v409
    %v602 = vpack.c.b16 %v416, %v410
    %v603 = vpack.c.b16 %v417, %v411
    %v604 = vpack.c.b16 %v418, %v412
    %v605 = vpack.c.b16 %v425, %v419
    %v606 = vpack.c.b16 %v426, %v420
    %v607 = vpack.c.b16 %v427, %v421
    %v608 = vpack.c.b16 %v428, %v422
    %v609 = vpack.c.b16 %v429, %v423
    %v610 = vpack.c.b16 %v430, %v424
    %v611 = vpack.c.b16 %v437, %v431
    %v612 = vpack.c.b16 %v438, %v432
    %v613 = vpack.c.b16 %v439, %v433
    %v614 = vpack.c.b16 %v440, %v434
    %v615 = vpack.c.b16 %v441, %v435
    %v616 = vpack.c.b16 %v442, %v436
    %v617 = vpack.c.b16 %v449, %v443
    %v618 = vpack.c.b16 %v450, %v444
    %v619 = vpack.c.b16 %v451, %v445
    %v620 = vpack.c.b16 %v452, %v446
    %v621 = vpack.c.b16 %v453, %v447
    %v622 = vpack.c.b16 %v454, %v448
    %v623 = vpack.c.b16 %v461, %v455
    %v624 = vpack.c.b16 %v462, %v456
    %v625 = vpack.c.b16 %v463, %v457
    %v626 = vpack.c.b16 %v464, %v458
    %v627 = vpack.c.b16 %v465, %v459
    %v628 = vpack.c.b16 %v466, %v460
    %v629 = vpack.c.b16 %v473, %v467
    %v630 = vpack.c.b16 %v474, %v468
    %v631 = vpack.c.b16 %v475, %v469
    %v632 = vpack.c.b16 %v476, %v470
    %v633 = vpack.c.b16 %v477, %v471
    %v634 = vpack.c.b16 %v478, %v472
    %v635 = vpack.c.b16 %v485, %v479
    %v636 = vpack.c.b16 %v486, %v480
    %v637 = vpack.c.b16 %v487, %v481
    %v638 = vpack.c.b16 %v488, %v482
    %v639 = vpack.c.b16 %v489, %v483
    %v640 = vpack.c.b16 %v490, %v484
    %v641 = vpack.c.b16 %v497, %v491
    %v642 = vpack.c.b16 %v498, %v492
    %v643 = vpack.c.b16 %v499, %v493
    %v644 = vpack.c.b16 %v500, %v494
    %v645 = vpack.c.b16 %v501, %v495
    %v646 = vpack.c.b16 %v502, %v496
    %v647 = vpack.c.b16 %v509, %v503
    %v648 = vpack.c.b16 %v510, %v504
    %v649 = vpack.c.b16 %v511, %v505
    %v650 = vpack.c.b16 %v512, %v506
    %v651 = vpack.c.b16 %v513, %v507
    %v652 = vpack.c.b16 %v514, %v508
    %v653 = vpack.c.b16 %v521, %v515
    %v654 = vpack.c.b16 %v522, %v516
    %v655 = vpack.c.b16 %v523, %v517
    %v656 = vpack.c.b16 %v524, %v518
    %v657 = vpack.c.b16 %v525, %v519
    %v658 = vpack.c.b16 %v526, %v520
    %v659 = vpack.c.b16 %v533, %v527
    %v660 = vpack.c.b16 %v534, %v528
    %v661 = vpack.c.b16 %v535, %v529
    %v662 = vpack.c.b16 %v536, %v530
    %v663 = vpack.c.b16 %v537, %v531
    %v664 = vpack.c.b16 %v538, %v532
    %v665 = vpack.c.b16 %v545, %v539
    %v666 = vpack.c.b16 %v546, %v540
    %v667 = vpack.c.b16 %v547, %v541
    %v668 = vpack.c.b16 %v548, %v542
    %v669 = vpack.c.b16 %v549, %v543
    %v670 = vpack.c.b16 %v550, %v544
    %v671 = vpack.c.b16 %v557, %v551
    %v672 = vpack.c.b16 %v558, %v552
    %v673 = vpack.c.b16 %v559, %v553
    %v674 = vpack.c.b16 %v560, %v554
    %v675 = vpack.c.b16 %v561, %v555
    %v676 = vpack.c.b16 %v562, %v556
    %v677 = vpack.c.b16 %v569, %v563
    %v678 = vpack.c.b16 %v570, %v564
    %v679 = vpack.c.b16 %v571, %v565
    %v680 = vpack.c.b16 %v572, %v566
    %v681 = vpack.c.b16 %v573, %v567
    %v682 = vpack.c.b16 %v574, %v568
    %v887 = vunpack.c.l.b16 %v148
    %v888 = vunpack.c.l.b16 %v149
    %v889 = vunpack.c.l.b16 %v150
    %v890 = vunpack.c.l.b16 %v151
    %v891 = vunpack.c.l.b16 %v152
    %v892 = vunpack.c.l.b16 %v153
    %v893 = vunpack.c.l.b16 %v154
    %v894 = vunpack.c.l.b16 %v155
    %v895 = vunpack.c.l.b16 %v156
    %v896 = vunpack.c.l.b16 %v157
    %v897 = vunpack.c.l.b16 %v158
    %v898 = vunpack.c.l.b16 %v159
    %v899 = vunpack.c.l.b16 %v160
    %v900 = vunpack.c.l.b16 %v161
    %v901 = vunpack.c.l.b16 %v162
    %v902 = vunpack.c.l.b16 %v163
    %v903 = vunpack.c.l.b16 %v164
    %v904 = vunpack.c.l.b16 %v165
    %v905 = vunpack.c.l.b16 %v166
    %v906 = vunpack.c.l.b16 %v167
    %v907 = vunpack.c.l.b16 %v168
    %v908 = vunpack.c.l.b16 %v169
    %v909 = vunpack.c.l.b16 %v170
    %v910 = vunpack.c.l.b16 %v171
    %v911 = vunpack.c.l.b16 %v172
    %v912 = vunpack.c.l.b16 %v173
    %v913 = vunpack.c.l.b16 %v174
    %v914 = vunpack.c.l.b16 %v175
    %v915 = vunpack.c.l.b16 %v176
    %v916 = vunpack.c.l.b16 %v177
    %v917 = vunpack.c.l.b16 %v178
    %v918 = vunpack.c.l.b16 %v179
    %v919 = vunpack.c.l.b16 %v180
    %v920 = vunpack.c.l.b16 %v181
    %v921 = vunpack.c.l.b16 %v182
    %v922 = vunpack.c.l.b16 %v183
    %v923 = vunpack.c.l.b16 %v184
    %v924 = vunpack.c.l.b16 %v185
    %v925 = vunpack.c.l.b16 %v186
    %v926 = vunpack.c.l.b16 %v187
    %v927 = vunpack.c.l.b16 %v188
    %v928 = vunpack.c.l.b16 %v189
    %v929 = vunpack.c.l.b16 %v190
    %v930 = vunpack.c.l.b16 %v191
    %v931 = vunpack.c.l.b16 %v192
    %v932 = vunpack.c.l.b16 %v193
    %v933 = vunpack.c.l.b16 %v194
    %v934 = vunpack.c.l.b16 %v195
    %v935 = vunpack.c.l.b16 %v196
    %v936 = vunpack.c.l.b16 %v197
    %v937 = vunpack.c.l.b16 %v198
    %v938 = vunpack.c.l.b16 %v199
    %v939 = vunpack.c.l.b16 %v200
    %v940 = vunpack.c.l.b16 %v201
    %v941 = vunpack.c.l.b16 %v202
    %v942 = vunpack.c.l.b16 %v203
    %v943 = vunpack.c.l.b16 %v204
    %v944 = vunpack.c.l.b16 %v205
    %v945 = vunpack.c.l.b16 %v206
    %v946 = vunpack.c.l.b16 %v207
    %v947 = vunpack.c.l.b16 %v208
    %v948 = vunpack.c.l.b16 %v209
    %v949 = vunpack.c.l.b16 %v210
    %v950 = vunpack.c.l.b16 %v211
    %v951 = vunpack.c.l.b16 %v212
    %v952 = vunpack.c.l.b16 %v213
    %v953 = vunpack.c.l.b16 %v214
    %v954 = vunpack.c.l.b16 %v215
    %v955 = vunpack.c.l.b16 %v216
    %v956 = vunpack.c.l.b16 %v217
    %v957 = vunpack.c.l.b16 %v218
    %v958 = vunpack.c.l.b16 %v219
    %v959 = vunpack.c.l.b16 %v220
    %v960 = vunpack.c.l.b16 %v221
    %v961 = vunpack.c.l.b16 %v222
    %v962 = vunpack.c.l.b16 %v223
    %v963 = vunpack.c.l.b16 %v224
    %v964 = vunpack.c.l.b16 %v225
    %v965 = vunpack.c.l.b16 %v226
    %v966 = vunpack.c.l.b16 %v227
    %v967 = vunpack.c.l.b16 %v228
    %v968 = vunpack.c.l.b16 %v229
    %v969 = vunpack.c.l.b16 %v230
    %v970 = vunpack.c.l.b16 %v231
    %v971 = vunpack.c.l.b16 %v232
    %v972 = vunpack.c.l.b16 %v233
    %v973 = vunpack.c.l.b16 %v234
    %v974 = vunpack.c.l.b16 %v235
    %v975 = vunpack.c.l.b16 %v236
    %v976 = vunpack.c.l.b16 %v237
    %v977 = vunpack.c.l.b16 %v238
    %v978 = vunpack.c.l.b16 %v239
    %v979 = vunpack.c.l.b16 %v240
    %v980 = vunpack.c.l.b16 %v241
    %v981 = vunpack.c.l.b16 %v242
    %v982 = vunpack.c.l.b16 %v243
    %v983 = vpack.c.b16 %v888, %v887
    %v984 = vpack.c.b16 %v890, %v889
    %v985 = vpack.c.b16 %v892, %v891
    %v986 = vpack.c.b16 %v894, %v893
    %v987 = vpack.c.b16 %v896, %v895
    %v988 = vpack.c.b16 %v898, %v897
    %v989 = vpack.c.b16 %v900, %v899
    %v990 = vpack.c.b16 %v902, %v901
    %v991 = vpack.c.b16 %v904, %v903
    %v992 = vpack.c.b16 %v906, %v905
    %v993 = vpack.c.b16 %v908, %v907
    %v994 = vpack.c.b16 %v910, %v909
    %v995 = vpack.c.b16 %v912, %v911
    %v996 = vpack.c.b16 %v914, %v913
    %v997 = vpack.c.b16 %v916, %v915
    %v998 = vpack.c.b16 %v918, %v917
    %v999 = vpack.c.b16 %v920, %v919
    %v1000 = vpack.c.b16 %v922, %v921
    %v1001 = vpack.c.b16 %v924, %v923
    %v1002 = vpack.c.b16 %v926, %v925
    %v1003 = vpack.c.b16 %v928, %v927
    %v1004 = vpack.c.b16 %v930, %v929
    %v1005 = vpack.c.b16 %v932, %v931
    %v1006 = vpack.c.b16 %v934, %v933
    %v1007 = vpack.c.b16 %v936, %v935
    %v1008 = vpack.c.b16 %v938, %v937
    %v1009 = vpack.c.b16 %v940, %v939
    %v1010 = vpack.c.b16 %v942, %v941
    %v1011 = vpack.c.b16 %v944, %v943
    %v1012 = vpack.c.b16 %v946, %v945
    %v1013 = vpack.c.b16 %v948, %v947
    %v1014 = vpack.c.b16 %v950, %v949
    %v1015 = vpack.c.b16 %v952, %v951
    %v1016 = vpack.c.b16 %v954, %v953
    %v1017 = vpack.c.b16 %v956, %v955
    %v1018 = vpack.c.b16 %v958, %v957
    %v1019 = vpack.c.b16 %v960, %v959
    %v1020 = vpack.c.b16 %v962, %v961
    %v1021 = vpack.c.b16 %v964, %v963
    %v1022 = vpack.c.b16 %v966, %v965
    %v1023 = vpack.c.b16 %v968, %v967
    %v1024 = vpack.c.b16 %v970, %v969
    %v1025 = vpack.c.b16 %v972, %v971
    %v1026 = vpack.c.b16 %v974, %v973
    %v1027 = vpack.c.b16 %v976, %v975
    %v1028 = vpack.c.b16 %v978, %v977
    %v1029 = vpack.c.b16 %v980, %v979
    %v1030 = vpack.c.b16 %v982, %v981
    %1079 = vmatprep.subr.bf16.mxu0 0
    %1080 = vmatpush1.bf16.msra.mxu0 %v990
    %1081 = vmatprep.subr.bf16.mxu0 0
    %1082 = vmatpush1.bf16.msra.mxu0 %v989
    %1083 = vmatprep.subr.bf16.mxu0 0
    %1084 = vmatpush1.bf16.msra.mxu0 %v988
    %1085 = vmatprep.subr.bf16.mxu0 0
    %1086 = vmatpush1.bf16.msra.mxu0 %v987
    %1087 = vmatprep.subr.bf16.mxu0 0
    %1088 = vmatpush1.bf16.msra.mxu0 %v986
    %1089 = vmatprep.subr.bf16.mxu0 0
    %1090 = vmatpush1.bf16.msra.mxu0 %v985
    %1091 = vmatprep.subr.bf16.mxu0 0
    %1092 = vmatpush1.bf16.msra.mxu0 %v984
    %1093 = vmatprep.subr.bf16.mxu0 0
    %1094 = vmatpush1.bf16.msra.mxu0 %v983
    %1095 = vmatprep.subr.bf16.mxu0 0
    %1096 = vmatpush2.bf16.msra.mxu0 %v998
    %1097 = vmatprep.subr.bf16.mxu0 0
    %1098 = vmatpush2.bf16.msra.mxu0 %v997
    %1099 = vmatprep.subr.bf16.mxu0 0
    %1100 = vmatpush2.bf16.msra.mxu0 %v996
    %1101 = vmatprep.subr.bf16.mxu0 0
    %1102 = vmatpush2.bf16.msra.mxu0 %v995
    %1103 = vmatprep.subr.bf16.mxu0 0
    %1104 = vmatpush2.bf16.msra.mxu0 %v994
    %1105 = vmatprep.subr.bf16.mxu0 0
    %1106 = vmatpush2.bf16.msra.mxu0 %v993
    %1107 = vmatprep.subr.bf16.mxu0 0
    %1108 = vmatpush2.bf16.msra.mxu0 %v992
    %1109 = vmatprep.subr.bf16.mxu0 0
    %1110 = vmatpush2.bf16.msra.mxu0 %v991
    %1111 = vmatprep.mubr.bf16.mxu0 %v576
    %1112 = vmatmul.mubr.bf16.gmra.mxu0 %v575
    %v1113 = vpop.f32.mrf.mxu0
    %v1114 = vadd.f32 %v249, %v1113
    %v1115 = vpop.f32.mrf.mxu0
    %v1116 = vpop.f32.mrf.mxu0
    %v1117 = vadd.f32 %v249, %v1116
    %v1118 = vpop.f32.mrf.mxu0
    %1119 = vmatprep.mubr.bf16.mxu0 %v582
    %1120 = vmatmul.mubr.bf16.gmra.mxu0 %v581
    %v1121 = vpop.f32.mrf.mxu0
    %v1122 = vadd.f32 %v249, %v1121
    %v1123 = vpop.f32.mrf.mxu0
    %v1124 = vpop.f32.mrf.mxu0
    %v1125 = vadd.f32 %v249, %v1124
    %v1126 = vpop.f32.mrf.mxu0
    %1127 = vmatprep.mubr.bf16.mxu0 %v588
    %1128 = vmatmul.mubr.bf16.gmra.mxu0 %v587
    %v1129 = vpop.f32.mrf.mxu0
    %v1130 = vadd.f32 %v249, %v1129
    %v1131 = vpop.f32.mrf.mxu0
    %v1132 = vpop.f32.mrf.mxu0
    %v1133 = vadd.f32 %v249, %v1132
    %v1134 = vpop.f32.mrf.mxu0
    %1135 = vmatprep.mubr.bf16.mxu0 %v594
    %1136 = vmatmul.mubr.bf16.gmra.mxu0 %v593
    %v1137 = vpop.f32.mrf.mxu0
    %v1138 = vadd.f32 %v249, %v1137
    %v1139 = vpop.f32.mrf.mxu0
    %v1140 = vpop.f32.mrf.mxu0
    %v1141 = vadd.f32 %v249, %v1140
    %v1142 = vpop.f32.mrf.mxu0
    %1143 = vmatprep.mubr.bf16.mxu0 %v600
    %1144 = vmatmul.mubr.bf16.gmra.mxu0 %v599
    %v1145 = vpop.f32.mrf.mxu0
    %v1146 = vadd.f32 %v249, %v1145
    %v1147 = vpop.f32.mrf.mxu0
    %v1148 = vpop.f32.mrf.mxu0
    %v1149 = vadd.f32 %v249, %v1148
    %v1150 = vpop.f32.mrf.mxu0
    %1151 = vmatprep.mubr.bf16.mxu0 %v606
    %1152 = vmatmul.mubr.bf16.gmra.mxu0 %v605
    %v1153 = vpop.f32.mrf.mxu0
    %v1154 = vadd.f32 %v249, %v1153
    %v1155 = vpop.f32.mrf.mxu0
    %v1156 = vpop.f32.mrf.mxu0
    %v1157 = vadd.f32 %v249, %v1156
    %v1158 = vpop.f32.mrf.mxu0
    %1159 = vmatprep.mubr.bf16.mxu0 %v612
    %1160 = vmatmul.mubr.bf16.gmra.mxu0 %v611
    %v1161 = vpop.f32.mrf.mxu0
    %v1162 = vadd.f32 %v249, %v1161
    %v1163 = vpop.f32.mrf.mxu0
    %v1164 = vpop.f32.mrf.mxu0
    %v1165 = vadd.f32 %v249, %v1164
    %v1166 = vpop.f32.mrf.mxu0
    %1167 = vmatprep.mubr.bf16.mxu0 %v618
    %1168 = vmatmul.mubr.bf16.gmra.mxu0 %v617
    %v1169 = vpop.f32.mrf.mxu0
    %v1170 = vadd.f32 %v249, %v1169
    %v1171 = vpop.f32.mrf.mxu0
    %v1172 = vpop.f32.mrf.mxu0
    %v1173 = vadd.f32 %v249, %v1172
    %v1174 = vpop.f32.mrf.mxu0
    %1175 = vmatprep.mubr.bf16.mxu0 %v624
    %1176 = vmatmul.mubr.bf16.gmra.mxu0 %v623
    %v1177 = vpop.f32.mrf.mxu0
    %v1178 = vadd.f32 %v249, %v1177
    %v1179 = vpop.f32.mrf.mxu0
    %v1180 = vpop.f32.mrf.mxu0
    %v1181 = vadd.f32 %v249, %v1180
    %v1182 = vpop.f32.mrf.mxu0
    %1183 = vmatprep.mubr.bf16.mxu0 %v630
    %1184 = vmatmul.mubr.bf16.gmra.mxu0 %v629
    %v1185 = vpop.f32.mrf.mxu0
    %v1186 = vadd.f32 %v249, %v1185
    %v1187 = vpop.f32.mrf.mxu0
    %v1188 = vpop.f32.mrf.mxu0
    %v1189 = vadd.f32 %v249, %v1188
    %v1190 = vpop.f32.mrf.mxu0
    %1191 = vmatprep.mubr.bf16.mxu0 %v636
    %1192 = vmatmul.mubr.bf16.gmra.mxu0 %v635
    %v1193 = vpop.f32.mrf.mxu0
    %v1194 = vadd.f32 %v249, %v1193
    %v1195 = vpop.f32.mrf.mxu0
    %v1196 = vpop.f32.mrf.mxu0
    %v1197 = vadd.f32 %v249, %v1196
    %v1198 = vpop.f32.mrf.mxu0
    %1199 = vmatprep.mubr.bf16.mxu0 %v642
    %1200 = vmatmul.mubr.bf16.gmra.mxu0 %v641
    %v1201 = vpop.f32.mrf.mxu0
    %v1202 = vadd.f32 %v249, %v1201
    %v1203 = vpop.f32.mrf.mxu0
    %v1204 = vpop.f32.mrf.mxu0
    %v1205 = vadd.f32 %v249, %v1204
    %v1206 = vpop.f32.mrf.mxu0
    %1207 = vmatprep.mubr.bf16.mxu0 %v648
    %1208 = vmatmul.mubr.bf16.gmra.mxu0 %v647
    %v1209 = vpop.f32.mrf.mxu0
    %v1210 = vadd.f32 %v249, %v1209
    %v1211 = vpop.f32.mrf.mxu0
    %v1212 = vpop.f32.mrf.mxu0
    %v1213 = vadd.f32 %v249, %v1212
    %v1214 = vpop.f32.mrf.mxu0
    %1215 = vmatprep.mubr.bf16.mxu0 %v654
    %1216 = vmatmul.mubr.bf16.gmra.mxu0 %v653
    %v1217 = vpop.f32.mrf.mxu0
    %v1218 = vadd.f32 %v249, %v1217
    %v1219 = vpop.f32.mrf.mxu0
    %v1220 = vpop.f32.mrf.mxu0
    %v1221 = vadd.f32 %v249, %v1220
    %v1222 = vpop.f32.mrf.mxu0
    %1223 = vmatprep.mubr.bf16.mxu0 %v660
    %1224 = vmatmul.mubr.bf16.gmra.mxu0 %v659
    %v1225 = vpop.f32.mrf.mxu0
    %v1226 = vadd.f32 %v249, %v1225
    %v1227 = vpop.f32.mrf.mxu0
    %v1228 = vpop.f32.mrf.mxu0
    %v1229 = vadd.f32 %v249, %v1228
    %v1230 = vpop.f32.mrf.mxu0
    %1231 = vmatprep.mubr.bf16.mxu0 %v666
    %1232 = vmatmul.mubr.bf16.gmra.mxu0 %v665
    %v1233 = vpop.f32.mrf.mxu0
    %v1234 = vadd.f32 %v249, %v1233
    %v1235 = vpop.f32.mrf.mxu0
    %v1236 = vpop.f32.mrf.mxu0
    %v1237 = vadd.f32 %v249, %v1236
    %v1238 = vpop.f32.mrf.mxu0
    %1239 = vmatprep.mubr.bf16.mxu0 %v672
    %1240 = vmatmul.mubr.bf16.gmra.mxu0 %v671
    %v1241 = vpop.f32.mrf.mxu0
    %v1242 = vadd.f32 %v249, %v1241
    %v1243 = vpop.f32.mrf.mxu0
    %v1244 = vpop.f32.mrf.mxu0
    %v1245 = vadd.f32 %v249, %v1244
    %v1246 = vpop.f32.mrf.mxu0
    %1247 = vmatprep.mubr.bf16.mxu0 %v678
    %1248 = vmatmul.mubr.bf16.gmra.mxu0 %v677
    %v1249 = vpop.f32.mrf.mxu0
    %v1250 = vadd.f32 %v249, %v1249
    %v1251 = vpop.f32.mrf.mxu0
    %v1252 = vpop.f32.mrf.mxu0
    %v1253 = vadd.f32 %v249, %v1252
    %v1254 = vpop.f32.mrf.mxu0
    %1255 = vdwg.mxu0
    %1256 = vmatprep.subr.bf16.mxu0 0
    %1257 = vmatpush1.bf16.msra.mxu0 %v1006
    %1258 = vmatprep.subr.bf16.mxu0 0
    %1259 = vmatpush1.bf16.msra.mxu0 %v1005
    %1260 = vmatprep.subr.bf16.mxu0 0
    %1261 = vmatpush1.bf16.msra.mxu0 %v1004
    %1262 = vmatprep.subr.bf16.mxu0 0
    %1263 = vmatpush1.bf16.msra.mxu0 %v1003
    %1264 = vmatprep.subr.bf16.mxu0 0
    %1265 = vmatpush1.bf16.msra.mxu0 %v1002
    %1266 = vmatprep.subr.bf16.mxu0 0
    %1267 = vmatpush1.bf16.msra.mxu0 %v1001
    %1268 = vmatprep.subr.bf16.mxu0 0
    %1269 = vmatpush1.bf16.msra.mxu0 %v1000
    %1270 = vmatprep.subr.bf16.mxu0 0
    %1271 = vmatpush1.bf16.msra.mxu0 %v999
    %1272 = vmatprep.subr.bf16.mxu0 0
    %1273 = vmatpush2.bf16.msra.mxu0 %v1014
    %1274 = vmatprep.subr.bf16.mxu0 0
    %1275 = vmatpush2.bf16.msra.mxu0 %v1013
    %1276 = vmatprep.subr.bf16.mxu0 0
    %1277 = vmatpush2.bf16.msra.mxu0 %v1012
    %1278 = vmatprep.subr.bf16.mxu0 0
    %1279 = vmatpush2.bf16.msra.mxu0 %v1011
    %1280 = vmatprep.subr.bf16.mxu0 0
    %1281 = vmatpush2.bf16.msra.mxu0 %v1010
    %1282 = vmatprep.subr.bf16.mxu0 0
    %1283 = vmatpush2.bf16.msra.mxu0 %v1009
    %1284 = vmatprep.subr.bf16.mxu0 0
    %1285 = vmatpush2.bf16.msra.mxu0 %v1008
    %1286 = vmatprep.subr.bf16.mxu0 0
    %1287 = vmatpush2.bf16.msra.mxu0 %v1007
    %1288 = vmatprep.mubr.bf16.mxu0 %v578
    %1289 = vmatmul.mubr.bf16.gmra.mxu0 %v577
    %v1290 = vpop.f32.mrf.mxu0
    %v1291 = vadd.f32 %v1114, %v1290
    %v1292 = vpop.f32.mrf.mxu0
    %v1293 = vpop.f32.mrf.mxu0
    %v1294 = vadd.f32 %v1117, %v1293
    %v1295 = vpop.f32.mrf.mxu0
    %1296 = vmatprep.mubr.bf16.mxu0 %v584
    %1297 = vmatmul.mubr.bf16.gmra.mxu0 %v583
    %v1298 = vpop.f32.mrf.mxu0
    %v1299 = vadd.f32 %v1122, %v1298
    %v1300 = vpop.f32.mrf.mxu0
    %v1301 = vpop.f32.mrf.mxu0
    %v1302 = vadd.f32 %v1125, %v1301
    %v1303 = vpop.f32.mrf.mxu0
    %1304 = vmatprep.mubr.bf16.mxu0 %v590
    %1305 = vmatmul.mubr.bf16.gmra.mxu0 %v589
    %v1306 = vpop.f32.mrf.mxu0
    %v1307 = vadd.f32 %v1130, %v1306
    %v1308 = vpop.f32.mrf.mxu0
    %v1309 = vpop.f32.mrf.mxu0
    %v1310 = vadd.f32 %v1133, %v1309
    %v1311 = vpop.f32.mrf.mxu0
    %1312 = vmatprep.mubr.bf16.mxu0 %v596
    %1313 = vmatmul.mubr.bf16.gmra.mxu0 %v595
    %v1314 = vpop.f32.mrf.mxu0
    %v1315 = vadd.f32 %v1138, %v1314
    %v1316 = vpop.f32.mrf.mxu0
    %v1317 = vpop.f32.mrf.mxu0
    %v1318 = vadd.f32 %v1141, %v1317
    %v1319 = vpop.f32.mrf.mxu0
    %1320 = vmatprep.mubr.bf16.mxu0 %v602
    %1321 = vmatmul.mubr.bf16.gmra.mxu0 %v601
    %v1322 = vpop.f32.mrf.mxu0
    %v1323 = vadd.f32 %v1146, %v1322
    %v1324 = vpop.f32.mrf.mxu0
    %v1325 = vpop.f32.mrf.mxu0
    %v1326 = vadd.f32 %v1149, %v1325
    %v1327 = vpop.f32.mrf.mxu0
    %1328 = vmatprep.mubr.bf16.mxu0 %v608
    %1329 = vmatmul.mubr.bf16.gmra.mxu0 %v607
    %v1330 = vpop.f32.mrf.mxu0
    %v1331 = vadd.f32 %v1154, %v1330
    %v1332 = vpop.f32.mrf.mxu0
    %v1333 = vpop.f32.mrf.mxu0
    %v1334 = vadd.f32 %v1157, %v1333
    %v1335 = vpop.f32.mrf.mxu0
    %1336 = vmatprep.mubr.bf16.mxu0 %v614
    %1337 = vmatmul.mubr.bf16.gmra.mxu0 %v613
    %v1338 = vpop.f32.mrf.mxu0
    %v1339 = vadd.f32 %v1162, %v1338
    %v1340 = vpop.f32.mrf.mxu0
    %v1341 = vpop.f32.mrf.mxu0
    %v1342 = vadd.f32 %v1165, %v1341
    %v1343 = vpop.f32.mrf.mxu0
    %1344 = vmatprep.mubr.bf16.mxu0 %v620
    %1345 = vmatmul.mubr.bf16.gmra.mxu0 %v619
    %v1346 = vpop.f32.mrf.mxu0
    %v1347 = vadd.f32 %v1170, %v1346
    %v1348 = vpop.f32.mrf.mxu0
    %v1349 = vpop.f32.mrf.mxu0
    %v1350 = vadd.f32 %v1173, %v1349
    %v1351 = vpop.f32.mrf.mxu0
    %1352 = vmatprep.mubr.bf16.mxu0 %v626
    %1353 = vmatmul.mubr.bf16.gmra.mxu0 %v625
    %v1354 = vpop.f32.mrf.mxu0
    %v1355 = vadd.f32 %v1178, %v1354
    %v1356 = vpop.f32.mrf.mxu0
    %v1357 = vpop.f32.mrf.mxu0
    %v1358 = vadd.f32 %v1181, %v1357
    %v1359 = vpop.f32.mrf.mxu0
    %1360 = vmatprep.mubr.bf16.mxu0 %v632
    %1361 = vmatmul.mubr.bf16.gmra.mxu0 %v631
    %v1362 = vpop.f32.mrf.mxu0
    %v1363 = vadd.f32 %v1186, %v1362
    %v1364 = vpop.f32.mrf.mxu0
    %v1365 = vpop.f32.mrf.mxu0
    %v1366 = vadd.f32 %v1189, %v1365
    %v1367 = vpop.f32.mrf.mxu0
    %1368 = vmatprep.mubr.bf16.mxu0 %v638
    %1369 = vmatmul.mubr.bf16.gmra.mxu0 %v637
    %v1370 = vpop.f32.mrf.mxu0
    %v1371 = vadd.f32 %v1194, %v1370
    %v1372 = vpop.f32.mrf.mxu0
    %v1373 = vpop.f32.mrf.mxu0
    %v1374 = vadd.f32 %v1197, %v1373
    %v1375 = vpop.f32.mrf.mxu0
    %1376 = vmatprep.mubr.bf16.mxu0 %v644
    %1377 = vmatmul.mubr.bf16.gmra.mxu0 %v643
    %v1378 = vpop.f32.mrf.mxu0
    %v1379 = vadd.f32 %v1202, %v1378
    %v1380 = vpop.f32.mrf.mxu0
    %v1381 = vpop.f32.mrf.mxu0
    %v1382 = vadd.f32 %v1205, %v1381
    %v1383 = vpop.f32.mrf.mxu0
    %1384 = vmatprep.mubr.bf16.mxu0 %v650
    %1385 = vmatmul.mubr.bf16.gmra.mxu0 %v649
    %v1386 = vpop.f32.mrf.mxu0
    %v1387 = vadd.f32 %v1210, %v1386
    %v1388 = vpop.f32.mrf.mxu0
    %v1389 = vpop.f32.mrf.mxu0
    %v1390 = vadd.f32 %v1213, %v1389
    %v1391 = vpop.f32.mrf.mxu0
    %1392 = vmatprep.mubr.bf16.mxu0 %v656
    %1393 = vmatmul.mubr.bf16.gmra.mxu0 %v655
    %v1394 = vpop.f32.mrf.mxu0
    %v1395 = vadd.f32 %v1218, %v1394
    %v1396 = vpop.f32.mrf.mxu0
    %v1397 = vpop.f32.mrf.mxu0
    %v1398 = vadd.f32 %v1221, %v1397
    %v1399 = vpop.f32.mrf.mxu0
    %1400 = vmatprep.mubr.bf16.mxu0 %v662
    %1401 = vmatmul.mubr.bf16.gmra.mxu0 %v661
    %v1402 = vpop.f32.mrf.mxu0
    %v1403 = vadd.f32 %v1226, %v1402
    %v1404 = vpop.f32.mrf.mxu0
    %v1405 = vpop.f32.mrf.mxu0
    %v1406 = vadd.f32 %v1229, %v1405
    %v1407 = vpop.f32.mrf.mxu0
    %1408 = vmatprep.mubr.bf16.mxu0 %v668
    %1409 = vmatmul.mubr.bf16.gmra.mxu0 %v667
    %v1410 = vpop.f32.mrf.mxu0
    %v1411 = vadd.f32 %v1234, %v1410
    %v1412 = vpop.f32.mrf.mxu0
    %v1413 = vpop.f32.mrf.mxu0
    %v1414 = vadd.f32 %v1237, %v1413
    %v1415 = vpop.f32.mrf.mxu0
    %1416 = vmatprep.mubr.bf16.mxu0 %v674
    %1417 = vmatmul.mubr.bf16.gmra.mxu0 %v673
    %v1418 = vpop.f32.mrf.mxu0
    %v1419 = vadd.f32 %v1242, %v1418
    %v1420 = vpop.f32.mrf.mxu0
    %v1421 = vpop.f32.mrf.mxu0
    %v1422 = vadd.f32 %v1245, %v1421
    %v1423 = vpop.f32.mrf.mxu0
    %1424 = vmatprep.mubr.bf16.mxu0 %v680
    %1425 = vmatmul.mubr.bf16.gmra.mxu0 %v679
    %v1426 = vpop.f32.mrf.mxu0
    %v1427 = vadd.f32 %v1250, %v1426
    %v1428 = vpop.f32.mrf.mxu0
    %v1429 = vpop.f32.mrf.mxu0
    %v1430 = vadd.f32 %v1253, %v1429
    %v1431 = vpop.f32.mrf.mxu0
    %1432 = vdwg.mxu0
    %1433 = vmatprep.subr.bf16.mxu0 0
    %1434 = vmatpush1.bf16.msra.mxu0 %v1022
    %1435 = vmatprep.subr.bf16.mxu0 0
    %1436 = vmatpush1.bf16.msra.mxu0 %v1021
    %1437 = vmatprep.subr.bf16.mxu0 0
    %1438 = vmatpush1.bf16.msra.mxu0 %v1020
    %1439 = vmatprep.subr.bf16.mxu0 0
    %1440 = vmatpush1.bf16.msra.mxu0 %v1019
    %1441 = vmatprep.subr.bf16.mxu0 0
    %1442 = vmatpush1.bf16.msra.mxu0 %v1018
    %1443 = vmatprep.subr.bf16.mxu0 0
    %1444 = vmatpush1.bf16.msra.mxu0 %v1017
    %1445 = vmatprep.subr.bf16.mxu0 0
    %1446 = vmatpush1.bf16.msra.mxu0 %v1016
    %1447 = vmatprep.subr.bf16.mxu0 0
    %1448 = vmatpush1.bf16.msra.mxu0 %v1015
    %1449 = vmatprep.subr.bf16.mxu0 0
    %1450 = vmatpush2.bf16.msra.mxu0 %v1030
    %1451 = vmatprep.subr.bf16.mxu0 0
    %1452 = vmatpush2.bf16.msra.mxu0 %v1029
    %1453 = vmatprep.subr.bf16.mxu0 0
    %1454 = vmatpush2.bf16.msra.mxu0 %v1028
    %1455 = vmatprep.subr.bf16.mxu0 0
    %1456 = vmatpush2.bf16.msra.mxu0 %v1027
    %1457 = vmatprep.subr.bf16.mxu0 0
    %1458 = vmatpush2.bf16.msra.mxu0 %v1026
    %1459 = vmatprep.subr.bf16.mxu0 0
    %1460 = vmatpush2.bf16.msra.mxu0 %v1025
    %1461 = vmatprep.subr.bf16.mxu0 0
    %1462 = vmatpush2.bf16.msra.mxu0 %v1024
    %1463 = vmatprep.subr.bf16.mxu0 0
    %1464 = vmatpush2.bf16.msra.mxu0 %v1023
    %1465 = vmatprep.mubr.bf16.mxu0 %v580
    %1466 = vmatmul.mubr.bf16.gmra.mxu0 %v579
    %v1467 = vpop.f32.mrf.mxu0
    %v1468 = vadd.f32 %v1291, %v1467
    %v1469 = vpop.f32.mrf.mxu0
    %v1470 = vpop.f32.mrf.mxu0
    %v1471 = vadd.f32 %v1294, %v1470
    %v1472 = vpop.f32.mrf.mxu0
    %1473 = vmatprep.mubr.bf16.mxu0 %v586
    %1474 = vmatmul.mubr.bf16.gmra.mxu0 %v585
    %v1475 = vpop.f32.mrf.mxu0
    %v1476 = vadd.f32 %v1299, %v1475
    %v1477 = vpop.f32.mrf.mxu0
    %v1478 = vpop.f32.mrf.mxu0
    %v1479 = vadd.f32 %v1302, %v1478
    %v1480 = vpop.f32.mrf.mxu0
    %1481 = vmatprep.mubr.bf16.mxu0 %v592
    %1482 = vmatmul.mubr.bf16.gmra.mxu0 %v591
    %v1483 = vpop.f32.mrf.mxu0
    %v1484 = vadd.f32 %v1307, %v1483
    %v1485 = vpop.f32.mrf.mxu0
    %v1486 = vpop.f32.mrf.mxu0
    %v1487 = vadd.f32 %v1310, %v1486
    %v1488 = vpop.f32.mrf.mxu0
    %1489 = vmatprep.mubr.bf16.mxu0 %v598
    %1490 = vmatmul.mubr.bf16.gmra.mxu0 %v597
    %v1491 = vpop.f32.mrf.mxu0
    %v1492 = vadd.f32 %v1315, %v1491
    %v1493 = vpop.f32.mrf.mxu0
    %v1494 = vpop.f32.mrf.mxu0
    %v1495 = vadd.f32 %v1318, %v1494
    %v1496 = vpop.f32.mrf.mxu0
    %1497 = vmatprep.mubr.bf16.mxu0 %v604
    %1498 = vmatmul.mubr.bf16.gmra.mxu0 %v603
    %v1499 = vpop.f32.mrf.mxu0
    %v1500 = vadd.f32 %v1323, %v1499
    %v1501 = vpop.f32.mrf.mxu0
    %v1502 = vpop.f32.mrf.mxu0
    %v1503 = vadd.f32 %v1326, %v1502
    %v1504 = vpop.f32.mrf.mxu0
    %1505 = vmatprep.mubr.bf16.mxu0 %v610
    %1506 = vmatmul.mubr.bf16.gmra.mxu0 %v609
    %v1507 = vpop.f32.mrf.mxu0
    %v1508 = vadd.f32 %v1331, %v1507
    %v1509 = vpop.f32.mrf.mxu0
    %v1510 = vpop.f32.mrf.mxu0
    %v1511 = vadd.f32 %v1334, %v1510
    %v1512 = vpop.f32.mrf.mxu0
    %1513 = vmatprep.mubr.bf16.mxu0 %v616
    %1514 = vmatmul.mubr.bf16.gmra.mxu0 %v615
    %v1515 = vpop.f32.mrf.mxu0
    %v1516 = vadd.f32 %v1339, %v1515
    %v1517 = vpop.f32.mrf.mxu0
    %v1518 = vpop.f32.mrf.mxu0
    %v1519 = vadd.f32 %v1342, %v1518
    %v1520 = vpop.f32.mrf.mxu0
    %1521 = vmatprep.mubr.bf16.mxu0 %v622
    %1522 = vmatmul.mubr.bf16.gmra.mxu0 %v621
    %v1523 = vpop.f32.mrf.mxu0
    %v1524 = vadd.f32 %v1347, %v1523
    %v1525 = vpop.f32.mrf.mxu0
    %v1526 = vpop.f32.mrf.mxu0
    %v1527 = vadd.f32 %v1350, %v1526
    %v1528 = vpop.f32.mrf.mxu0
    %1529 = vmatprep.mubr.bf16.mxu0 %v628
    %1530 = vmatmul.mubr.bf16.gmra.mxu0 %v627
    %v1531 = vpop.f32.mrf.mxu0
    %v1532 = vadd.f32 %v1355, %v1531
    %v1533 = vpop.f32.mrf.mxu0
    %v1534 = vpop.f32.mrf.mxu0
    %v1535 = vadd.f32 %v1358, %v1534
    %v1536 = vpop.f32.mrf.mxu0
    %1537 = vmatprep.mubr.bf16.mxu0 %v634
    %1538 = vmatmul.mubr.bf16.gmra.mxu0 %v633
    %v1539 = vpop.f32.mrf.mxu0
    %v1540 = vadd.f32 %v1363, %v1539
    %v1541 = vpop.f32.mrf.mxu0
    %v1542 = vpop.f32.mrf.mxu0
    %v1543 = vadd.f32 %v1366, %v1542
    %v1544 = vpop.f32.mrf.mxu0
    %1545 = vmatprep.mubr.bf16.mxu0 %v640
    %1546 = vmatmul.mubr.bf16.gmra.mxu0 %v639
    %v1547 = vpop.f32.mrf.mxu0
    %v1548 = vadd.f32 %v1371, %v1547
    %v1549 = vpop.f32.mrf.mxu0
    %v1550 = vpop.f32.mrf.mxu0
    %v1551 = vadd.f32 %v1374, %v1550
    %v1552 = vpop.f32.mrf.mxu0
    %1553 = vmatprep.mubr.bf16.mxu0 %v646
    %1554 = vmatmul.mubr.bf16.gmra.mxu0 %v645
    %v1555 = vpop.f32.mrf.mxu0
    %v1556 = vadd.f32 %v1379, %v1555
    %v1557 = vpop.f32.mrf.mxu0
    %v1558 = vpop.f32.mrf.mxu0
    %v1559 = vadd.f32 %v1382, %v1558
    %v1560 = vpop.f32.mrf.mxu0
    %1561 = vmatprep.mubr.bf16.mxu0 %v652
    %1562 = vmatmul.mubr.bf16.gmra.mxu0 %v651
    %v1563 = vpop.f32.mrf.mxu0
    %v1564 = vadd.f32 %v1387, %v1563
    %v1565 = vpop.f32.mrf.mxu0
    %v1566 = vpop.f32.mrf.mxu0
    %v1567 = vadd.f32 %v1390, %v1566
    %v1568 = vpop.f32.mrf.mxu0
    %1569 = vmatprep.mubr.bf16.mxu0 %v658
    %1570 = vmatmul.mubr.bf16.gmra.mxu0 %v657
    %v1571 = vpop.f32.mrf.mxu0
    %v1572 = vadd.f32 %v1395, %v1571
    %v1573 = vpop.f32.mrf.mxu0
    %v1574 = vpop.f32.mrf.mxu0
    %v1575 = vadd.f32 %v1398, %v1574
    %v1576 = vpop.f32.mrf.mxu0
    %1577 = vmatprep.mubr.bf16.mxu0 %v664
    %1578 = vmatmul.mubr.bf16.gmra.mxu0 %v663
    %v1579 = vpop.f32.mrf.mxu0
    %v1580 = vadd.f32 %v1403, %v1579
    %v1581 = vpop.f32.mrf.mxu0
    %v1582 = vpop.f32.mrf.mxu0
    %v1583 = vadd.f32 %v1406, %v1582
    %v1584 = vpop.f32.mrf.mxu0
    %1585 = vmatprep.mubr.bf16.mxu0 %v670
    %1586 = vmatmul.mubr.bf16.gmra.mxu0 %v669
    %v1587 = vpop.f32.mrf.mxu0
    %v1588 = vadd.f32 %v1411, %v1587
    %v1589 = vpop.f32.mrf.mxu0
    %v1590 = vpop.f32.mrf.mxu0
    %v1591 = vadd.f32 %v1414, %v1590
    %v1592 = vpop.f32.mrf.mxu0
    %1593 = vmatprep.mubr.bf16.mxu0 %v676
    %1594 = vmatmul.mubr.bf16.gmra.mxu0 %v675
    %v1595 = vpop.f32.mrf.mxu0
    %v1596 = vadd.f32 %v1419, %v1595
    %v1597 = vpop.f32.mrf.mxu0
    %v1598 = vpop.f32.mrf.mxu0
    %v1599 = vadd.f32 %v1422, %v1598
    %v1600 = vpop.f32.mrf.mxu0
    %1601 = vmatprep.mubr.bf16.mxu0 %v682
    %1602 = vmatmul.mubr.bf16.gmra.mxu0 %v681
    %v1603 = vpop.f32.mrf.mxu0
    %v1604 = vadd.f32 %v1427, %v1603
    %v1605 = vpop.f32.mrf.mxu0
    %v1606 = vpop.f32.mrf.mxu0
    %v1607 = vadd.f32 %v1430, %v1606
    %v1608 = vpop.f32.mrf.mxu0
    %1609 = vdwg.mxu0
    %v1610 = vmax.f32 %v1468, 0.0
    %v1611 = vmax.f32 %v1471, 0.0
    %v1612 = vmax.f32 %v1476, 0.0
    %v1613 = vmax.f32 %v1479, 0.0
    %v1614 = vmax.f32 %v1484, 0.0
    %v1615 = vmax.f32 %v1487, 0.0
    %v1616 = vmax.f32 %v1492, 0.0
    %v1617 = vmax.f32 %v1495, 0.0
    %v1618 = vmax.f32 %v1500, 0.0
    %v1619 = vmax.f32 %v1503, 0.0
    %v1620 = vmax.f32 %v1508, 0.0
    %v1621 = vmax.f32 %v1511, 0.0
    %v1622 = vmax.f32 %v1516, 0.0
    %v1623 = vmax.f32 %v1519, 0.0
    %v1624 = vmax.f32 %v1524, 0.0
    %v1625 = vmax.f32 %v1527, 0.0
    %v1626 = vmax.f32 %v1532, 0.0
    %v1627 = vmax.f32 %v1535, 0.0
    %v1628 = vmax.f32 %v1540, 0.0
    %v1629 = vmax.f32 %v1543, 0.0
    %v1630 = vmax.f32 %v1548, 0.0
    %v1631 = vmax.f32 %v1551, 0.0
    %v1632 = vmax.f32 %v1556, 0.0
    %v1633 = vmax.f32 %v1559, 0.0
    %v1634 = vmax.f32 %v1564, 0.0
    %v1635 = vmax.f32 %v1567, 0.0
    %v1636 = vmax.f32 %v1572, 0.0
    %v1637 = vmax.f32 %v1575, 0.0
    %v1638 = vmax.f32 %v1580, 0.0
    %v1639 = vmax.f32 %v1583, 0.0
    %v1640 = vmax.f32 %v1588, 0.0
    %v1641 = vmax.f32 %v1591, 0.0
    %v1642 = vmax.f32 %v1596, 0.0
    %v1643 = vmax.f32 %v1599, 0.0
    %v1644 = vmax.f32 %v1604, 0.0
    %v1645 = vmax.f32 %v1607, 0.0
    %v1646 = vmax.f32 %v1610, %v1628
    %v1647 = vmax.f32 %v1611, %v1629
    %v1648 = vmax.f32 %v1612, %v1630
    %v1649 = vmax.f32 %v1613, %v1631
    %v1650 = vmax.f32 %v1614, %v1632
    %v1651 = vmax.f32 %v1615, %v1633
    %v1652 = vmax.f32 %v1616, %v1634
    %v1653 = vmax.f32 %v1617, %v1635
    %v1654 = vmax.f32 %v1618, %v1636
    %v1655 = vmax.f32 %v1619, %v1637
    %v1656 = vmax.f32 %v1620, %v1638
    %v1657 = vmax.f32 %v1621, %v1639
    %v1658 = vmax.f32 %v1622, %v1640
    %v1659 = vmax.f32 %v1623, %v1641
    %v1660 = vmax.f32 %v1624, %v1642
    %v1661 = vmax.f32 %v1625, %v1643
    %v1662 = vmax.f32 %v1626, %v1644
    %v1663 = vmax.f32 %v1627, %v1645
    %v1664 = vmax.f32 %v1646, %v1655
    %v1665 = vmax.f32 %v1647, %v1656
    %v1666 = vmax.f32 %v1648, %v1657
    %v1667 = vmax.f32 %v1649, %v1658
    %v1668 = vmax.f32 %v1650, %v1659
    %v1669 = vmax.f32 %v1651, %v1660
    %v1670 = vmax.f32 %v1652, %v1661
    %v1671 = vmax.f32 %v1653, %v1662
    %v1672 = vmax.f32 %v1654, %v1663
    %1673 = vst [vmem:[#allocation2] sm:$0x33] 0
    %1674 = vst [vmem:[#allocation2 + $0x8] sm:$0x33] 0
    %1675 = vst [vmem:[#allocation2 + $0x10] sm:$0x3] 0
    %1676 = vst [vmem:[#allocation2 + $0x28] sm:$0x33] 0
    %1677 = vst [vmem:[#allocation2 + $0x30] sm:$0x33] 0
    %1678 = vst [vmem:[#allocation2 + $0x38] sm:$0x3] 0
    %1679 = vst [vmem:[#allocation2] sm:$0xc] 0
    %1680 = vst [vmem:[#allocation2 + $0x14] sm:$0xf] 0
    %1681 = vst [vmem:[#allocation2 + $0x10] sm:$0xc] 0
    %1682 = vst [vmem:[#allocation2 + $0x24] sm:$0xf] 0
    %vm1685 = vcmask 1043456
    %v1686 = vrot.slane %v1665, 4
    %v1687 = vrot.slane %v1666, 4
    %v1688 = vsel %vm1685, %v1686, %v1687
    %1689 = vrot.lane.b32.xlu0 %v1688, 64
    %v1690 = vpop.permute.xlu0 %1689
    %1691 = vrot.lane.b32.xlu0 %v1687, 64
    %v1692 = vpop.permute.xlu0 %1691
    %vm1695 = vcmask 523264
    %v1696 = vsel %vm1695, %v1664, %v1690
    %v1697 = vsel %vm1695, %v1665, %v1692
    %v1698 = vpack.c.bf16 %v1697, %v1696
    %v1700 = vunpack.c.l.b16 %v1698
    %v1701 = vunpack.c.h.b16 %v1698
    %v1702 = vpack.c.b16 %v1700, %v1700
    %v1703 = vpack.c.b16 %v1701, %v1701
    %vm1704 = vcmask 1041408
    %vm1705 = vcmask 1045508
    %vm1706 = vmor %vm1704, %vm1705
    %v1707 = vrot.slane %v1702, 6
    %v1708 = vrot.slane %v1707, 4
    %v1709 = vrot.slane %v1703, 6
    %v1710 = vsel %vm1706, %v1708, %v1709
    %1713 = vst [vmem:[#allocation2 + $0x4] sm:$0xc] %v1707
    %1714 = vst [vmem:[#allocation2 + $0x18] sm:$0xf] %v1710
    %v1717 = vrot.slane %v1668, 4
    %v1718 = vrot.slane %v1669, 4
    %v1719 = vsel %vm1685, %v1717, %v1718
    %1720 = vrot.lane.b32.xlu0 %v1719, 64
    %v1721 = vpop.permute.xlu0 %1720
    %1722 = vrot.lane.b32.xlu0 %v1718, 64
    %v1723 = vpop.permute.xlu0 %1722
    %v1726 = vsel %vm1695, %v1667, %v1721
    %v1727 = vsel %vm1695, %v1668, %v1723
    %v1728 = vpack.c.bf16 %v1727, %v1726
    %v1730 = vunpack.c.l.b16 %v1728
    %v1731 = vunpack.c.h.b16 %v1728
    %v1732 = vpack.c.b16 %v1730, %v1730
    %v1733 = vpack.c.b16 %v1731, %v1731
    %v1734 = vrot.slane %v1732, 6
    %v1735 = vrot.slane %v1734, 4
    %v1736 = vrot.slane %v1733, 6
    %v1737 = vsel %vm1706, %v1735, %v1736
    %1740 = vst [vmem:[#allocation2 + $0x8] sm:$0xc] %v1734
    %1741 = vst [vmem:[#allocation2 + $0x1c] sm:$0xf] %v1737
    %v1744 = vrot.slane %v1671, 4
    %v1745 = vrot.slane %v1672, 4
    %v1746 = vsel %vm1685, %v1744, %v1745
    %1747 = vrot.lane.b32.xlu0 %v1746, 64
    %v1748 = vpop.permute.xlu0 %1747
    %1749 = vrot.lane.b32.xlu0 %v1745, 64
    %v1750 = vpop.permute.xlu0 %1749
    %v1753 = vsel %vm1695, %v1670, %v1748
    %v1754 = vsel %vm1695, %v1671, %v1750
    %v1755 = vpack.c.bf16 %v1754, %v1753
    %v1757 = vunpack.c.l.b16 %v1755
    %v1758 = vunpack.c.h.b16 %v1755
    %v1759 = vpack.c.b16 %v1757, %v1757
    %v1760 = vpack.c.b16 %v1758, %v1758
    %v1761 = vrot.slane %v1759, 6
    %v1762 = vrot.slane %v1761, 4
    %v1763 = vrot.slane %v1760, 6
    %v1764 = vsel %vm1706, %v1762, %v1763
    %1767 = vst [vmem:[#allocation2 + $0xc] sm:$0xc] %v1761
    %1768 = vst [vmem:[#allocation2 + $0x20] sm:$0xf] %v1764
    %v1769 = vld [vmem:[#allocation2] sm:$0x11]
    %v1770 = vld [vmem:[#allocation2 + $0x8] sm:$0x11]
    %v1771 = vld [vmem:[#allocation2 + $0x10] sm:$0x1]
    %1772 = vst [vmem:[#allocation3] sm:$0x11] %v1769
    %v1775 = vrot.slane %v1769, 7
    %v1776 = vrot.slane %v1770, 7
    %v1777 = vrot.slane %v1775, 4
    %v1778 = vrot.slane %v1776, 4
    %vm1779 = vcmask 1043456
    %v1780 = vsel %vm1779, %v1777, %v1778
    %1782 = vst [vmem:[#allocation3] sm:$0x22] %v1780
    %v1783 = vrot.slane %v1770, 6
    %1785 = vst [vmem:[#allocation3] sm:$0x44] %v1783
    %v1787 = vrot.slane %v1770, 5
    %v1788 = vrot.slane %v1771, 5
    %v1789 = vrot.slane %v1787, 4
    %v1790 = vrot.slane %v1788, 4
    %v1791 = vsel %vm1779, %v1789, %v1790
    %1793 = vst [vmem:[#allocation3] sm:$0x88] %v1791
    %v1794 = vld [vmem:[#allocation2] sm:$0x22]
    %v1795 = vld [vmem:[#allocation2 + $0x8] sm:$0x22]
    %v1796 = vld [vmem:[#allocation2 + $0x10] sm:$0x2]
    %v1798 = vrot.slane %v1794, 5
    %v1799 = vrot.slane %v1798, 4
    %1801 = vst [vmem:[#allocation3 + $0x8] sm:$0x11] %v1799
    %v1803 = vrot.slane %v1794, 4
    %v1804 = vrot.slane %v1795, 4
    %v1805 = vsel %vm1779, %v1803, %v1804
    %1807 = vst [vmem:[#allocation3 + $0x8] sm:$0x22] %v1805
    %v1808 = vrot.slane %v1795, 7
    %1810 = vst [vmem:[#allocation3 + $0x8] sm:$0x44] %v1808
    %v1812 = vrot.slane %v1795, 6
    %v1813 = vrot.slane %v1796, 6
    %v1814 = vrot.slane %v1812, 4
    %v1815 = vrot.slane %v1813, 4
    %v1816 = vsel %vm1779, %v1814, %v1815
    %1818 = vst [vmem:[#allocation3 + $0x8] sm:$0x88] %v1816
    %v1819 = vld [vmem:[#allocation2] sm:$0x44]
    %v1820 = vld [vmem:[#allocation2 + $0x8] sm:$0x44]
    %v1821 = vld [vmem:[#allocation2 + $0x10] sm:$0x4]
    %v1823 = vrot.slane %v1819, 6
    %v1824 = vrot.slane %v1823, 4
    %1826 = vst [vmem:[#allocation3 + $0x10] sm:$0x11] %v1824
    %v1828 = vrot.slane %v1819, 5
    %v1829 = vrot.slane %v1828, 4
    %v1830 = vrot.slane %v1820, 5
    %v1831 = vrot.slane %v1830, 4
    %v1832 = vrot.slane %v1829, 4
    %v1833 = vrot.slane %v1831, 4
    %v1834 = vsel %vm1779, %v1832, %v1833
    %1836 = vst [vmem:[#allocation3 + $0x10] sm:$0x22] %v1834
    %1837 = vst [vmem:[#allocation3 + $0x10] sm:$0x44] %v1820
    %v1839 = vrot.slane %v1820, 7
    %v1840 = vrot.slane %v1821, 7
    %v1841 = vrot.slane %v1839, 4
    %v1842 = vrot.slane %v1840, 4
    %v1843 = vsel %vm1779, %v1841, %v1842
    %1845 = vst [vmem:[#allocation3 + $0x10] sm:$0x88] %v1843
    %v1846 = vld [vmem:[#allocation2] sm:$0x88]
    %v1847 = vld [vmem:[#allocation2 + $0x8] sm:$0x88]
    %v1848 = vld [vmem:[#allocation2 + $0x10] sm:$0x8]
    %v1850 = vrot.slane %v1846, 7
    %v1851 = vrot.slane %v1850, 4
    %1853 = vst [vmem:[#allocation3 + $0x18] sm:$0x11] %v1851
    %v1855 = vrot.slane %v1846, 6
    %v1856 = vrot.slane %v1855, 4
    %v1857 = vrot.slane %v1847, 6
    %v1858 = vrot.slane %v1857, 4
    %v1859 = vrot.slane %v1856, 4
    %v1860 = vrot.slane %v1858, 4
    %v1861 = vsel %vm1779, %v1859, %v1860
    %1863 = vst [vmem:[#allocation3 + $0x18] sm:$0x22] %v1861
    %v1864 = vrot.slane %v1847, 5
    %v1865 = vrot.slane %v1864, 4
    %1867 = vst [vmem:[#allocation3 + $0x18] sm:$0x44] %v1865
    %v1869 = vrot.slane %v1847, 4
    %v1870 = vrot.slane %v1848, 4
    %v1871 = vsel %vm1779, %v1869, %v1870
    %1873 = vst [vmem:[#allocation3 + $0x18] sm:$0x88] %v1871
    %v1874 = vld [vmem:[#allocation2] sm:$0x44]
    %v1875 = vld [vmem:[#allocation2 + $0x8] sm:$0x44]
    %v1876 = vld [vmem:[#allocation2 + $0x10] sm:$0x4]
    %v1878 = vrot.slane %v1874, 6
    %v1879 = vrot.slane %v1878, 4
    %1881 = vst [vmem:[#allocation3 + $0x20] sm:$0x11] %v1879
    %v1883 = vrot.slane %v1874, 5
    %v1884 = vrot.slane %v1883, 4
    %v1885 = vrot.slane %v1875, 5
    %v1886 = vrot.slane %v1885, 4
    %v1887 = vrot.slane %v1884, 4
    %v1888 = vrot.slane %v1886, 4
    %v1889 = vsel %vm1779, %v1887, %v1888
    %1891 = vst [vmem:[#allocation3 + $0x20] sm:$0x22] %v1889
    %1892 = vst [vmem:[#allocation3 + $0x20] sm:$0x44] %v1875
    %v1894 = vrot.slane %v1875, 7
    %v1895 = vrot.slane %v1876, 7
    %v1896 = vrot.slane %v1894, 4
    %v1897 = vrot.slane %v1895, 4
    %v1898 = vsel %vm1779, %v1896, %v1897
    %1900 = vst [vmem:[#allocation3 + $0x20] sm:$0x88] %v1898
    %v1901 = vld [vmem:[#allocation2] sm:$0x88]
    %v1902 = vld [vmem:[#allocation2 + $0x8] sm:$0x88]
    %v1903 = vld [vmem:[#allocation2 + $0x10] sm:$0x8]
    %v1905 = vrot.slane %v1901, 7
    %v1906 = vrot.slane %v1905, 4
    %1908 = vst [vmem:[#allocation3 + $0x28] sm:$0x11] %v1906
    %v1910 = vrot.slane %v1901, 6
    %v1911 = vrot.slane %v1910, 4
    %v1912 = vrot.slane %v1902, 6
    %v1913 = vrot.slane %v1912, 4
    %v1914 = vrot.slane %v1911, 4
    %v1915 = vrot.slane %v1913, 4
    %v1916 = vsel %vm1779, %v1914, %v1915
    %1918 = vst [vmem:[#allocation3 + $0x28] sm:$0x22] %v1916
    %v1919 = vrot.slane %v1902, 5
    %v1920 = vrot.slane %v1919, 4
    %1922 = vst [vmem:[#allocation3 + $0x28] sm:$0x44] %v1920
    %v1924 = vrot.slane %v1902, 4
    %v1925 = vrot.slane %v1903, 4
    %v1926 = vsel %vm1779, %v1924, %v1925
    %1928 = vst [vmem:[#allocation3 + $0x28] sm:$0x88] %v1926
    %v1929 = vld [vmem:[#allocation2 + $0x14] sm:$0x11]
    %v1930 = vld [vmem:[#allocation2 + $0x1c] sm:$0x11]
    %v1931 = vld [vmem:[#allocation2 + $0x24] sm:$0x1]
    %1932 = vst [vmem:[#allocation3 + $0x30] sm:$0x11] %v1929
    %v1935 = vrot.slane %v1929, 7
    %v1936 = vrot.slane %v1930, 7
    %v1937 = vrot.slane %v1935, 4
    %v1938 = vrot.slane %v1936, 4
    %v1939 = vsel %vm1779, %v1937, %v1938
    %1941 = vst [vmem:[#allocation3 + $0x30] sm:$0x22] %v1939
    %v1942 = vrot.slane %v1930, 6
    %1944 = vst [vmem:[#allocation3 + $0x30] sm:$0x44] %v1942
    %v1946 = vrot.slane %v1930, 5
    %v1947 = vrot.slane %v1931, 5
    %v1948 = vrot.slane %v1946, 4
    %v1949 = vrot.slane %v1947, 4
    %v1950 = vsel %vm1779, %v1948, %v1949
    %1952 = vst [vmem:[#allocation3 + $0x30] sm:$0x88] %v1950
    %v1953 = vld [vmem:[#allocation2 + $0x14] sm:$0x22]
    %v1954 = vld [vmem:[#allocation2 + $0x1c] sm:$0x22]
    %v1955 = vld [vmem:[#allocation2 + $0x24] sm:$0x2]
    %v1957 = vrot.slane %v1953, 5
    %v1958 = vrot.slane %v1957, 4
    %1960 = vst [vmem:[#allocation3 + $0x38] sm:$0x11] %v1958
    %v1962 = vrot.slane %v1953, 4
    %v1963 = vrot.slane %v1954, 4
    %v1964 = vsel %vm1779, %v1962, %v1963
    %1966 = vst [vmem:[#allocation3 + $0x38] sm:$0x22] %v1964
    %v1967 = vrot.slane %v1954, 7
    %1969 = vst [vmem:[#allocation3 + $0x38] sm:$0x44] %v1967
    %v1971 = vrot.slane %v1954, 6
    %v1972 = vrot.slane %v1955, 6
    %v1973 = vrot.slane %v1971, 4
    %v1974 = vrot.slane %v1972, 4
    %v1975 = vsel %vm1779, %v1973, %v1974
    %1977 = vst [vmem:[#allocation3 + $0x38] sm:$0x88] %v1975
    %v1978 = vld [vmem:[#allocation2 + $0x14] sm:$0x11]
    %v1979 = vld [vmem:[#allocation2 + $0x1c] sm:$0x11]
    %v1980 = vld [vmem:[#allocation2 + $0x24] sm:$0x1]
    %1981 = vst [vmem:[#allocation3 + $0x40] sm:$0x11] %v1978
    %v1984 = vrot.slane %v1978, 7
    %v1985 = vrot.slane %v1979, 7
    %v1986 = vrot.slane %v1984, 4
    %v1987 = vrot.slane %v1985, 4
    %v1988 = vsel %vm1779, %v1986, %v1987
    %1990 = vst [vmem:[#allocation3 + $0x40] sm:$0x22] %v1988
    %v1991 = vrot.slane %v1979, 6
    %1993 = vst [vmem:[#allocation3 + $0x40] sm:$0x44] %v1991
    %v1995 = vrot.slane %v1979, 5
    %v1996 = vrot.slane %v1980, 5
    %v1997 = vrot.slane %v1995, 4
    %v1998 = vrot.slane %v1996, 4
    %v1999 = vsel %vm1779, %v1997, %v1998
    %2001 = vst [vmem:[#allocation3 + $0x40] sm:$0x88] %v1999
    %v2002 = vld [vmem:[#allocation2 + $0x14] sm:$0x22]
    %v2003 = vld [vmem:[#allocation2 + $0x1c] sm:$0x22]
    %v2004 = vld [vmem:[#allocation2 + $0x24] sm:$0x2]
    %v2006 = vrot.slane %v2002, 5
    %v2007 = vrot.slane %v2006, 4
    %2009 = vst [vmem:[#allocation3 + $0x48] sm:$0x11] %v2007
    %v2011 = vrot.slane %v2002, 4
    %v2012 = vrot.slane %v2003, 4
    %v2013 = vsel %vm1779, %v2011, %v2012
    %2015 = vst [vmem:[#allocation3 + $0x48] sm:$0x22] %v2013
    %v2016 = vrot.slane %v2003, 7
    %2018 = vst [vmem:[#allocation3 + $0x48] sm:$0x44] %v2016
    %v2020 = vrot.slane %v2003, 6
    %v2021 = vrot.slane %v2004, 6
    %v2022 = vrot.slane %v2020, 4
    %v2023 = vrot.slane %v2021, 4
    %v2024 = vsel %vm1779, %v2022, %v2023
    %2026 = vst [vmem:[#allocation3 + $0x48] sm:$0x88] %v2024
    %v2027 = vld [vmem:[#allocation2 + $0x14] sm:$0x44]
    %v2028 = vld [vmem:[#allocation2 + $0x1c] sm:$0x44]
    %v2029 = vld [vmem:[#allocation2 + $0x24] sm:$0x4]
    %v2031 = vrot.slane %v2027, 6
    %v2032 = vrot.slane %v2031, 4
    %2034 = vst [vmem:[#allocation3 + $0x50] sm:$0x11] %v2032
    %v2036 = vrot.slane %v2027, 5
    %v2037 = vrot.slane %v2036, 4
    %v2038 = vrot.slane %v2028, 5
    %v2039 = vrot.slane %v2038, 4
    %v2040 = vrot.slane %v2037, 4
    %v2041 = vrot.slane %v2039, 4
    %v2042 = vsel %vm1779, %v2040, %v2041
    %2044 = vst [vmem:[#allocation3 + $0x50] sm:$0x22] %v2042
    %2045 = vst [vmem:[#allocation3 + $0x50] sm:$0x44] %v2028
    %v2047 = vrot.slane %v2028, 7
    %v2048 = vrot.slane %v2029, 7
    %v2049 = vrot.slane %v2047, 4
    %v2050 = vrot.slane %v2048, 4
    %v2051 = vsel %vm1779, %v2049, %v2050
    %2053 = vst [vmem:[#allocation3 + $0x50] sm:$0x88] %v2051
    %v2054 = vld [vmem:[#allocation2 + $0x14] sm:$0x88]
    %v2055 = vld [vmem:[#allocation2 + $0x1c] sm:$0x88]
    %v2056 = vld [vmem:[#allocation2 + $0x24] sm:$0x8]
    %v2058 = vrot.slane %v2054, 7
    %v2059 = vrot.slane %v2058, 4
    %2061 = vst [vmem:[#allocation3 + $0x58] sm:$0x11] %v2059
    %v2063 = vrot.slane %v2054, 6
    %v2064 = vrot.slane %v2063, 4
    %v2065 = vrot.slane %v2055, 6
    %v2066 = vrot.slane %v2065, 4
    %v2067 = vrot.slane %v2064, 4
    %v2068 = vrot.slane %v2066, 4
    %v2069 = vsel %vm1779, %v2067, %v2068
    %2071 = vst [vmem:[#allocation3 + $0x58] sm:$0x22] %v2069
    %v2072 = vrot.slane %v2055, 5
    %v2073 = vrot.slane %v2072, 4
    %2075 = vst [vmem:[#allocation3 + $0x58] sm:$0x44] %v2073
    %v2077 = vrot.slane %v2055, 4
    %v2078 = vrot.slane %v2056, 4
    %v2079 = vsel %vm1779, %v2077, %v2078
    %2081 = vst [vmem:[#allocation3 + $0x58] sm:$0x88] %v2079
    %v2082 = vld [vmem:[#allocation2 + $0x14] sm:$0x44]
    %v2083 = vld [vmem:[#allocation2 + $0x1c] sm:$0x44]
    %v2084 = vld [vmem:[#allocation2 + $0x24] sm:$0x4]
    %v2086 = vrot.slane %v2082, 6
    %v2087 = vrot.slane %v2086, 4
    %2089 = vst [vmem:[#allocation3 + $0x60] sm:$0x11] %v2087
    %v2091 = vrot.slane %v2082, 5
    %v2092 = vrot.slane %v2091, 4
    %v2093 = vrot.slane %v2083, 5
    %v2094 = vrot.slane %v2093, 4
    %v2095 = vrot.slane %v2092, 4
    %v2096 = vrot.slane %v2094, 4
    %v2097 = vsel %vm1779, %v2095, %v2096
    %2099 = vst [vmem:[#allocation3 + $0x60] sm:$0x22] %v2097
    %2100 = vst [vmem:[#allocation3 + $0x60] sm:$0x44] %v2083
    %v2102 = vrot.slane %v2083, 7
    %v2103 = vrot.slane %v2084, 7
    %v2104 = vrot.slane %v2102, 4
    %v2105 = vrot.slane %v2103, 4
    %v2106 = vsel %vm1779, %v2104, %v2105
    %2108 = vst [vmem:[#allocation3 + $0x60] sm:$0x88] %v2106
    %v2109 = vld [vmem:[#allocation2 + $0x14] sm:$0x88]
    %v2110 = vld [vmem:[#allocation2 + $0x1c] sm:$0x88]
    %v2111 = vld [vmem:[#allocation2 + $0x24] sm:$0x8]
    %v2113 = vrot.slane %v2109, 7
    %v2114 = vrot.slane %v2113, 4
    %2116 = vst [vmem:[#allocation3 + $0x68] sm:$0x11] %v2114
    %v2118 = vrot.slane %v2109, 6
    %v2119 = vrot.slane %v2118, 4
    %v2120 = vrot.slane %v2110, 6
    %v2121 = vrot.slane %v2120, 4
    %v2122 = vrot.slane %v2119, 4
    %v2123 = vrot.slane %v2121, 4
    %v2124 = vsel %vm1779, %v2122, %v2123
    %2126 = vst [vmem:[#allocation3 + $0x68] sm:$0x22] %v2124
    %v2127 = vrot.slane %v2110, 5
    %v2128 = vrot.slane %v2127, 4
    %2130 = vst [vmem:[#allocation3 + $0x68] sm:$0x44] %v2128
    %v2132 = vrot.slane %v2110, 4
    %v2133 = vrot.slane %v2111, 4
    %v2134 = vsel %vm1779, %v2132, %v2133
    %2136 = vst [vmem:[#allocation3 + $0x68] sm:$0x88] %v2134
    %v2137 = vld [vmem:[#allocation2 + $0x28] sm:$0x11]
    %v2138 = vld [vmem:[#allocation2 + $0x30] sm:$0x11]
    %v2139 = vld [vmem:[#allocation2 + $0x38] sm:$0x1]
    %2140 = vst [vmem:[#allocation3 + $0x70] sm:$0x11] %v2137
    %v2143 = vrot.slane %v2137, 7
    %v2144 = vrot.slane %v2138, 7
    %v2145 = vrot.slane %v2143, 4
    %v2146 = vrot.slane %v2144, 4
    %v2147 = vsel %vm1779, %v2145, %v2146
    %2149 = vst [vmem:[#allocation3 + $0x70] sm:$0x22] %v2147
    %v2150 = vrot.slane %v2138, 6
    %2152 = vst [vmem:[#allocation3 + $0x70] sm:$0x44] %v2150
    %v2154 = vrot.slane %v2138, 5
    %v2155 = vrot.slane %v2139, 5
    %v2156 = vrot.slane %v2154, 4
    %v2157 = vrot.slane %v2155, 4
    %v2158 = vsel %vm1779, %v2156, %v2157
    %2160 = vst [vmem:[#allocation3 + $0x70] sm:$0x88] %v2158
    %v2161 = vld [vmem:[#allocation2 + $0x28] sm:$0x22]
    %v2162 = vld [vmem:[#allocation2 + $0x30] sm:$0x22]
    %v2163 = vld [vmem:[#allocation2 + $0x38] sm:$0x2]
    %v2165 = vrot.slane %v2161, 5
    %v2166 = vrot.slane %v2165, 4
    %2168 = vst [vmem:[#allocation3 + $0x78] sm:$0x11] %v2166
    %v2170 = vrot.slane %v2161, 4
    %v2171 = vrot.slane %v2162, 4
    %v2172 = vsel %vm1779, %v2170, %v2171
    %2174 = vst [vmem:[#allocation3 + $0x78] sm:$0x22] %v2172
    %v2175 = vrot.slane %v2162, 7
    %2177 = vst [vmem:[#allocation3 + $0x78] sm:$0x44] %v2175
    %v2179 = vrot.slane %v2162, 6
    %v2180 = vrot.slane %v2163, 6
    %v2181 = vrot.slane %v2179, 4
    %v2182 = vrot.slane %v2180, 4
    %v2183 = vsel %vm1779, %v2181, %v2182
    %2185 = vst [vmem:[#allocation3 + $0x78] sm:$0x88] %v2183
    %v2186 = vld [vmem:[#allocation3] sm:$0xff]
    %v2187 = vld [vmem:[#allocation3 + $0x8] sm:$0xff]
    %v2188 = vld [vmem:[#allocation3 + $0x10] sm:$0xff]
    %v2189 = vld [vmem:[#allocation3 + $0x18] sm:$0xff]
    %v2190 = vld [vmem:[#allocation3 + $0x20] sm:$0xff]
    %v2191 = vld [vmem:[#allocation3 + $0x28] sm:$0xff]
    %v2192 = vld [vmem:[#allocation3 + $0x30] sm:$0xff]
    %v2193 = vld [vmem:[#allocation3 + $0x38] sm:$0xff]
    %v2194 = vld [vmem:[#allocation3 + $0x40] sm:$0xff]
    %v2195 = vld [vmem:[#allocation3 + $0x48] sm:$0xff]
    %v2196 = vld [vmem:[#allocation3 + $0x50] sm:$0xff]
    %v2197 = vld [vmem:[#allocation3 + $0x58] sm:$0xff]
    %v2198 = vld [vmem:[#allocation3 + $0x60] sm:$0xff]
    %v2199 = vld [vmem:[#allocation3 + $0x68] sm:$0xff]
    %v2200 = vld [vmem:[#allocation3 + $0x70] sm:$0xff]
    %v2201 = vld [vmem:[#allocation3 + $0x78] sm:$0xff]
    %v2202 = vld [vmem:[%s3] sm:$0xf]
    %v2203 = vld [vmem:[%s3 + $0x4] sm:$0xf]
    %v2204 = vld [vmem:[%s3 + $0x8] sm:$0xf]
    %v2205 = vld [vmem:[%s3 + $0xc] sm:$0xf]
    %v2206 = vld [vmem:[%s3 + $0x10] sm:$0xf]
    %v2207 = vld [vmem:[%s3 + $0x14] sm:$0xf]
    %v2208 = vld [vmem:[%s3 + $0x18] sm:$0xf]
    %v2209 = vld [vmem:[%s3 + $0x1c] sm:$0xf]
    %v2210 = vld [vmem:[%s3 + $0x20] sm:$0xf]
    %v2211 = vld [vmem:[%s3 + $0x24] sm:$0xf]
    %v2212 = vld [vmem:[%s3 + $0x28] sm:$0xf]
    %v2213 = vld [vmem:[%s3 + $0x2c] sm:$0xf]
    %v2214 = vld [vmem:[%s3 + $0x30] sm:$0xf]
    %v2215 = vld [vmem:[%s3 + $0x34] sm:$0xf]
    %v2216 = vld [vmem:[%s3 + $0x38] sm:$0xf]
    %v2217 = vld [vmem:[%s3 + $0x3c] sm:$0xf]
    %v2218 = vld [vmem:[%s3 + $0x40] sm:$0xf]
    %v2219 = vld [vmem:[%s3 + $0x44] sm:$0xf]
    %v2220 = vld [vmem:[%s3 + $0x48] sm:$0xf]
    %v2221 = vld [vmem:[%s3 + $0x4c] sm:$0xf]
    %v2222 = vld [vmem:[%s3 + $0x50] sm:$0xf]
    %v2223 = vld [vmem:[%s3 + $0x54] sm:$0xf]
    %v2224 = vld [vmem:[%s3 + $0x58] sm:$0xf]
    %v2225 = vld [vmem:[%s3 + $0x5c] sm:$0xf]
    %v2226 = vld [vmem:[%s3 + $0x60] sm:$0xf]
    %v2227 = vld [vmem:[%s3 + $0x64] sm:$0xf]
    %v2228 = vld [vmem:[%s3 + $0x68] sm:$0xf]
    %v2229 = vld [vmem:[%s3 + $0x6c] sm:$0xf]
    %v2230 = vld [vmem:[%s3 + $0x70] sm:$0xf]
    %v2231 = vld [vmem:[%s3 + $0x74] sm:$0xf]
    %v2232 = vld [vmem:[%s3 + $0x78] sm:$0xf]
    %v2233 = vld [vmem:[%s3 + $0x7c] sm:$0xf]
    %v2234 = vld [vmem:[%s3 + $0x80] sm:$0xf]
    %v2235 = vld [vmem:[%s3 + $0x84] sm:$0xf]
    %v2236 = vld [vmem:[%s3 + $0x88] sm:$0xf]
    %v2237 = vld [vmem:[%s3 + $0x8c] sm:$0xf]
    %v2238 = vld [vmem:[%s3 + $0x90] sm:$0xf]
    %v2239 = vld [vmem:[%s3 + $0x94] sm:$0xf]
    %v2240 = vld [vmem:[%s3 + $0x98] sm:$0xf]
    %v2241 = vld [vmem:[%s3 + $0x9c] sm:$0xf]
    %v2242 = vld [vmem:[%s3 + $0xa0] sm:$0xf]
    %v2243 = vld [vmem:[%s3 + $0xa4] sm:$0xf]
    %v2244 = vld [vmem:[%s3 + $0xa8] sm:$0xf]
    %v2245 = vld [vmem:[%s3 + $0xac] sm:$0xf]
    %v2246 = vld [vmem:[%s3 + $0xb0] sm:$0xf]
    %v2247 = vld [vmem:[%s3 + $0xb4] sm:$0xf]
    %v2248 = vld [vmem:[%s3 + $0xb8] sm:$0xf]
    %v2249 = vld [vmem:[%s3 + $0xbc] sm:$0xf]
    %v2250 = vld [vmem:[%s3 + $0xc0] sm:$0xf]
    %v2251 = vld [vmem:[%s3 + $0xc4] sm:$0xf]
    %v2252 = vld [vmem:[%s3 + $0xc8] sm:$0xf]
    %v2253 = vld [vmem:[%s3 + $0xcc] sm:$0xf]
    %v2254 = vld [vmem:[%s3 + $0xd0] sm:$0xf]
    %v2255 = vld [vmem:[%s3 + $0xd4] sm:$0xf]
    %v2256 = vld [vmem:[%s3 + $0xd8] sm:$0xf]
    %v2257 = vld [vmem:[%s3 + $0xdc] sm:$0xf]
    %v2258 = vld [vmem:[%s3 + $0xe0] sm:$0xf]
    %v2259 = vld [vmem:[%s3 + $0xe4] sm:$0xf]
    %v2260 = vld [vmem:[%s3 + $0xe8] sm:$0xf]
    %v2261 = vld [vmem:[%s3 + $0xec] sm:$0xf]
    %v2262 = vld [vmem:[%s3 + $0xf0] sm:$0xf]
    %v2263 = vld [vmem:[%s3 + $0xf4] sm:$0xf]
    %v2264 = vld [vmem:[%s3 + $0xf8] sm:$0xf]
    %v2265 = vld [vmem:[%s3 + $0xfc] sm:$0xf]
    %v2266 = vld [vmem:[%s3 + $0x100] sm:$0xf]
    %v2267 = vld [vmem:[%s3 + $0x104] sm:$0xf]
    %v2268 = vld [vmem:[%s3 + $0x108] sm:$0xf]
    %v2269 = vld [vmem:[%s3 + $0x10c] sm:$0xf]
    %v2270 = vld [vmem:[%s3 + $0x110] sm:$0xf]
    %v2271 = vld [vmem:[%s3 + $0x114] sm:$0xf]
    %v2272 = vld [vmem:[%s3 + $0x118] sm:$0xf]
    %v2273 = vld [vmem:[%s3 + $0x11c] sm:$0xf]
    %v2274 = vld [vmem:[%s3 + $0x120] sm:$0xf]
    %v2275 = vld [vmem:[%s3 + $0x124] sm:$0xf]
    %v2276 = vld [vmem:[%s3 + $0x128] sm:$0xf]
    %v2277 = vld [vmem:[%s3 + $0x12c] sm:$0xf]
    %v2278 = vld [vmem:[%s3 + $0x130] sm:$0xf]
    %v2279 = vld [vmem:[%s3 + $0x134] sm:$0xf]
    %v2280 = vld [vmem:[%s3 + $0x138] sm:$0xf]
    %v2281 = vld [vmem:[%s3 + $0x13c] sm:$0xf]
    %v2282 = vld [vmem:[%s3 + $0x140] sm:$0xf]
    %v2283 = vld [vmem:[%s3 + $0x144] sm:$0xf]
    %v2284 = vld [vmem:[%s3 + $0x148] sm:$0xf]
    %v2285 = vld [vmem:[%s3 + $0x14c] sm:$0xf]
    %v2286 = vld [vmem:[%s3 + $0x150] sm:$0xf]
    %v2287 = vld [vmem:[%s3 + $0x154] sm:$0xf]
    %v2288 = vld [vmem:[%s3 + $0x158] sm:$0xf]
    %v2289 = vld [vmem:[%s3 + $0x15c] sm:$0xf]
    %v2290 = vld [vmem:[%s3 + $0x160] sm:$0xf]
    %v2291 = vld [vmem:[%s3 + $0x164] sm:$0xf]
    %v2292 = vld [vmem:[%s3 + $0x168] sm:$0xf]
    %v2293 = vld [vmem:[%s3 + $0x16c] sm:$0xf]
    %v2294 = vld [vmem:[%s3 + $0x170] sm:$0xf]
    %v2295 = vld [vmem:[%s3 + $0x174] sm:$0xf]
    %v2296 = vld [vmem:[%s3 + $0x178] sm:$0xf]
    %v2297 = vld [vmem:[%s3 + $0x17c] sm:$0xf]
    %v2298 = vld [vmem:[%s3 + $0x180] sm:$0xf]
    %v2299 = vld [vmem:[%s3 + $0x184] sm:$0xf]
    %v2300 = vld [vmem:[%s3 + $0x188] sm:$0xf]
    %v2301 = vld [vmem:[%s3 + $0x18c] sm:$0xf]
    %v2302 = vld [vmem:[%s3 + $0x190] sm:$0xf]
    %v2303 = vld [vmem:[%s3 + $0x194] sm:$0xf]
    %v2304 = vld [vmem:[%s3 + $0x198] sm:$0xf]
    %v2305 = vld [vmem:[%s3 + $0x19c] sm:$0xf]
    %v2306 = vld [vmem:[%s3 + $0x1a0] sm:$0xf]
    %v2307 = vld [vmem:[%s3 + $0x1a4] sm:$0xf]
    %v2308 = vld [vmem:[%s3 + $0x1a8] sm:$0xf]
    %v2309 = vld [vmem:[%s3 + $0x1ac] sm:$0xf]
    %v2310 = vld [vmem:[%s3 + $0x1b0] sm:$0xf]
    %v2311 = vld [vmem:[%s3 + $0x1b4] sm:$0xf]
    %v2312 = vld [vmem:[%s3 + $0x1b8] sm:$0xf]
    %v2313 = vld [vmem:[%s3 + $0x1bc] sm:$0xf]
    %v2314 = vld [vmem:[%s3 + $0x1c0] sm:$0xf]
    %v2315 = vld [vmem:[%s3 + $0x1c4] sm:$0xf]
    %v2316 = vld [vmem:[%s3 + $0x1c8] sm:$0xf]
    %v2317 = vld [vmem:[%s3 + $0x1cc] sm:$0xf]
    %v2318 = vld [vmem:[%s3 + $0x1d0] sm:$0xf]
    %v2319 = vld [vmem:[%s3 + $0x1d4] sm:$0xf]
    %v2320 = vld [vmem:[%s3 + $0x1d8] sm:$0xf]
    %v2321 = vld [vmem:[%s3 + $0x1dc] sm:$0xf]
    %v2322 = vld [vmem:[%s3 + $0x1e0] sm:$0xf]
    %v2323 = vld [vmem:[%s3 + $0x1e4] sm:$0xf]
    %v2324 = vld [vmem:[%s3 + $0x1e8] sm:$0xf]
    %v2325 = vld [vmem:[%s3 + $0x1ec] sm:$0xf]
    %v2326 = vld [vmem:[%s3 + $0x1f0] sm:$0xf]
    %v2327 = vld [vmem:[%s3 + $0x1f4] sm:$0xf]
    %v2328 = vld [vmem:[%s3 + $0x1f8] sm:$0xf]
    %v2329 = vld [vmem:[%s3 + $0x1fc] sm:$0xf]
    %v2330 = vld [vmem:[%s4] sm:$0x1]
    %v2332 = vlaneseq
    %v2333 = vshrl.u32 %v2332, 7
    %v2334 = vsub.s32 0, %v2333
    %v2335 = vrot.slane %v2330, %v2334
    %v2353 = vunpack.c.l.b16 %v2186
    %v2354 = vunpack.c.h.b16 %v2186
    %v2355 = vunpack.c.l.b16 %v2187
    %v2356 = vunpack.c.h.b16 %v2187
    %v2357 = vunpack.c.l.b16 %v2188
    %v2358 = vunpack.c.h.b16 %v2188
    %v2359 = vunpack.c.l.b16 %v2189
    %v2360 = vunpack.c.h.b16 %v2189
    %v2361 = vunpack.c.l.b16 %v2190
    %v2362 = vunpack.c.h.b16 %v2190
    %v2363 = vunpack.c.l.b16 %v2191
    %v2364 = vunpack.c.h.b16 %v2191
    %v2365 = vunpack.c.l.b16 %v2192
    %v2366 = vunpack.c.h.b16 %v2192
    %v2367 = vunpack.c.l.b16 %v2193
    %v2368 = vunpack.c.h.b16 %v2193
    %v2369 = vunpack.c.l.b16 %v2194
    %v2370 = vunpack.c.h.b16 %v2194
    %v2371 = vunpack.c.l.b16 %v2195
    %v2372 = vunpack.c.h.b16 %v2195
    %v2373 = vunpack.c.l.b16 %v2196
    %v2374 = vunpack.c.h.b16 %v2196
    %v2375 = vunpack.c.l.b16 %v2197
    %v2376 = vunpack.c.h.b16 %v2197
    %v2377 = vunpack.c.l.b16 %v2198
    %v2378 = vunpack.c.h.b16 %v2198
    %v2379 = vunpack.c.l.b16 %v2199
    %v2380 = vunpack.c.h.b16 %v2199
    %v2381 = vunpack.c.l.b16 %v2200
    %v2382 = vunpack.c.h.b16 %v2200
    %v2383 = vunpack.c.l.b16 %v2201
    %v2384 = vunpack.c.h.b16 %v2201
    %v2385 = vpack.c.b16 %v2361, %v2353
    %v2386 = vpack.c.b16 %v2362, %v2354
    %v2387 = vpack.c.b16 %v2363, %v2355
    %v2388 = vpack.c.b16 %v2364, %v2356
    %v2389 = vpack.c.b16 %v2365, %v2357
    %v2390 = vpack.c.b16 %v2366, %v2358
    %v2391 = vpack.c.b16 %v2367, %v2359
    %v2392 = vpack.c.b16 %v2368, %v2360
    %v2393 = vpack.c.b16 %v2377, %v2369
    %v2394 = vpack.c.b16 %v2378, %v2370
    %v2395 = vpack.c.b16 %v2379, %v2371
    %v2396 = vpack.c.b16 %v2380, %v2372
    %v2397 = vpack.c.b16 %v2381, %v2373
    %v2398 = vpack.c.b16 %v2382, %v2374
    %v2399 = vpack.c.b16 %v2383, %v2375
    %v2400 = vpack.c.b16 %v2384, %v2376
    %v2545 = vunpack.c.l.b16 %v2202
    %v2546 = vunpack.c.l.b16 %v2203
    %v2547 = vunpack.c.l.b16 %v2204
    %v2548 = vunpack.c.l.b16 %v2205
    %v2549 = vunpack.c.l.b16 %v2206
    %v2550 = vunpack.c.l.b16 %v2207
    %v2551 = vunpack.c.l.b16 %v2208
    %v2552 = vunpack.c.l.b16 %v2209
    %v2553 = vunpack.c.l.b16 %v2210
    %v2554 = vunpack.c.l.b16 %v2211
    %v2555 = vunpack.c.l.b16 %v2212
    %v2556 = vunpack.c.l.b16 %v2213
    %v2557 = vunpack.c.l.b16 %v2214
    %v2558 = vunpack.c.l.b16 %v2215
    %v2559 = vunpack.c.l.b16 %v2216
    %v2560 = vunpack.c.l.b16 %v2217
    %v2561 = vunpack.c.l.b16 %v2218
    %v2562 = vunpack.c.l.b16 %v2219
    %v2563 = vunpack.c.l.b16 %v2220
    %v2564 = vunpack.c.l.b16 %v2221
    %v2565 = vunpack.c.l.b16 %v2222
    %v2566 = vunpack.c.l.b16 %v2223
    %v2567 = vunpack.c.l.b16 %v2224
    %v2568 = vunpack.c.l.b16 %v2225
    %v2569 = vunpack.c.l.b16 %v2226
    %v2570 = vunpack.c.l.b16 %v2227
    %v2571 = vunpack.c.l.b16 %v2228
    %v2572 = vunpack.c.l.b16 %v2229
    %v2573 = vunpack.c.l.b16 %v2230
    %v2574 = vunpack.c.l.b16 %v2231
    %v2575 = vunpack.c.l.b16 %v2232
    %v2576 = vunpack.c.l.b16 %v2233
    %v2577 = vunpack.c.l.b16 %v2234
    %v2578 = vunpack.c.l.b16 %v2235
    %v2579 = vunpack.c.l.b16 %v2236
    %v2580 = vunpack.c.l.b16 %v2237
    %v2581 = vunpack.c.l.b16 %v2238
    %v2582 = vunpack.c.l.b16 %v2239
    %v2583 = vunpack.c.l.b16 %v2240
    %v2584 = vunpack.c.l.b16 %v2241
    %v2585 = vunpack.c.l.b16 %v2242
    %v2586 = vunpack.c.l.b16 %v2243
    %v2587 = vunpack.c.l.b16 %v2244
    %v2588 = vunpack.c.l.b16 %v2245
    %v2589 = vunpack.c.l.b16 %v2246
    %v2590 = vunpack.c.l.b16 %v2247
    %v2591 = vunpack.c.l.b16 %v2248
    %v2592 = vunpack.c.l.b16 %v2249
    %v2593 = vunpack.c.l.b16 %v2250
    %v2594 = vunpack.c.l.b16 %v2251
    %v2595 = vunpack.c.l.b16 %v2252
    %v2596 = vunpack.c.l.b16 %v2253
    %v2597 = vunpack.c.l.b16 %v2254
    %v2598 = vunpack.c.l.b16 %v2255
    %v2599 = vunpack.c.l.b16 %v2256
    %v2600 = vunpack.c.l.b16 %v2257
    %v2601 = vunpack.c.l.b16 %v2258
    %v2602 = vunpack.c.l.b16 %v2259
    %v2603 = vunpack.c.l.b16 %v2260
    %v2604 = vunpack.c.l.b16 %v2261
    %v2605 = vunpack.c.l.b16 %v2262
    %v2606 = vunpack.c.l.b16 %v2263
    %v2607 = vunpack.c.l.b16 %v2264
    %v2608 = vunpack.c.l.b16 %v2265
    %v2609 = vunpack.c.l.b16 %v2266
    %v2610 = vunpack.c.l.b16 %v2267
    %v2611 = vunpack.c.l.b16 %v2268
    %v2612 = vunpack.c.l.b16 %v2269
    %v2613 = vunpack.c.l.b16 %v2270
    %v2614 = vunpack.c.l.b16 %v2271
    %v2615 = vunpack.c.l.b16 %v2272
    %v2616 = vunpack.c.l.b16 %v2273
    %v2617 = vunpack.c.l.b16 %v2274
    %v2618 = vunpack.c.l.b16 %v2275
    %v2619 = vunpack.c.l.b16 %v2276
    %v2620 = vunpack.c.l.b16 %v2277
    %v2621 = vunpack.c.l.b16 %v2278
    %v2622 = vunpack.c.l.b16 %v2279
    %v2623 = vunpack.c.l.b16 %v2280
    %v2624 = vunpack.c.l.b16 %v2281
    %v2625 = vunpack.c.l.b16 %v2282
    %v2626 = vunpack.c.l.b16 %v2283
    %v2627 = vunpack.c.l.b16 %v2284
    %v2628 = vunpack.c.l.b16 %v2285
    %v2629 = vunpack.c.l.b16 %v2286
    %v2630 = vunpack.c.l.b16 %v2287
    %v2631 = vunpack.c.l.b16 %v2288
    %v2632 = vunpack.c.l.b16 %v2289
    %v2633 = vunpack.c.l.b16 %v2290
    %v2634 = vunpack.c.l.b16 %v2291
    %v2635 = vunpack.c.l.b16 %v2292
    %v2636 = vunpack.c.l.b16 %v2293
    %v2637 = vunpack.c.l.b16 %v2294
    %v2638 = vunpack.c.l.b16 %v2295
    %v2639 = vunpack.c.l.b16 %v2296
    %v2640 = vunpack.c.l.b16 %v2297
    %v2641 = vunpack.c.l.b16 %v2298
    %v2642 = vunpack.c.l.b16 %v2299
    %v2643 = vunpack.c.l.b16 %v2300
    %v2644 = vunpack.c.l.b16 %v2301
    %v2645 = vunpack.c.l.b16 %v2302
    %v2646 = vunpack.c.l.b16 %v2303
    %v2647 = vunpack.c.l.b16 %v2304
    %v2648 = vunpack.c.l.b16 %v2305
    %v2649 = vunpack.c.l.b16 %v2306
    %v2650 = vunpack.c.l.b16 %v2307
    %v2651 = vunpack.c.l.b16 %v2308
    %v2652 = vunpack.c.l.b16 %v2309
    %v2653 = vunpack.c.l.b16 %v2310
    %v2654 = vunpack.c.l.b16 %v2311
    %v2655 = vunpack.c.l.b16 %v2312
    %v2656 = vunpack.c.l.b16 %v2313
    %v2657 = vunpack.c.l.b16 %v2314
    %v2658 = vunpack.c.l.b16 %v2315
    %v2659 = vunpack.c.l.b16 %v2316
    %v2660 = vunpack.c.l.b16 %v2317
    %v2661 = vunpack.c.l.b16 %v2318
    %v2662 = vunpack.c.l.b16 %v2319
    %v2663 = vunpack.c.l.b16 %v2320
    %v2664 = vunpack.c.l.b16 %v2321
    %v2665 = vunpack.c.l.b16 %v2322
    %v2666 = vunpack.c.l.b16 %v2323
    %v2667 = vunpack.c.l.b16 %v2324
    %v2668 = vunpack.c.l.b16 %v2325
    %v2669 = vunpack.c.l.b16 %v2326
    %v2670 = vunpack.c.l.b16 %v2327
    %v2671 = vunpack.c.l.b16 %v2328
    %v2672 = vunpack.c.l.b16 %v2329
    %v2673 = vpack.c.b16 %v2546, %v2545
    %v2674 = vpack.c.b16 %v2548, %v2547
    %v2675 = vpack.c.b16 %v2550, %v2549
    %v2676 = vpack.c.b16 %v2552, %v2551
    %v2677 = vpack.c.b16 %v2554, %v2553
    %v2678 = vpack.c.b16 %v2556, %v2555
    %v2679 = vpack.c.b16 %v2558, %v2557
    %v2680 = vpack.c.b16 %v2560, %v2559
    %v2681 = vpack.c.b16 %v2562, %v2561
    %v2682 = vpack.c.b16 %v2564, %v2563
    %v2683 = vpack.c.b16 %v2566, %v2565
    %v2684 = vpack.c.b16 %v2568, %v2567
    %v2685 = vpack.c.b16 %v2570, %v2569
    %v2686 = vpack.c.b16 %v2572, %v2571
    %v2687 = vpack.c.b16 %v2574, %v2573
    %v2688 = vpack.c.b16 %v2576, %v2575
    %v2689 = vpack.c.b16 %v2578, %v2577
    %v2690 = vpack.c.b16 %v2580, %v2579
    %v2691 = vpack.c.b16 %v2582, %v2581
    %v2692 = vpack.c.b16 %v2584, %v2583
    %v2693 = vpack.c.b16 %v2586, %v2585
    %v2694 = vpack.c.b16 %v2588, %v2587
    %v2695 = vpack.c.b16 %v2590, %v2589
    %v2696 = vpack.c.b16 %v2592, %v2591
    %v2697 = vpack.c.b16 %v2594, %v2593
    %v2698 = vpack.c.b16 %v2596, %v2595
    %v2699 = vpack.c.b16 %v2598, %v2597
    %v2700 = vpack.c.b16 %v2600, %v2599
    %v2701 = vpack.c.b16 %v2602, %v2601
    %v2702 = vpack.c.b16 %v2604, %v2603
    %v2703 = vpack.c.b16 %v2606, %v2605
    %v2704 = vpack.c.b16 %v2608, %v2607
    %v2705 = vpack.c.b16 %v2610, %v2609
    %v2706 = vpack.c.b16 %v2612, %v2611
    %v2707 = vpack.c.b16 %v2614, %v2613
    %v2708 = vpack.c.b16 %v2616, %v2615
    %v2709 = vpack.c.b16 %v2618, %v2617
    %v2710 = vpack.c.b16 %v2620, %v2619
    %v2711 = vpack.c.b16 %v2622, %v2621
    %v2712 = vpack.c.b16 %v2624, %v2623
    %v2713 = vpack.c.b16 %v2626, %v2625
    %v2714 = vpack.c.b16 %v2628, %v2627
    %v2715 = vpack.c.b16 %v2630, %v2629
    %v2716 = vpack.c.b16 %v2632, %v2631
    %v2717 = vpack.c.b16 %v2634, %v2633
    %v2718 = vpack.c.b16 %v2636, %v2635
    %v2719 = vpack.c.b16 %v2638, %v2637
    %v2720 = vpack.c.b16 %v2640, %v2639
    %v2721 = vpack.c.b16 %v2642, %v2641
    %v2722 = vpack.c.b16 %v2644, %v2643
    %v2723 = vpack.c.b16 %v2646, %v2645
    %v2724 = vpack.c.b16 %v2648, %v2647
    %v2725 = vpack.c.b16 %v2650, %v2649
    %v2726 = vpack.c.b16 %v2652, %v2651
    %v2727 = vpack.c.b16 %v2654, %v2653
    %v2728 = vpack.c.b16 %v2656, %v2655
    %v2729 = vpack.c.b16 %v2658, %v2657
    %v2730 = vpack.c.b16 %v2660, %v2659
    %v2731 = vpack.c.b16 %v2662, %v2661
    %v2732 = vpack.c.b16 %v2664, %v2663
    %v2733 = vpack.c.b16 %v2666, %v2665
    %v2734 = vpack.c.b16 %v2668, %v2667
    %v2735 = vpack.c.b16 %v2670, %v2669
    %v2736 = vpack.c.b16 %v2672, %v2671
    %2801 = vmatprep.subr.bf16.mxu0 0
    %2802 = vmatpush1.bf16.msra.mxu0 %v2680
    %2803 = vmatprep.subr.bf16.mxu0 0
    %2804 = vmatpush1.bf16.msra.mxu0 %v2679
    %2805 = vmatprep.subr.bf16.mxu0 0
    %2806 = vmatpush1.bf16.msra.mxu0 %v2678
    %2807 = vmatprep.subr.bf16.mxu0 0
    %2808 = vmatpush1.bf16.msra.mxu0 %v2677
    %2809 = vmatprep.subr.bf16.mxu0 0
    %2810 = vmatpush1.bf16.msra.mxu0 %v2676
    %2811 = vmatprep.subr.bf16.mxu0 0
    %2812 = vmatpush1.bf16.msra.mxu0 %v2675
    %2813 = vmatprep.subr.bf16.mxu0 0
    %2814 = vmatpush1.bf16.msra.mxu0 %v2674
    %2815 = vmatprep.subr.bf16.mxu0 0
    %2816 = vmatpush1.bf16.msra.mxu0 %v2673
    %2817 = vmatprep.subr.bf16.mxu0 0
    %2818 = vmatpush2.bf16.msra.mxu0 %v2688
    %2819 = vmatprep.subr.bf16.mxu0 0
    %2820 = vmatpush2.bf16.msra.mxu0 %v2687
    %2821 = vmatprep.subr.bf16.mxu0 0
    %2822 = vmatpush2.bf16.msra.mxu0 %v2686
    %2823 = vmatprep.subr.bf16.mxu0 0
    %2824 = vmatpush2.bf16.msra.mxu0 %v2685
    %2825 = vmatprep.subr.bf16.mxu0 0
    %2826 = vmatpush2.bf16.msra.mxu0 %v2684
    %2827 = vmatprep.subr.bf16.mxu0 0
    %2828 = vmatpush2.bf16.msra.mxu0 %v2683
    %2829 = vmatprep.subr.bf16.mxu0 0
    %2830 = vmatpush2.bf16.msra.mxu0 %v2682
    %2831 = vmatprep.subr.bf16.mxu0 0
    %2832 = vmatpush2.bf16.msra.mxu0 %v2681
    %2833 = vmatprep.mubr.bf16.mxu0 %v2386
    %2834 = vmatmul.mubr.bf16.gmra.mxu0 %v2385
    %v2835 = vpop.f32.mrf.mxu0
    %v2836 = vadd.f32 %v2335, %v2835
    %v2837 = vpop.f32.mrf.mxu0
    %v2838 = vpop.f32.mrf.mxu0
    %v2839 = vadd.f32 %v2335, %v2838
    %v2840 = vpop.f32.mrf.mxu0
    %2841 = vmatprep.mubr.bf16.mxu0 %v2394
    %2842 = vmatmul.mubr.bf16.gmra.mxu0 %v2393
    %v2843 = vpop.f32.mrf.mxu0
    %v2844 = vadd.f32 %v2335, %v2843
    %v2845 = vpop.f32.mrf.mxu0
    %v2846 = vpop.f32.mrf.mxu0
    %v2847 = vadd.f32 %v2335, %v2846
    %v2848 = vpop.f32.mrf.mxu0
    %2849 = vdwg.mxu0
    %2850 = vmatprep.subr.bf16.mxu0 0
    %2851 = vmatpush1.bf16.msra.mxu0 %v2696
    %2852 = vmatprep.subr.bf16.mxu0 0
    %2853 = vmatpush1.bf16.msra.mxu0 %v2695
    %2854 = vmatprep.subr.bf16.mxu0 0
    %2855 = vmatpush1.bf16.msra.mxu0 %v2694
    %2856 = vmatprep.subr.bf16.mxu0 0
    %2857 = vmatpush1.bf16.msra.mxu0 %v2693
    %2858 = vmatprep.subr.bf16.mxu0 0
    %2859 = vmatpush1.bf16.msra.mxu0 %v2692
    %2860 = vmatprep.subr.bf16.mxu0 0
    %2861 = vmatpush1.bf16.msra.mxu0 %v2691
    %2862 = vmatprep.subr.bf16.mxu0 0
    %2863 = vmatpush1.bf16.msra.mxu0 %v2690
    %2864 = vmatprep.subr.bf16.mxu0 0
    %2865 = vmatpush1.bf16.msra.mxu0 %v2689
    %2866 = vmatprep.subr.bf16.mxu0 0
    %2867 = vmatpush2.bf16.msra.mxu0 %v2704
    %2868 = vmatprep.subr.bf16.mxu0 0
    %2869 = vmatpush2.bf16.msra.mxu0 %v2703
    %2870 = vmatprep.subr.bf16.mxu0 0
    %2871 = vmatpush2.bf16.msra.mxu0 %v2702
    %2872 = vmatprep.subr.bf16.mxu0 0
    %2873 = vmatpush2.bf16.msra.mxu0 %v2701
    %2874 = vmatprep.subr.bf16.mxu0 0
    %2875 = vmatpush2.bf16.msra.mxu0 %v2700
    %2876 = vmatprep.subr.bf16.mxu0 0
    %2877 = vmatpush2.bf16.msra.mxu0 %v2699
    %2878 = vmatprep.subr.bf16.mxu0 0
    %2879 = vmatpush2.bf16.msra.mxu0 %v2698
    %2880 = vmatprep.subr.bf16.mxu0 0
    %2881 = vmatpush2.bf16.msra.mxu0 %v2697
    %2882 = vmatprep.mubr.bf16.mxu0 %v2388
    %2883 = vmatmul.mubr.bf16.gmra.mxu0 %v2387
    %v2884 = vpop.f32.mrf.mxu0
    %v2885 = vadd.f32 %v2836, %v2884
    %v2886 = vpop.f32.mrf.mxu0
    %v2887 = vpop.f32.mrf.mxu0
    %v2888 = vadd.f32 %v2839, %v2887
    %v2889 = vpop.f32.mrf.mxu0
    %2890 = vmatprep.mubr.bf16.mxu0 %v2396
    %2891 = vmatmul.mubr.bf16.gmra.mxu0 %v2395
    %v2892 = vpop.f32.mrf.mxu0
    %v2893 = vadd.f32 %v2844, %v2892
    %v2894 = vpop.f32.mrf.mxu0
    %v2895 = vpop.f32.mrf.mxu0
    %v2896 = vadd.f32 %v2847, %v2895
    %v2897 = vpop.f32.mrf.mxu0
    %2898 = vdwg.mxu0
    %2899 = vmatprep.subr.bf16.mxu0 0
    %2900 = vmatpush1.bf16.msra.mxu0 %v2712
    %2901 = vmatprep.subr.bf16.mxu0 0
    %2902 = vmatpush1.bf16.msra.mxu0 %v2711
    %2903 = vmatprep.subr.bf16.mxu0 0
    %2904 = vmatpush1.bf16.msra.mxu0 %v2710
    %2905 = vmatprep.subr.bf16.mxu0 0
    %2906 = vmatpush1.bf16.msra.mxu0 %v2709
    %2907 = vmatprep.subr.bf16.mxu0 0
    %2908 = vmatpush1.bf16.msra.mxu0 %v2708
    %2909 = vmatprep.subr.bf16.mxu0 0
    %2910 = vmatpush1.bf16.msra.mxu0 %v2707
    %2911 = vmatprep.subr.bf16.mxu0 0
    %2912 = vmatpush1.bf16.msra.mxu0 %v2706
    %2913 = vmatprep.subr.bf16.mxu0 0
    %2914 = vmatpush1.bf16.msra.mxu0 %v2705
    %2915 = vmatprep.subr.bf16.mxu0 0
    %2916 = vmatpush2.bf16.msra.mxu0 %v2720
    %2917 = vmatprep.subr.bf16.mxu0 0
    %2918 = vmatpush2.bf16.msra.mxu0 %v2719
    %2919 = vmatprep.subr.bf16.mxu0 0
    %2920 = vmatpush2.bf16.msra.mxu0 %v2718
    %2921 = vmatprep.subr.bf16.mxu0 0
    %2922 = vmatpush2.bf16.msra.mxu0 %v2717
    %2923 = vmatprep.subr.bf16.mxu0 0
    %2924 = vmatpush2.bf16.msra.mxu0 %v2716
    %2925 = vmatprep.subr.bf16.mxu0 0
    %2926 = vmatpush2.bf16.msra.mxu0 %v2715
    %2927 = vmatprep.subr.bf16.mxu0 0
    %2928 = vmatpush2.bf16.msra.mxu0 %v2714
    %2929 = vmatprep.subr.bf16.mxu0 0
    %2930 = vmatpush2.bf16.msra.mxu0 %v2713
    %2931 = vmatprep.mubr.bf16.mxu0 %v2390
    %2932 = vmatmul.mubr.bf16.gmra.mxu0 %v2389
    %v2933 = vpop.f32.mrf.mxu0
    %v2934 = vadd.f32 %v2885, %v2933
    %v2935 = vpop.f32.mrf.mxu0
    %v2936 = vpop.f32.mrf.mxu0
    %v2937 = vadd.f32 %v2888, %v2936
    %v2938 = vpop.f32.mrf.mxu0
    %2939 = vmatprep.mubr.bf16.mxu0 %v2398
    %2940 = vmatmul.mubr.bf16.gmra.mxu0 %v2397
    %v2941 = vpop.f32.mrf.mxu0
    %v2942 = vadd.f32 %v2893, %v2941
    %v2943 = vpop.f32.mrf.mxu0
    %v2944 = vpop.f32.mrf.mxu0
    %v2945 = vadd.f32 %v2896, %v2944
    %v2946 = vpop.f32.mrf.mxu0
    %2947 = vdwg.mxu0
    %2948 = vmatprep.subr.bf16.mxu0 0
    %2949 = vmatpush1.bf16.msra.mxu0 %v2728
    %2950 = vmatprep.subr.bf16.mxu0 0
    %2951 = vmatpush1.bf16.msra.mxu0 %v2727
    %2952 = vmatprep.subr.bf16.mxu0 0
    %2953 = vmatpush1.bf16.msra.mxu0 %v2726
    %2954 = vmatprep.subr.bf16.mxu0 0
    %2955 = vmatpush1.bf16.msra.mxu0 %v2725
    %2956 = vmatprep.subr.bf16.mxu0 0
    %2957 = vmatpush1.bf16.msra.mxu0 %v2724
    %2958 = vmatprep.subr.bf16.mxu0 0
    %2959 = vmatpush1.bf16.msra.mxu0 %v2723
    %2960 = vmatprep.subr.bf16.mxu0 0
    %2961 = vmatpush1.bf16.msra.mxu0 %v2722
    %2962 = vmatprep.subr.bf16.mxu0 0
    %2963 = vmatpush1.bf16.msra.mxu0 %v2721
    %2964 = vmatprep.subr.bf16.mxu0 0
    %2965 = vmatpush2.bf16.msra.mxu0 %v2736
    %2966 = vmatprep.subr.bf16.mxu0 0
    %2967 = vmatpush2.bf16.msra.mxu0 %v2735
    %2968 = vmatprep.subr.bf16.mxu0 0
    %2969 = vmatpush2.bf16.msra.mxu0 %v2734
    %2970 = vmatprep.subr.bf16.mxu0 0
    %2971 = vmatpush2.bf16.msra.mxu0 %v2733
    %2972 = vmatprep.subr.bf16.mxu0 0
    %2973 = vmatpush2.bf16.msra.mxu0 %v2732
    %2974 = vmatprep.subr.bf16.mxu0 0
    %2975 = vmatpush2.bf16.msra.mxu0 %v2731
    %2976 = vmatprep.subr.bf16.mxu0 0
    %2977 = vmatpush2.bf16.msra.mxu0 %v2730
    %2978 = vmatprep.subr.bf16.mxu0 0
    %2979 = vmatpush2.bf16.msra.mxu0 %v2729
    %2980 = vmatprep.mubr.bf16.mxu0 %v2392
    %2981 = vmatmul.mubr.bf16.gmra.mxu0 %v2391
    %v2982 = vpop.f32.mrf.mxu0
    %v2983 = vadd.f32 %v2934, %v2982
    %v2984 = vpop.f32.mrf.mxu0
    %v2985 = vpop.f32.mrf.mxu0
    %v2986 = vadd.f32 %v2937, %v2985
    %v2987 = vpop.f32.mrf.mxu0
    %2988 = vmatprep.mubr.bf16.mxu0 %v2400
    %2989 = vmatmul.mubr.bf16.gmra.mxu0 %v2399
    %v2990 = vpop.f32.mrf.mxu0
    %v2991 = vadd.f32 %v2942, %v2990
    %v2992 = vpop.f32.mrf.mxu0
    %v2993 = vpop.f32.mrf.mxu0
    %v2994 = vadd.f32 %v2945, %v2993
    %v2995 = vpop.f32.mrf.mxu0
    %2996 = vdwg.mxu0
    %v2997 = vmax.f32 %v2983, 0.0
    %v2998 = vmax.f32 %v2986, 0.0
    %v2999 = vmax.f32 %v2991, 0.0
    %v3000 = vmax.f32 %v2994, 0.0
    %v3001 = vmax.f32 %v2997, %v2998
    %v3002 = vmax.f32 %v2999, %v3000
    %v3004 = vrot.slane %v3001, 2
    %v3006 = vmax.f32 %v3001, %v3004
    %v3008 = vrot.slane %v3002, 2
    %v3010 = vmax.f32 %v3002, %v3008
    %v3012 = vrot.slane %v3006, 4
    %v3015 = vrot.slane %v3010, 4
    %v3017 = vpack.c.bf16 %v3006, %v3006
    %v3018 = vpack.c.bf16 %v3012, %v3012
    %v3019 = vpack.c.bf16 %v3010, %v3010
    %v3020 = vpack.c.bf16 %v3015, %v3015
    %v3021 = vld [vmem:[%s5] sm:$0xff]
    %v3022 = vld [vmem:[%s5 + $0x8] sm:$0xff]
    %v3023 = vld [vmem:[%s5 + $0x10] sm:$0xff]
    %v3024 = vld [vmem:[%s5 + $0x18] sm:$0xff]
    %v3025 = vld [vmem:[%s5 + $0x20] sm:$0xff]
    %v3026 = vld [vmem:[%s5 + $0x28] sm:$0xff]
    %v3027 = vld [vmem:[%s5 + $0x30] sm:$0xff]
    %v3028 = vld [vmem:[%s5 + $0x38] sm:$0xff]
    %v3029 = vld [vmem:[%s5 + $0x40] sm:$0xff]
    %v3030 = vld [vmem:[%s5 + $0x48] sm:$0xff]
    %v3031 = vld [vmem:[%s5 + $0x50] sm:$0xff]
    %v3032 = vld [vmem:[%s5 + $0x58] sm:$0xff]
    %v3033 = vld [vmem:[%s5 + $0x60] sm:$0xff]
    %v3034 = vld [vmem:[%s5 + $0x68] sm:$0xff]
    %v3035 = vld [vmem:[%s5 + $0x70] sm:$0xff]
    %v3036 = vld [vmem:[%s5 + $0x78] sm:$0xff]
    %v3037 = vld [vmem:[%s5 + $0x80] sm:$0xff]
    %v3038 = vld [vmem:[%s5 + $0x88] sm:$0xff]
    %v3039 = vld [vmem:[%s5 + $0x90] sm:$0xff]
    %v3040 = vld [vmem:[%s5 + $0x98] sm:$0xff]
    %v3041 = vld [vmem:[%s5 + $0xa0] sm:$0xff]
    %v3042 = vld [vmem:[%s5 + $0xa8] sm:$0xff]
    %v3043 = vld [vmem:[%s5 + $0xb0] sm:$0xff]
    %v3044 = vld [vmem:[%s5 + $0xb8] sm:$0xff]
    %v3045 = vld [vmem:[%s5 + $0xc0] sm:$0xff]
    %v3046 = vld [vmem:[%s5 + $0xc8] sm:$0xff]
    %v3047 = vld [vmem:[%s5 + $0xd0] sm:$0xff]
    %v3048 = vld [vmem:[%s5 + $0xd8] sm:$0xff]
    %v3049 = vld [vmem:[%s5 + $0xe0] sm:$0xff]
    %v3050 = vld [vmem:[%s5 + $0xe8] sm:$0xff]
    %v3051 = vld [vmem:[%s5 + $0xf0] sm:$0xff]
    %v3052 = vld [vmem:[%s5 + $0xf8] sm:$0xff]
    %v3053 = vld [vmem:[%s5 + $0x100] sm:$0xff]
    %v3054 = vld [vmem:[%s5 + $0x108] sm:$0xff]
    %v3055 = vld [vmem:[%s5 + $0x110] sm:$0xff]
    %v3056 = vld [vmem:[%s5 + $0x118] sm:$0xff]
    %v3057 = vld [vmem:[%s5 + $0x120] sm:$0xff]
    %v3058 = vld [vmem:[%s5 + $0x128] sm:$0xff]
    %v3059 = vld [vmem:[%s5 + $0x130] sm:$0xff]
    %v3060 = vld [vmem:[%s5 + $0x138] sm:$0xff]
    %v3061 = vld [vmem:[%s5 + $0x140] sm:$0xff]
    %v3062 = vld [vmem:[%s5 + $0x148] sm:$0xff]
    %v3063 = vld [vmem:[%s5 + $0x150] sm:$0xff]
    %v3064 = vld [vmem:[%s5 + $0x158] sm:$0xff]
    %v3065 = vld [vmem:[%s5 + $0x160] sm:$0xff]
    %v3066 = vld [vmem:[%s5 + $0x168] sm:$0xff]
    %v3067 = vld [vmem:[%s5 + $0x170] sm:$0xff]
    %v3068 = vld [vmem:[%s5 + $0x178] sm:$0xff]
    %v3069 = vld [vmem:[%s5 + $0x180] sm:$0xff]
    %v3070 = vld [vmem:[%s5 + $0x188] sm:$0xff]
    %v3071 = vld [vmem:[%s5 + $0x190] sm:$0xff]
    %v3072 = vld [vmem:[%s5 + $0x198] sm:$0xff]
    %v3073 = vld [vmem:[%s5 + $0x1a0] sm:$0xff]
    %v3074 = vld [vmem:[%s5 + $0x1a8] sm:$0xff]
    %v3075 = vld [vmem:[%s5 + $0x1b0] sm:$0xff]
    %v3076 = vld [vmem:[%s5 + $0x1b8] sm:$0xff]
    %v3077 = vld [vmem:[%s5 + $0x1c0] sm:$0xff]
    %v3078 = vld [vmem:[%s5 + $0x1c8] sm:$0xff]
    %v3079 = vld [vmem:[%s5 + $0x1d0] sm:$0xff]
    %v3080 = vld [vmem:[%s5 + $0x1d8] sm:$0xff]
    %v3081 = vld [vmem:[%s5 + $0x1e0] sm:$0xff]
    %v3082 = vld [vmem:[%s5 + $0x1e8] sm:$0xff]
    %v3083 = vld [vmem:[%s5 + $0x1f0] sm:$0xff]
    %v3084 = vld [vmem:[%s5 + $0x1f8] sm:$0xff]
    %v3085 = vld [vmem:[%s5 + $0x200] sm:$0xff]
    %v3086 = vld [vmem:[%s5 + $0x208] sm:$0xff]
    %v3087 = vld [vmem:[%s5 + $0x210] sm:$0xff]
    %v3088 = vld [vmem:[%s5 + $0x218] sm:$0xff]
    %v3089 = vld [vmem:[%s5 + $0x220] sm:$0xff]
    %v3090 = vld [vmem:[%s5 + $0x228] sm:$0xff]
    %v3091 = vld [vmem:[%s5 + $0x230] sm:$0xff]
    %v3092 = vld [vmem:[%s5 + $0x238] sm:$0xff]
    %v3093 = vld [vmem:[%s5 + $0x240] sm:$0xff]
    %v3094 = vld [vmem:[%s5 + $0x248] sm:$0xff]
    %v3095 = vld [vmem:[%s5 + $0x250] sm:$0xff]
    %v3096 = vld [vmem:[%s5 + $0x258] sm:$0xff]
    %v3097 = vld [vmem:[%s5 + $0x260] sm:$0xff]
    %v3098 = vld [vmem:[%s5 + $0x268] sm:$0xff]
    %v3099 = vld [vmem:[%s5 + $0x270] sm:$0xff]
    %v3100 = vld [vmem:[%s5 + $0x278] sm:$0xff]
    %v3101 = vld [vmem:[%s5 + $0x280] sm:$0xff]
    %v3102 = vld [vmem:[%s5 + $0x288] sm:$0xff]
    %v3103 = vld [vmem:[%s5 + $0x290] sm:$0xff]
    %v3104 = vld [vmem:[%s5 + $0x298] sm:$0xff]
    %v3105 = vld [vmem:[%s5 + $0x2a0] sm:$0xff]
    %v3106 = vld [vmem:[%s5 + $0x2a8] sm:$0xff]
    %v3107 = vld [vmem:[%s5 + $0x2b0] sm:$0xff]
    %v3108 = vld [vmem:[%s5 + $0x2b8] sm:$0xff]
    %v3109 = vld [vmem:[%s5 + $0x2c0] sm:$0xff]
    %v3110 = vld [vmem:[%s5 + $0x2c8] sm:$0xff]
    %v3111 = vld [vmem:[%s5 + $0x2d0] sm:$0xff]
    %v3112 = vld [vmem:[%s5 + $0x2d8] sm:$0xff]
    %v3113 = vld [vmem:[%s5 + $0x2e0] sm:$0xff]
    %v3114 = vld [vmem:[%s5 + $0x2e8] sm:$0xff]
    %v3115 = vld [vmem:[%s5 + $0x2f0] sm:$0xff]
    %v3116 = vld [vmem:[%s5 + $0x2f8] sm:$0xff]
    %v3117 = vld [vmem:[%s5 + $0x300] sm:$0xff]
    %v3118 = vld [vmem:[%s5 + $0x308] sm:$0xff]
    %v3119 = vld [vmem:[%s5 + $0x310] sm:$0xff]
    %v3120 = vld [vmem:[%s5 + $0x318] sm:$0xff]
    %v3121 = vld [vmem:[%s5 + $0x320] sm:$0xff]
    %v3122 = vld [vmem:[%s5 + $0x328] sm:$0xff]
    %v3123 = vld [vmem:[%s5 + $0x330] sm:$0xff]
    %v3124 = vld [vmem:[%s5 + $0x338] sm:$0xff]
    %v3125 = vld [vmem:[%s5 + $0x340] sm:$0xff]
    %v3126 = vld [vmem:[%s5 + $0x348] sm:$0xff]
    %v3127 = vld [vmem:[%s5 + $0x350] sm:$0xff]
    %v3128 = vld [vmem:[%s5 + $0x358] sm:$0xff]
    %v3129 = vld [vmem:[%s5 + $0x360] sm:$0xff]
    %v3130 = vld [vmem:[%s5 + $0x368] sm:$0xff]
    %v3131 = vld [vmem:[%s5 + $0x370] sm:$0xff]
    %v3132 = vld [vmem:[%s5 + $0x378] sm:$0xff]
    %v3133 = vld [vmem:[%s5 + $0x380] sm:$0xff]
    %v3134 = vld [vmem:[%s5 + $0x388] sm:$0xff]
    %v3135 = vld [vmem:[%s5 + $0x390] sm:$0xff]
    %v3136 = vld [vmem:[%s5 + $0x398] sm:$0xff]
    %v3137 = vld [vmem:[%s5 + $0x3a0] sm:$0xff]
    %v3138 = vld [vmem:[%s5 + $0x3a8] sm:$0xff]
    %v3139 = vld [vmem:[%s5 + $0x3b0] sm:$0xff]
    %v3140 = vld [vmem:[%s5 + $0x3b8] sm:$0xff]
    %v3141 = vld [vmem:[%s5 + $0x3c0] sm:$0xff]
    %v3142 = vld [vmem:[%s5 + $0x3c8] sm:$0xff]
    %v3143 = vld [vmem:[%s5 + $0x3d0] sm:$0xff]
    %v3144 = vld [vmem:[%s5 + $0x3d8] sm:$0xff]
    %v3145 = vld [vmem:[%s5 + $0x3e0] sm:$0xff]
    %v3146 = vld [vmem:[%s5 + $0x3e8] sm:$0xff]
    %v3147 = vld [vmem:[%s5 + $0x3f0] sm:$0xff]
    %v3148 = vld [vmem:[%s5 + $0x3f8] sm:$0xff]
    %v3149 = vld [vmem:[%s5 + $0x400] sm:$0xff]
    %v3150 = vld [vmem:[%s5 + $0x408] sm:$0xff]
    %v3151 = vld [vmem:[%s5 + $0x410] sm:$0xff]
    %v3152 = vld [vmem:[%s5 + $0x418] sm:$0xff]
    %v3153 = vld [vmem:[%s5 + $0x420] sm:$0xff]
    %v3154 = vld [vmem:[%s5 + $0x428] sm:$0xff]
    %v3155 = vld [vmem:[%s5 + $0x430] sm:$0xff]
    %v3156 = vld [vmem:[%s5 + $0x438] sm:$0xff]
    %v3157 = vld [vmem:[%s5 + $0x440] sm:$0xff]
    %v3158 = vld [vmem:[%s5 + $0x448] sm:$0xff]
    %v3159 = vld [vmem:[%s5 + $0x450] sm:$0xff]
    %v3160 = vld [vmem:[%s5 + $0x458] sm:$0xff]
    %v3161 = vld [vmem:[%s5 + $0x460] sm:$0xff]
    %v3162 = vld [vmem:[%s5 + $0x468] sm:$0xff]
    %v3163 = vld [vmem:[%s5 + $0x470] sm:$0xff]
    %v3164 = vld [vmem:[%s5 + $0x478] sm:$0xff]
    %v3165 = vld [vmem:[%s5 + $0x480] sm:$0xff]
    %v3166 = vld [vmem:[%s5 + $0x488] sm:$0xff]
    %v3167 = vld [vmem:[%s5 + $0x490] sm:$0xff]
    %v3168 = vld [vmem:[%s5 + $0x498] sm:$0xff]
    %v3169 = vld [vmem:[%s5 + $0x4a0] sm:$0xff]
    %v3170 = vld [vmem:[%s5 + $0x4a8] sm:$0xff]
    %v3171 = vld [vmem:[%s5 + $0x4b0] sm:$0xff]
    %v3172 = vld [vmem:[%s5 + $0x4b8] sm:$0xff]
    %v3173 = vld [vmem:[%s5 + $0x4c0] sm:$0xff]
    %v3174 = vld [vmem:[%s5 + $0x4c8] sm:$0xff]
    %v3175 = vld [vmem:[%s5 + $0x4d0] sm:$0xff]
    %v3176 = vld [vmem:[%s5 + $0x4d8] sm:$0xff]
    %v3177 = vld [vmem:[%s5 + $0x4e0] sm:$0xff]
    %v3178 = vld [vmem:[%s5 + $0x4e8] sm:$0xff]
    %v3179 = vld [vmem:[%s5 + $0x4f0] sm:$0xff]
    %v3180 = vld [vmem:[%s5 + $0x4f8] sm:$0xff]
    %v3181 = vld [vmem:[%s5 + $0x500] sm:$0xff]
    %v3182 = vld [vmem:[%s5 + $0x508] sm:$0xff]
    %v3183 = vld [vmem:[%s5 + $0x510] sm:$0xff]
    %v3184 = vld [vmem:[%s5 + $0x518] sm:$0xff]
    %v3185 = vld [vmem:[%s5 + $0x520] sm:$0xff]
    %v3186 = vld [vmem:[%s5 + $0x528] sm:$0xff]
    %v3187 = vld [vmem:[%s5 + $0x530] sm:$0xff]
    %v3188 = vld [vmem:[%s5 + $0x538] sm:$0xff]
    %v3189 = vld [vmem:[%s5 + $0x540] sm:$0xff]
    %v3190 = vld [vmem:[%s5 + $0x548] sm:$0xff]
    %v3191 = vld [vmem:[%s5 + $0x550] sm:$0xff]
    %v3192 = vld [vmem:[%s5 + $0x558] sm:$0xff]
    %v3193 = vld [vmem:[%s5 + $0x560] sm:$0xff]
    %v3194 = vld [vmem:[%s5 + $0x568] sm:$0xff]
    %v3195 = vld [vmem:[%s5 + $0x570] sm:$0xff]
    %v3196 = vld [vmem:[%s5 + $0x578] sm:$0xff]
    %v3197 = vld [vmem:[%s5 + $0x580] sm:$0xff]
    %v3198 = vld [vmem:[%s5 + $0x588] sm:$0xff]
    %v3199 = vld [vmem:[%s5 + $0x590] sm:$0xff]
    %v3200 = vld [vmem:[%s5 + $0x598] sm:$0xff]
    %v3201 = vld [vmem:[%s5 + $0x5a0] sm:$0xff]
    %v3202 = vld [vmem:[%s5 + $0x5a8] sm:$0xff]
    %v3203 = vld [vmem:[%s5 + $0x5b0] sm:$0xff]
    %v3204 = vld [vmem:[%s5 + $0x5b8] sm:$0xff]
    %v3205 = vld [vmem:[%s5 + $0x5c0] sm:$0xff]
    %v3206 = vld [vmem:[%s5 + $0x5c8] sm:$0xff]
    %v3207 = vld [vmem:[%s5 + $0x5d0] sm:$0xff]
    %v3208 = vld [vmem:[%s5 + $0x5d8] sm:$0xff]
    %v3209 = vld [vmem:[%s5 + $0x5e0] sm:$0xff]
    %v3210 = vld [vmem:[%s5 + $0x5e8] sm:$0xff]
    %v3211 = vld [vmem:[%s5 + $0x5f0] sm:$0xff]
    %v3212 = vld [vmem:[%s5 + $0x5f8] sm:$0xff]
    %v3213 = vld [vmem:[%s5 + $0x600] sm:$0xff]
    %v3214 = vld [vmem:[%s5 + $0x608] sm:$0xff]
    %v3215 = vld [vmem:[%s5 + $0x610] sm:$0xff]
    %v3216 = vld [vmem:[%s5 + $0x618] sm:$0xff]
    %v3217 = vld [vmem:[%s5 + $0x620] sm:$0xff]
    %v3218 = vld [vmem:[%s5 + $0x628] sm:$0xff]
    %v3219 = vld [vmem:[%s5 + $0x630] sm:$0xff]
    %v3220 = vld [vmem:[%s5 + $0x638] sm:$0xff]
    %v3221 = vld [vmem:[%s5 + $0x640] sm:$0xff]
    %v3222 = vld [vmem:[%s5 + $0x648] sm:$0xff]
    %v3223 = vld [vmem:[%s5 + $0x650] sm:$0xff]
    %v3224 = vld [vmem:[%s5 + $0x658] sm:$0xff]
    %v3225 = vld [vmem:[%s5 + $0x660] sm:$0xff]
    %v3226 = vld [vmem:[%s5 + $0x668] sm:$0xff]
    %v3227 = vld [vmem:[%s5 + $0x670] sm:$0xff]
    %v3228 = vld [vmem:[%s5 + $0x678] sm:$0xff]
    %v3229 = vld [vmem:[%s5 + $0x680] sm:$0xff]
    %v3230 = vld [vmem:[%s5 + $0x688] sm:$0xff]
    %v3231 = vld [vmem:[%s5 + $0x690] sm:$0xff]
    %v3232 = vld [vmem:[%s5 + $0x698] sm:$0xff]
    %v3233 = vld [vmem:[%s5 + $0x6a0] sm:$0xff]
    %v3234 = vld [vmem:[%s5 + $0x6a8] sm:$0xff]
    %v3235 = vld [vmem:[%s5 + $0x6b0] sm:$0xff]
    %v3236 = vld [vmem:[%s5 + $0x6b8] sm:$0xff]
    %v3237 = vld [vmem:[%s5 + $0x6c0] sm:$0xff]
    %v3238 = vld [vmem:[%s5 + $0x6c8] sm:$0xff]
    %v3239 = vld [vmem:[%s5 + $0x6d0] sm:$0xff]
    %v3240 = vld [vmem:[%s5 + $0x6d8] sm:$0xff]
    %v3241 = vld [vmem:[%s5 + $0x6e0] sm:$0xff]
    %v3242 = vld [vmem:[%s5 + $0x6e8] sm:$0xff]
    %v3243 = vld [vmem:[%s5 + $0x6f0] sm:$0xff]
    %v3244 = vld [vmem:[%s5 + $0x6f8] sm:$0xff]
    %v3245 = vld [vmem:[%s5 + $0x700] sm:$0xff]
    %v3246 = vld [vmem:[%s5 + $0x708] sm:$0xff]
    %v3247 = vld [vmem:[%s5 + $0x710] sm:$0xff]
    %v3248 = vld [vmem:[%s5 + $0x718] sm:$0xff]
    %v3249 = vld [vmem:[%s5 + $0x720] sm:$0xff]
    %v3250 = vld [vmem:[%s5 + $0x728] sm:$0xff]
    %v3251 = vld [vmem:[%s5 + $0x730] sm:$0xff]
    %v3252 = vld [vmem:[%s5 + $0x738] sm:$0xff]
    %v3253 = vld [vmem:[%s5 + $0x740] sm:$0xff]
    %v3254 = vld [vmem:[%s5 + $0x748] sm:$0xff]
    %v3255 = vld [vmem:[%s5 + $0x750] sm:$0xff]
    %v3256 = vld [vmem:[%s5 + $0x758] sm:$0xff]
    %v3257 = vld [vmem:[%s5 + $0x760] sm:$0xff]
    %v3258 = vld [vmem:[%s5 + $0x768] sm:$0xff]
    %v3259 = vld [vmem:[%s5 + $0x770] sm:$0xff]
    %v3260 = vld [vmem:[%s5 + $0x778] sm:$0xff]
    %v3261 = vld [vmem:[%s5 + $0x780] sm:$0xff]
    %v3262 = vld [vmem:[%s5 + $0x788] sm:$0xff]
    %v3263 = vld [vmem:[%s5 + $0x790] sm:$0xff]
    %v3264 = vld [vmem:[%s5 + $0x798] sm:$0xff]
    %v3265 = vld [vmem:[%s5 + $0x7a0] sm:$0xff]
    %v3266 = vld [vmem:[%s5 + $0x7a8] sm:$0xff]
    %v3267 = vld [vmem:[%s5 + $0x7b0] sm:$0xff]
    %v3268 = vld [vmem:[%s5 + $0x7b8] sm:$0xff]
    %v3269 = vld [vmem:[%s5 + $0x7c0] sm:$0xff]
    %v3270 = vld [vmem:[%s5 + $0x7c8] sm:$0xff]
    %v3271 = vld [vmem:[%s5 + $0x7d0] sm:$0xff]
    %v3272 = vld [vmem:[%s5 + $0x7d8] sm:$0xff]
    %v3273 = vld [vmem:[%s5 + $0x7e0] sm:$0xff]
    %v3274 = vld [vmem:[%s5 + $0x7e8] sm:$0xff]
    %v3275 = vld [vmem:[%s5 + $0x7f0] sm:$0xff]
    %v3276 = vld [vmem:[%s5 + $0x7f8] sm:$0xff]
    %v3277 = vld [vmem:[%s6] sm:$0xff]
    %v3279 = vlaneseq
    %v3280 = vshrl.u32 %v3279, 7
    %v3281 = vsub.s32 0, %v3280
    %v3282 = vrot.slane %v3277, %v3281
    %v3283 = vlaneseq
    %v3284 = vshrl.u32 %v3283, 7
    %v3285 = vsub.s32 1, %v3284
    %v3286 = vrot.slane %v3277, %v3285
    %v3287 = vlaneseq
    %v3288 = vshrl.u32 %v3287, 7
    %v3289 = vsub.s32 2, %v3288
    %v3290 = vrot.slane %v3277, %v3289
    %v3291 = vlaneseq
    %v3292 = vshrl.u32 %v3291, 7
    %v3293 = vsub.s32 3, %v3292
    %v3294 = vrot.slane %v3277, %v3293
    %v3295 = vlaneseq
    %v3296 = vshrl.u32 %v3295, 7
    %v3297 = vsub.s32 4, %v3296
    %v3298 = vrot.slane %v3277, %v3297
    %v3299 = vlaneseq
    %v3300 = vshrl.u32 %v3299, 7
    %v3301 = vsub.s32 5, %v3300
    %v3302 = vrot.slane %v3277, %v3301
    %v3303 = vlaneseq
    %v3304 = vshrl.u32 %v3303, 7
    %v3305 = vsub.s32 6, %v3304
    %v3306 = vrot.slane %v3277, %v3305
    %v3307 = vlaneseq
    %v3308 = vshrl.u32 %v3307, 7
    %v3309 = vsub.s32 7, %v3308
    %v3310 = vrot.slane %v3277, %v3309
    %v3575 = vunpack.c.l.b16 %v3021
    %v3576 = vunpack.c.h.b16 %v3021
    %v3577 = vunpack.c.l.b16 %v3022
    %v3578 = vunpack.c.h.b16 %v3022
    %v3579 = vunpack.c.l.b16 %v3023
    %v3580 = vunpack.c.h.b16 %v3023
    %v3581 = vunpack.c.l.b16 %v3024
    %v3582 = vunpack.c.h.b16 %v3024
    %v3583 = vunpack.c.l.b16 %v3025
    %v3584 = vunpack.c.h.b16 %v3025
    %v3585 = vunpack.c.l.b16 %v3026
    %v3586 = vunpack.c.h.b16 %v3026
    %v3587 = vunpack.c.l.b16 %v3027
    %v3588 = vunpack.c.h.b16 %v3027
    %v3589 = vunpack.c.l.b16 %v3028
    %v3590 = vunpack.c.h.b16 %v3028
    %v3591 = vunpack.c.l.b16 %v3029
    %v3592 = vunpack.c.h.b16 %v3029
    %v3593 = vunpack.c.l.b16 %v3030
    %v3594 = vunpack.c.h.b16 %v3030
    %v3595 = vunpack.c.l.b16 %v3031
    %v3596 = vunpack.c.h.b16 %v3031
    %v3597 = vunpack.c.l.b16 %v3032
    %v3598 = vunpack.c.h.b16 %v3032
    %v3599 = vunpack.c.l.b16 %v3033
    %v3600 = vunpack.c.h.b16 %v3033
    %v3601 = vunpack.c.l.b16 %v3034
    %v3602 = vunpack.c.h.b16 %v3034
    %v3603 = vunpack.c.l.b16 %v3035
    %v3604 = vunpack.c.h.b16 %v3035
    %v3605 = vunpack.c.l.b16 %v3036
    %v3606 = vunpack.c.h.b16 %v3036
    %v3607 = vunpack.c.l.b16 %v3037
    %v3608 = vunpack.c.h.b16 %v3037
    %v3609 = vunpack.c.l.b16 %v3038
    %v3610 = vunpack.c.h.b16 %v3038
    %v3611 = vunpack.c.l.b16 %v3039
    %v3612 = vunpack.c.h.b16 %v3039
    %v3613 = vunpack.c.l.b16 %v3040
    %v3614 = vunpack.c.h.b16 %v3040
    %v3615 = vunpack.c.l.b16 %v3041
    %v3616 = vunpack.c.h.b16 %v3041
    %v3617 = vunpack.c.l.b16 %v3042
    %v3618 = vunpack.c.h.b16 %v3042
    %v3619 = vunpack.c.l.b16 %v3043
    %v3620 = vunpack.c.h.b16 %v3043
    %v3621 = vunpack.c.l.b16 %v3044
    %v3622 = vunpack.c.h.b16 %v3044
    %v3623 = vunpack.c.l.b16 %v3045
    %v3624 = vunpack.c.h.b16 %v3045
    %v3625 = vunpack.c.l.b16 %v3046
    %v3626 = vunpack.c.h.b16 %v3046
    %v3627 = vunpack.c.l.b16 %v3047
    %v3628 = vunpack.c.h.b16 %v3047
    %v3629 = vunpack.c.l.b16 %v3048
    %v3630 = vunpack.c.h.b16 %v3048
    %v3631 = vunpack.c.l.b16 %v3049
    %v3632 = vunpack.c.h.b16 %v3049
    %v3633 = vunpack.c.l.b16 %v3050
    %v3634 = vunpack.c.h.b16 %v3050
    %v3635 = vunpack.c.l.b16 %v3051
    %v3636 = vunpack.c.h.b16 %v3051
    %v3637 = vunpack.c.l.b16 %v3052
    %v3638 = vunpack.c.h.b16 %v3052
    %v3639 = vunpack.c.l.b16 %v3053
    %v3640 = vunpack.c.h.b16 %v3053
    %v3641 = vunpack.c.l.b16 %v3054
    %v3642 = vunpack.c.h.b16 %v3054
    %v3643 = vunpack.c.l.b16 %v3055
    %v3644 = vunpack.c.h.b16 %v3055
    %v3645 = vunpack.c.l.b16 %v3056
    %v3646 = vunpack.c.h.b16 %v3056
    %v3647 = vunpack.c.l.b16 %v3057
    %v3648 = vunpack.c.h.b16 %v3057
    %v3649 = vunpack.c.l.b16 %v3058
    %v3650 = vunpack.c.h.b16 %v3058
    %v3651 = vunpack.c.l.b16 %v3059
    %v3652 = vunpack.c.h.b16 %v3059
    %v3653 = vunpack.c.l.b16 %v3060
    %v3654 = vunpack.c.h.b16 %v3060
    %v3655 = vunpack.c.l.b16 %v3061
    %v3656 = vunpack.c.h.b16 %v3061
    %v3657 = vunpack.c.l.b16 %v3062
    %v3658 = vunpack.c.h.b16 %v3062
    %v3659 = vunpack.c.l.b16 %v3063
    %v3660 = vunpack.c.h.b16 %v3063
    %v3661 = vunpack.c.l.b16 %v3064
    %v3662 = vunpack.c.h.b16 %v3064
    %v3663 = vunpack.c.l.b16 %v3065
    %v3664 = vunpack.c.h.b16 %v3065
    %v3665 = vunpack.c.l.b16 %v3066
    %v3666 = vunpack.c.h.b16 %v3066
    %v3667 = vunpack.c.l.b16 %v3067
    %v3668 = vunpack.c.h.b16 %v3067
    %v3669 = vunpack.c.l.b16 %v3068
    %v3670 = vunpack.c.h.b16 %v3068
    %v3671 = vunpack.c.l.b16 %v3069
    %v3672 = vunpack.c.h.b16 %v3069
    %v3673 = vunpack.c.l.b16 %v3070
    %v3674 = vunpack.c.h.b16 %v3070
    %v3675 = vunpack.c.l.b16 %v3071
    %v3676 = vunpack.c.h.b16 %v3071
    %v3677 = vunpack.c.l.b16 %v3072
    %v3678 = vunpack.c.h.b16 %v3072
    %v3679 = vunpack.c.l.b16 %v3073
    %v3680 = vunpack.c.h.b16 %v3073
    %v3681 = vunpack.c.l.b16 %v3074
    %v3682 = vunpack.c.h.b16 %v3074
    %v3683 = vunpack.c.l.b16 %v3075
    %v3684 = vunpack.c.h.b16 %v3075
    %v3685 = vunpack.c.l.b16 %v3076
    %v3686 = vunpack.c.h.b16 %v3076
    %v3687 = vunpack.c.l.b16 %v3077
    %v3688 = vunpack.c.h.b16 %v3077
    %v3689 = vunpack.c.l.b16 %v3078
    %v3690 = vunpack.c.h.b16 %v3078
    %v3691 = vunpack.c.l.b16 %v3079
    %v3692 = vunpack.c.h.b16 %v3079
    %v3693 = vunpack.c.l.b16 %v3080
    %v3694 = vunpack.c.h.b16 %v3080
    %v3695 = vunpack.c.l.b16 %v3081
    %v3696 = vunpack.c.h.b16 %v3081
    %v3697 = vunpack.c.l.b16 %v3082
    %v3698 = vunpack.c.h.b16 %v3082
    %v3699 = vunpack.c.l.b16 %v3083
    %v3700 = vunpack.c.h.b16 %v3083
    %v3701 = vunpack.c.l.b16 %v3084
    %v3702 = vunpack.c.h.b16 %v3084
    %v3703 = vunpack.c.l.b16 %v3085
    %v3704 = vunpack.c.h.b16 %v3085
    %v3705 = vunpack.c.l.b16 %v3086
    %v3706 = vunpack.c.h.b16 %v3086
    %v3707 = vunpack.c.l.b16 %v3087
    %v3708 = vunpack.c.h.b16 %v3087
    %v3709 = vunpack.c.l.b16 %v3088
    %v3710 = vunpack.c.h.b16 %v3088
    %v3711 = vunpack.c.l.b16 %v3089
    %v3712 = vunpack.c.h.b16 %v3089
    %v3713 = vunpack.c.l.b16 %v3090
    %v3714 = vunpack.c.h.b16 %v3090
    %v3715 = vunpack.c.l.b16 %v3091
    %v3716 = vunpack.c.h.b16 %v3091
    %v3717 = vunpack.c.l.b16 %v3092
    %v3718 = vunpack.c.h.b16 %v3092
    %v3719 = vunpack.c.l.b16 %v3093
    %v3720 = vunpack.c.h.b16 %v3093
    %v3721 = vunpack.c.l.b16 %v3094
    %v3722 = vunpack.c.h.b16 %v3094
    %v3723 = vunpack.c.l.b16 %v3095
    %v3724 = vunpack.c.h.b16 %v3095
    %v3725 = vunpack.c.l.b16 %v3096
    %v3726 = vunpack.c.h.b16 %v3096
    %v3727 = vunpack.c.l.b16 %v3097
    %v3728 = vunpack.c.h.b16 %v3097
    %v3729 = vunpack.c.l.b16 %v3098
    %v3730 = vunpack.c.h.b16 %v3098
    %v3731 = vunpack.c.l.b16 %v3099
    %v3732 = vunpack.c.h.b16 %v3099
    %v3733 = vunpack.c.l.b16 %v3100
    %v3734 = vunpack.c.h.b16 %v3100
    %v3735 = vunpack.c.l.b16 %v3101
    %v3736 = vunpack.c.h.b16 %v3101
    %v3737 = vunpack.c.l.b16 %v3102
    %v3738 = vunpack.c.h.b16 %v3102
    %v3739 = vunpack.c.l.b16 %v3103
    %v3740 = vunpack.c.h.b16 %v3103
    %v3741 = vunpack.c.l.b16 %v3104
    %v3742 = vunpack.c.h.b16 %v3104
    %v3743 = vunpack.c.l.b16 %v3105
    %v3744 = vunpack.c.h.b16 %v3105
    %v3745 = vunpack.c.l.b16 %v3106
    %v3746 = vunpack.c.h.b16 %v3106
    %v3747 = vunpack.c.l.b16 %v3107
    %v3748 = vunpack.c.h.b16 %v3107
    %v3749 = vunpack.c.l.b16 %v3108
    %v3750 = vunpack.c.h.b16 %v3108
    %v3751 = vunpack.c.l.b16 %v3109
    %v3752 = vunpack.c.h.b16 %v3109
    %v3753 = vunpack.c.l.b16 %v3110
    %v3754 = vunpack.c.h.b16 %v3110
    %v3755 = vunpack.c.l.b16 %v3111
    %v3756 = vunpack.c.h.b16 %v3111
    %v3757 = vunpack.c.l.b16 %v3112
    %v3758 = vunpack.c.h.b16 %v3112
    %v3759 = vunpack.c.l.b16 %v3113
    %v3760 = vunpack.c.h.b16 %v3113
    %v3761 = vunpack.c.l.b16 %v3114
    %v3762 = vunpack.c.h.b16 %v3114
    %v3763 = vunpack.c.l.b16 %v3115
    %v3764 = vunpack.c.h.b16 %v3115
    %v3765 = vunpack.c.l.b16 %v3116
    %v3766 = vunpack.c.h.b16 %v3116
    %v3767 = vunpack.c.l.b16 %v3117
    %v3768 = vunpack.c.h.b16 %v3117
    %v3769 = vunpack.c.l.b16 %v3118
    %v3770 = vunpack.c.h.b16 %v3118
    %v3771 = vunpack.c.l.b16 %v3119
    %v3772 = vunpack.c.h.b16 %v3119
    %v3773 = vunpack.c.l.b16 %v3120
    %v3774 = vunpack.c.h.b16 %v3120
    %v3775 = vunpack.c.l.b16 %v3121
    %v3776 = vunpack.c.h.b16 %v3121
    %v3777 = vunpack.c.l.b16 %v3122
    %v3778 = vunpack.c.h.b16 %v3122
    %v3779 = vunpack.c.l.b16 %v3123
    %v3780 = vunpack.c.h.b16 %v3123
    %v3781 = vunpack.c.l.b16 %v3124
    %v3782 = vunpack.c.h.b16 %v3124
    %v3783 = vunpack.c.l.b16 %v3125
    %v3784 = vunpack.c.h.b16 %v3125
    %v3785 = vunpack.c.l.b16 %v3126
    %v3786 = vunpack.c.h.b16 %v3126
    %v3787 = vunpack.c.l.b16 %v3127
    %v3788 = vunpack.c.h.b16 %v3127
    %v3789 = vunpack.c.l.b16 %v3128
    %v3790 = vunpack.c.h.b16 %v3128
    %v3791 = vunpack.c.l.b16 %v3129
    %v3792 = vunpack.c.h.b16 %v3129
    %v3793 = vunpack.c.l.b16 %v3130
    %v3794 = vunpack.c.h.b16 %v3130
    %v3795 = vunpack.c.l.b16 %v3131
    %v3796 = vunpack.c.h.b16 %v3131
    %v3797 = vunpack.c.l.b16 %v3132
    %v3798 = vunpack.c.h.b16 %v3132
    %v3799 = vunpack.c.l.b16 %v3133
    %v3800 = vunpack.c.h.b16 %v3133
    %v3801 = vunpack.c.l.b16 %v3134
    %v3802 = vunpack.c.h.b16 %v3134
    %v3803 = vunpack.c.l.b16 %v3135
    %v3804 = vunpack.c.h.b16 %v3135
    %v3805 = vunpack.c.l.b16 %v3136
    %v3806 = vunpack.c.h.b16 %v3136
    %v3807 = vunpack.c.l.b16 %v3137
    %v3808 = vunpack.c.h.b16 %v3137
    %v3809 = vunpack.c.l.b16 %v3138
    %v3810 = vunpack.c.h.b16 %v3138
    %v3811 = vunpack.c.l.b16 %v3139
    %v3812 = vunpack.c.h.b16 %v3139
    %v3813 = vunpack.c.l.b16 %v3140
    %v3814 = vunpack.c.h.b16 %v3140
    %v3815 = vunpack.c.l.b16 %v3141
    %v3816 = vunpack.c.h.b16 %v3141
    %v3817 = vunpack.c.l.b16 %v3142
    %v3818 = vunpack.c.h.b16 %v3142
    %v3819 = vunpack.c.l.b16 %v3143
    %v3820 = vunpack.c.h.b16 %v3143
    %v3821 = vunpack.c.l.b16 %v3144
    %v3822 = vunpack.c.h.b16 %v3144
    %v3823 = vunpack.c.l.b16 %v3145
    %v3824 = vunpack.c.h.b16 %v3145
    %v3825 = vunpack.c.l.b16 %v3146
    %v3826 = vunpack.c.h.b16 %v3146
    %v3827 = vunpack.c.l.b16 %v3147
    %v3828 = vunpack.c.h.b16 %v3147
    %v3829 = vunpack.c.l.b16 %v3148
    %v3830 = vunpack.c.h.b16 %v3148
    %v3831 = vunpack.c.l.b16 %v3149
    %v3832 = vunpack.c.h.b16 %v3149
    %v3833 = vunpack.c.l.b16 %v3150
    %v3834 = vunpack.c.h.b16 %v3150
    %v3835 = vunpack.c.l.b16 %v3151
    %v3836 = vunpack.c.h.b16 %v3151
    %v3837 = vunpack.c.l.b16 %v3152
    %v3838 = vunpack.c.h.b16 %v3152
    %v3839 = vunpack.c.l.b16 %v3153
    %v3840 = vunpack.c.h.b16 %v3153
    %v3841 = vunpack.c.l.b16 %v3154
    %v3842 = vunpack.c.h.b16 %v3154
    %v3843 = vunpack.c.l.b16 %v3155
    %v3844 = vunpack.c.h.b16 %v3155
    %v3845 = vunpack.c.l.b16 %v3156
    %v3846 = vunpack.c.h.b16 %v3156
    %v3847 = vunpack.c.l.b16 %v3157
    %v3848 = vunpack.c.h.b16 %v3157
    %v3849 = vunpack.c.l.b16 %v3158
    %v3850 = vunpack.c.h.b16 %v3158
    %v3851 = vunpack.c.l.b16 %v3159
    %v3852 = vunpack.c.h.b16 %v3159
    %v3853 = vunpack.c.l.b16 %v3160
    %v3854 = vunpack.c.h.b16 %v3160
    %v3855 = vunpack.c.l.b16 %v3161
    %v3856 = vunpack.c.h.b16 %v3161
    %v3857 = vunpack.c.l.b16 %v3162
    %v3858 = vunpack.c.h.b16 %v3162
    %v3859 = vunpack.c.l.b16 %v3163
    %v3860 = vunpack.c.h.b16 %v3163
    %v3861 = vunpack.c.l.b16 %v3164
    %v3862 = vunpack.c.h.b16 %v3164
    %v3863 = vunpack.c.l.b16 %v3165
    %v3864 = vunpack.c.h.b16 %v3165
    %v3865 = vunpack.c.l.b16 %v3166
    %v3866 = vunpack.c.h.b16 %v3166
    %v3867 = vunpack.c.l.b16 %v3167
    %v3868 = vunpack.c.h.b16 %v3167
    %v3869 = vunpack.c.l.b16 %v3168
    %v3870 = vunpack.c.h.b16 %v3168
    %v3871 = vunpack.c.l.b16 %v3169
    %v3872 = vunpack.c.h.b16 %v3169
    %v3873 = vunpack.c.l.b16 %v3170
    %v3874 = vunpack.c.h.b16 %v3170
    %v3875 = vunpack.c.l.b16 %v3171
    %v3876 = vunpack.c.h.b16 %v3171
    %v3877 = vunpack.c.l.b16 %v3172
    %v3878 = vunpack.c.h.b16 %v3172
    %v3879 = vunpack.c.l.b16 %v3173
    %v3880 = vunpack.c.h.b16 %v3173
    %v3881 = vunpack.c.l.b16 %v3174
    %v3882 = vunpack.c.h.b16 %v3174
    %v3883 = vunpack.c.l.b16 %v3175
    %v3884 = vunpack.c.h.b16 %v3175
    %v3885 = vunpack.c.l.b16 %v3176
    %v3886 = vunpack.c.h.b16 %v3176
    %v3887 = vunpack.c.l.b16 %v3177
    %v3888 = vunpack.c.h.b16 %v3177
    %v3889 = vunpack.c.l.b16 %v3178
    %v3890 = vunpack.c.h.b16 %v3178
    %v3891 = vunpack.c.l.b16 %v3179
    %v3892 = vunpack.c.h.b16 %v3179
    %v3893 = vunpack.c.l.b16 %v3180
    %v3894 = vunpack.c.h.b16 %v3180
    %v3895 = vunpack.c.l.b16 %v3181
    %v3896 = vunpack.c.h.b16 %v3181
    %v3897 = vunpack.c.l.b16 %v3182
    %v3898 = vunpack.c.h.b16 %v3182
    %v3899 = vunpack.c.l.b16 %v3183
    %v3900 = vunpack.c.h.b16 %v3183
    %v3901 = vunpack.c.l.b16 %v3184
    %v3902 = vunpack.c.h.b16 %v3184
    %v3903 = vunpack.c.l.b16 %v3185
    %v3904 = vunpack.c.h.b16 %v3185
    %v3905 = vunpack.c.l.b16 %v3186
    %v3906 = vunpack.c.h.b16 %v3186
    %v3907 = vunpack.c.l.b16 %v3187
    %v3908 = vunpack.c.h.b16 %v3187
    %v3909 = vunpack.c.l.b16 %v3188
    %v3910 = vunpack.c.h.b16 %v3188
    %v3911 = vunpack.c.l.b16 %v3189
    %v3912 = vunpack.c.h.b16 %v3189
    %v3913 = vunpack.c.l.b16 %v3190
    %v3914 = vunpack.c.h.b16 %v3190
    %v3915 = vunpack.c.l.b16 %v3191
    %v3916 = vunpack.c.h.b16 %v3191
    %v3917 = vunpack.c.l.b16 %v3192
    %v3918 = vunpack.c.h.b16 %v3192
    %v3919 = vunpack.c.l.b16 %v3193
    %v3920 = vunpack.c.h.b16 %v3193
    %v3921 = vunpack.c.l.b16 %v3194
    %v3922 = vunpack.c.h.b16 %v3194
    %v3923 = vunpack.c.l.b16 %v3195
    %v3924 = vunpack.c.h.b16 %v3195
    %v3925 = vunpack.c.l.b16 %v3196
    %v3926 = vunpack.c.h.b16 %v3196
    %v3927 = vunpack.c.l.b16 %v3197
    %v3928 = vunpack.c.h.b16 %v3197
    %v3929 = vunpack.c.l.b16 %v3198
    %v3930 = vunpack.c.h.b16 %v3198
    %v3931 = vunpack.c.l.b16 %v3199
    %v3932 = vunpack.c.h.b16 %v3199
    %v3933 = vunpack.c.l.b16 %v3200
    %v3934 = vunpack.c.h.b16 %v3200
    %v3935 = vunpack.c.l.b16 %v3201
    %v3936 = vunpack.c.h.b16 %v3201
    %v3937 = vunpack.c.l.b16 %v3202
    %v3938 = vunpack.c.h.b16 %v3202
    %v3939 = vunpack.c.l.b16 %v3203
    %v3940 = vunpack.c.h.b16 %v3203
    %v3941 = vunpack.c.l.b16 %v3204
    %v3942 = vunpack.c.h.b16 %v3204
    %v3943 = vunpack.c.l.b16 %v3205
    %v3944 = vunpack.c.h.b16 %v3205
    %v3945 = vunpack.c.l.b16 %v3206
    %v3946 = vunpack.c.h.b16 %v3206
    %v3947 = vunpack.c.l.b16 %v3207
    %v3948 = vunpack.c.h.b16 %v3207
    %v3949 = vunpack.c.l.b16 %v3208
    %v3950 = vunpack.c.h.b16 %v3208
    %v3951 = vunpack.c.l.b16 %v3209
    %v3952 = vunpack.c.h.b16 %v3209
    %v3953 = vunpack.c.l.b16 %v3210
    %v3954 = vunpack.c.h.b16 %v3210
    %v3955 = vunpack.c.l.b16 %v3211
    %v3956 = vunpack.c.h.b16 %v3211
    %v3957 = vunpack.c.l.b16 %v3212
    %v3958 = vunpack.c.h.b16 %v3212
    %v3959 = vunpack.c.l.b16 %v3213
    %v3960 = vunpack.c.h.b16 %v3213
    %v3961 = vunpack.c.l.b16 %v3214
    %v3962 = vunpack.c.h.b16 %v3214
    %v3963 = vunpack.c.l.b16 %v3215
    %v3964 = vunpack.c.h.b16 %v3215
    %v3965 = vunpack.c.l.b16 %v3216
    %v3966 = vunpack.c.h.b16 %v3216
    %v3967 = vunpack.c.l.b16 %v3217
    %v3968 = vunpack.c.h.b16 %v3217
    %v3969 = vunpack.c.l.b16 %v3218
    %v3970 = vunpack.c.h.b16 %v3218
    %v3971 = vunpack.c.l.b16 %v3219
    %v3972 = vunpack.c.h.b16 %v3219
    %v3973 = vunpack.c.l.b16 %v3220
    %v3974 = vunpack.c.h.b16 %v3220
    %v3975 = vunpack.c.l.b16 %v3221
    %v3976 = vunpack.c.h.b16 %v3221
    %v3977 = vunpack.c.l.b16 %v3222
    %v3978 = vunpack.c.h.b16 %v3222
    %v3979 = vunpack.c.l.b16 %v3223
    %v3980 = vunpack.c.h.b16 %v3223
    %v3981 = vunpack.c.l.b16 %v3224
    %v3982 = vunpack.c.h.b16 %v3224
    %v3983 = vunpack.c.l.b16 %v3225
    %v3984 = vunpack.c.h.b16 %v3225
    %v3985 = vunpack.c.l.b16 %v3226
    %v3986 = vunpack.c.h.b16 %v3226
    %v3987 = vunpack.c.l.b16 %v3227
    %v3988 = vunpack.c.h.b16 %v3227
    %v3989 = vunpack.c.l.b16 %v3228
    %v3990 = vunpack.c.h.b16 %v3228
    %v3991 = vunpack.c.l.b16 %v3229
    %v3992 = vunpack.c.h.b16 %v3229
    %v3993 = vunpack.c.l.b16 %v3230
    %v3994 = vunpack.c.h.b16 %v3230
    %v3995 = vunpack.c.l.b16 %v3231
    %v3996 = vunpack.c.h.b16 %v3231
    %v3997 = vunpack.c.l.b16 %v3232
    %v3998 = vunpack.c.h.b16 %v3232
    %v3999 = vunpack.c.l.b16 %v3233
    %v4000 = vunpack.c.h.b16 %v3233
    %v4001 = vunpack.c.l.b16 %v3234
    %v4002 = vunpack.c.h.b16 %v3234
    %v4003 = vunpack.c.l.b16 %v3235
    %v4004 = vunpack.c.h.b16 %v3235
    %v4005 = vunpack.c.l.b16 %v3236
    %v4006 = vunpack.c.h.b16 %v3236
    %v4007 = vunpack.c.l.b16 %v3237
    %v4008 = vunpack.c.h.b16 %v3237
    %v4009 = vunpack.c.l.b16 %v3238
    %v4010 = vunpack.c.h.b16 %v3238
    %v4011 = vunpack.c.l.b16 %v3239
    %v4012 = vunpack.c.h.b16 %v3239
    %v4013 = vunpack.c.l.b16 %v3240
    %v4014 = vunpack.c.h.b16 %v3240
    %v4015 = vunpack.c.l.b16 %v3241
    %v4016 = vunpack.c.h.b16 %v3241
    %v4017 = vunpack.c.l.b16 %v3242
    %v4018 = vunpack.c.h.b16 %v3242
    %v4019 = vunpack.c.l.b16 %v3243
    %v4020 = vunpack.c.h.b16 %v3243
    %v4021 = vunpack.c.l.b16 %v3244
    %v4022 = vunpack.c.h.b16 %v3244
    %v4023 = vunpack.c.l.b16 %v3245
    %v4024 = vunpack.c.h.b16 %v3245
    %v4025 = vunpack.c.l.b16 %v3246
    %v4026 = vunpack.c.h.b16 %v3246
    %v4027 = vunpack.c.l.b16 %v3247
    %v4028 = vunpack.c.h.b16 %v3247
    %v4029 = vunpack.c.l.b16 %v3248
    %v4030 = vunpack.c.h.b16 %v3248
    %v4031 = vunpack.c.l.b16 %v3249
    %v4032 = vunpack.c.h.b16 %v3249
    %v4033 = vunpack.c.l.b16 %v3250
    %v4034 = vunpack.c.h.b16 %v3250
    %v4035 = vunpack.c.l.b16 %v3251
    %v4036 = vunpack.c.h.b16 %v3251
    %v4037 = vunpack.c.l.b16 %v3252
    %v4038 = vunpack.c.h.b16 %v3252
    %v4039 = vunpack.c.l.b16 %v3253
    %v4040 = vunpack.c.h.b16 %v3253
    %v4041 = vunpack.c.l.b16 %v3254
    %v4042 = vunpack.c.h.b16 %v3254
    %v4043 = vunpack.c.l.b16 %v3255
    %v4044 = vunpack.c.h.b16 %v3255
    %v4045 = vunpack.c.l.b16 %v3256
    %v4046 = vunpack.c.h.b16 %v3256
    %v4047 = vunpack.c.l.b16 %v3257
    %v4048 = vunpack.c.h.b16 %v3257
    %v4049 = vunpack.c.l.b16 %v3258
    %v4050 = vunpack.c.h.b16 %v3258
    %v4051 = vunpack.c.l.b16 %v3259
    %v4052 = vunpack.c.h.b16 %v3259
    %v4053 = vunpack.c.l.b16 %v3260
    %v4054 = vunpack.c.h.b16 %v3260
    %v4055 = vunpack.c.l.b16 %v3261
    %v4056 = vunpack.c.h.b16 %v3261
    %v4057 = vunpack.c.l.b16 %v3262
    %v4058 = vunpack.c.h.b16 %v3262
    %v4059 = vunpack.c.l.b16 %v3263
    %v4060 = vunpack.c.h.b16 %v3263
    %v4061 = vunpack.c.l.b16 %v3264
    %v4062 = vunpack.c.h.b16 %v3264
    %v4063 = vunpack.c.l.b16 %v3265
    %v4064 = vunpack.c.h.b16 %v3265
    %v4065 = vunpack.c.l.b16 %v3266
    %v4066 = vunpack.c.h.b16 %v3266
    %v4067 = vunpack.c.l.b16 %v3267
    %v4068 = vunpack.c.h.b16 %v3267
    %v4069 = vunpack.c.l.b16 %v3268
    %v4070 = vunpack.c.h.b16 %v3268
    %v4071 = vunpack.c.l.b16 %v3269
    %v4072 = vunpack.c.h.b16 %v3269
    %v4073 = vunpack.c.l.b16 %v3270
    %v4074 = vunpack.c.h.b16 %v3270
    %v4075 = vunpack.c.l.b16 %v3271
    %v4076 = vunpack.c.h.b16 %v3271
    %v4077 = vunpack.c.l.b16 %v3272
    %v4078 = vunpack.c.h.b16 %v3272
    %v4079 = vunpack.c.l.b16 %v3273
    %v4080 = vunpack.c.h.b16 %v3273
    %v4081 = vunpack.c.l.b16 %v3274
    %v4082 = vunpack.c.h.b16 %v3274
    %v4083 = vunpack.c.l.b16 %v3275
    %v4084 = vunpack.c.h.b16 %v3275
    %v4085 = vunpack.c.l.b16 %v3276
    %v4086 = vunpack.c.h.b16 %v3276
    %v4087 = vpack.c.b16 %v3583, %v3575
    %v4088 = vpack.c.b16 %v3584, %v3576
    %v4089 = vpack.c.b16 %v3585, %v3577
    %v4090 = vpack.c.b16 %v3586, %v3578
    %v4091 = vpack.c.b16 %v3587, %v3579
    %v4092 = vpack.c.b16 %v3588, %v3580
    %v4093 = vpack.c.b16 %v3589, %v3581
    %v4094 = vpack.c.b16 %v3590, %v3582
    %v4095 = vpack.c.b16 %v3599, %v3591
    %v4096 = vpack.c.b16 %v3600, %v3592
    %v4097 = vpack.c.b16 %v3601, %v3593
    %v4098 = vpack.c.b16 %v3602, %v3594
    %v4099 = vpack.c.b16 %v3603, %v3595
    %v4100 = vpack.c.b16 %v3604, %v3596
    %v4101 = vpack.c.b16 %v3605, %v3597
    %v4102 = vpack.c.b16 %v3606, %v3598
    %v4103 = vpack.c.b16 %v3615, %v3607
    %v4104 = vpack.c.b16 %v3616, %v3608
    %v4105 = vpack.c.b16 %v3617, %v3609
    %v4106 = vpack.c.b16 %v3618, %v3610
    %v4107 = vpack.c.b16 %v3619, %v3611
    %v4108 = vpack.c.b16 %v3620, %v3612
    %v4109 = vpack.c.b16 %v3621, %v3613
    %v4110 = vpack.c.b16 %v3622, %v3614
    %v4111 = vpack.c.b16 %v3631, %v3623
    %v4112 = vpack.c.b16 %v3632, %v3624
    %v4113 = vpack.c.b16 %v3633, %v3625
    %v4114 = vpack.c.b16 %v3634, %v3626
    %v4115 = vpack.c.b16 %v3635, %v3627
    %v4116 = vpack.c.b16 %v3636, %v3628
    %v4117 = vpack.c.b16 %v3637, %v3629
    %v4118 = vpack.c.b16 %v3638, %v3630
    %v4119 = vpack.c.b16 %v3647, %v3639
    %v4120 = vpack.c.b16 %v3648, %v3640
    %v4121 = vpack.c.b16 %v3649, %v3641
    %v4122 = vpack.c.b16 %v3650, %v3642
    %v4123 = vpack.c.b16 %v3651, %v3643
    %v4124 = vpack.c.b16 %v3652, %v3644
    %v4125 = vpack.c.b16 %v3653, %v3645
    %v4126 = vpack.c.b16 %v3654, %v3646
    %v4127 = vpack.c.b16 %v3663, %v3655
    %v4128 = vpack.c.b16 %v3664, %v3656
    %v4129 = vpack.c.b16 %v3665, %v3657
    %v4130 = vpack.c.b16 %v3666, %v3658
    %v4131 = vpack.c.b16 %v3667, %v3659
    %v4132 = vpack.c.b16 %v3668, %v3660
    %v4133 = vpack.c.b16 %v3669, %v3661
    %v4134 = vpack.c.b16 %v3670, %v3662
    %v4135 = vpack.c.b16 %v3679, %v3671
    %v4136 = vpack.c.b16 %v3680, %v3672
    %v4137 = vpack.c.b16 %v3681, %v3673
    %v4138 = vpack.c.b16 %v3682, %v3674
    %v4139 = vpack.c.b16 %v3683, %v3675
    %v4140 = vpack.c.b16 %v3684, %v3676
    %v4141 = vpack.c.b16 %v3685, %v3677
    %v4142 = vpack.c.b16 %v3686, %v3678
    %v4143 = vpack.c.b16 %v3695, %v3687
    %v4144 = vpack.c.b16 %v3696, %v3688
    %v4145 = vpack.c.b16 %v3697, %v3689
    %v4146 = vpack.c.b16 %v3698, %v3690
    %v4147 = vpack.c.b16 %v3699, %v3691
    %v4148 = vpack.c.b16 %v3700, %v3692
    %v4149 = vpack.c.b16 %v3701, %v3693
    %v4150 = vpack.c.b16 %v3702, %v3694
    %v4151 = vpack.c.b16 %v3711, %v3703
    %v4152 = vpack.c.b16 %v3712, %v3704
    %v4153 = vpack.c.b16 %v3713, %v3705
    %v4154 = vpack.c.b16 %v3714, %v3706
    %v4155 = vpack.c.b16 %v3715, %v3707
    %v4156 = vpack.c.b16 %v3716, %v3708
    %v4157 = vpack.c.b16 %v3717, %v3709
    %v4158 = vpack.c.b16 %v3718, %v3710
    %v4159 = vpack.c.b16 %v3727, %v3719
    %v4160 = vpack.c.b16 %v3728, %v3720
    %v4161 = vpack.c.b16 %v3729, %v3721
    %v4162 = vpack.c.b16 %v3730, %v3722
    %v4163 = vpack.c.b16 %v3731, %v3723
    %v4164 = vpack.c.b16 %v3732, %v3724
    %v4165 = vpack.c.b16 %v3733, %v3725
    %v4166 = vpack.c.b16 %v3734, %v3726
    %v4167 = vpack.c.b16 %v3743, %v3735
    %v4168 = vpack.c.b16 %v3744, %v3736
    %v4169 = vpack.c.b16 %v3745, %v3737
    %v4170 = vpack.c.b16 %v3746, %v3738
    %v4171 = vpack.c.b16 %v3747, %v3739
    %v4172 = vpack.c.b16 %v3748, %v3740
    %v4173 = vpack.c.b16 %v3749, %v3741
    %v4174 = vpack.c.b16 %v3750, %v3742
    %v4175 = vpack.c.b16 %v3759, %v3751
    %v4176 = vpack.c.b16 %v3760, %v3752
    %v4177 = vpack.c.b16 %v3761, %v3753
    %v4178 = vpack.c.b16 %v3762, %v3754
    %v4179 = vpack.c.b16 %v3763, %v3755
    %v4180 = vpack.c.b16 %v3764, %v3756
    %v4181 = vpack.c.b16 %v3765, %v3757
    %v4182 = vpack.c.b16 %v3766, %v3758
    %v4183 = vpack.c.b16 %v3775, %v3767
    %v4184 = vpack.c.b16 %v3776, %v3768
    %v4185 = vpack.c.b16 %v3777, %v3769
    %v4186 = vpack.c.b16 %v3778, %v3770
    %v4187 = vpack.c.b16 %v3779, %v3771
    %v4188 = vpack.c.b16 %v3780, %v3772
    %v4189 = vpack.c.b16 %v3781, %v3773
    %v4190 = vpack.c.b16 %v3782, %v3774
    %v4191 = vpack.c.b16 %v3791, %v3783
    %v4192 = vpack.c.b16 %v3792, %v3784
    %v4193 = vpack.c.b16 %v3793, %v3785
    %v4194 = vpack.c.b16 %v3794, %v3786
    %v4195 = vpack.c.b16 %v3795, %v3787
    %v4196 = vpack.c.b16 %v3796, %v3788
    %v4197 = vpack.c.b16 %v3797, %v3789
    %v4198 = vpack.c.b16 %v3798, %v3790
    %v4199 = vpack.c.b16 %v3807, %v3799
    %v4200 = vpack.c.b16 %v3808, %v3800
    %v4201 = vpack.c.b16 %v3809, %v3801
    %v4202 = vpack.c.b16 %v3810, %v3802
    %v4203 = vpack.c.b16 %v3811, %v3803
    %v4204 = vpack.c.b16 %v3812, %v3804
    %v4205 = vpack.c.b16 %v3813, %v3805
    %v4206 = vpack.c.b16 %v3814, %v3806
    %v4207 = vpack.c.b16 %v3823, %v3815
    %v4208 = vpack.c.b16 %v3824, %v3816
    %v4209 = vpack.c.b16 %v3825, %v3817
    %v4210 = vpack.c.b16 %v3826, %v3818
    %v4211 = vpack.c.b16 %v3827, %v3819
    %v4212 = vpack.c.b16 %v3828, %v3820
    %v4213 = vpack.c.b16 %v3829, %v3821
    %v4214 = vpack.c.b16 %v3830, %v3822
    %v4215 = vpack.c.b16 %v3839, %v3831
    %v4216 = vpack.c.b16 %v3840, %v3832
    %v4217 = vpack.c.b16 %v3841, %v3833
    %v4218 = vpack.c.b16 %v3842, %v3834
    %v4219 = vpack.c.b16 %v3843, %v3835
    %v4220 = vpack.c.b16 %v3844, %v3836
    %v4221 = vpack.c.b16 %v3845, %v3837
    %v4222 = vpack.c.b16 %v3846, %v3838
    %v4223 = vpack.c.b16 %v3855, %v3847
    %v4224 = vpack.c.b16 %v3856, %v3848
    %v4225 = vpack.c.b16 %v3857, %v3849
    %v4226 = vpack.c.b16 %v3858, %v3850
    %v4227 = vpack.c.b16 %v3859, %v3851
    %v4228 = vpack.c.b16 %v3860, %v3852
    %v4229 = vpack.c.b16 %v3861, %v3853
    %v4230 = vpack.c.b16 %v3862, %v3854
    %v4231 = vpack.c.b16 %v3871, %v3863
    %v4232 = vpack.c.b16 %v3872, %v3864
    %v4233 = vpack.c.b16 %v3873, %v3865
    %v4234 = vpack.c.b16 %v3874, %v3866
    %v4235 = vpack.c.b16 %v3875, %v3867
    %v4236 = vpack.c.b16 %v3876, %v3868
    %v4237 = vpack.c.b16 %v3877, %v3869
    %v4238 = vpack.c.b16 %v3878, %v3870
    %v4239 = vpack.c.b16 %v3887, %v3879
    %v4240 = vpack.c.b16 %v3888, %v3880
    %v4241 = vpack.c.b16 %v3889, %v3881
    %v4242 = vpack.c.b16 %v3890, %v3882
    %v4243 = vpack.c.b16 %v3891, %v3883
    %v4244 = vpack.c.b16 %v3892, %v3884
    %v4245 = vpack.c.b16 %v3893, %v3885
    %v4246 = vpack.c.b16 %v3894, %v3886
    %v4247 = vpack.c.b16 %v3903, %v3895
    %v4248 = vpack.c.b16 %v3904, %v3896
    %v4249 = vpack.c.b16 %v3905, %v3897
    %v4250 = vpack.c.b16 %v3906, %v3898
    %v4251 = vpack.c.b16 %v3907, %v3899
    %v4252 = vpack.c.b16 %v3908, %v3900
    %v4253 = vpack.c.b16 %v3909, %v3901
    %v4254 = vpack.c.b16 %v3910, %v3902
    %v4255 = vpack.c.b16 %v3919, %v3911
    %v4256 = vpack.c.b16 %v3920, %v3912
    %v4257 = vpack.c.b16 %v3921, %v3913
    %v4258 = vpack.c.b16 %v3922, %v3914
    %v4259 = vpack.c.b16 %v3923, %v3915
    %v4260 = vpack.c.b16 %v3924, %v3916
    %v4261 = vpack.c.b16 %v3925, %v3917
    %v4262 = vpack.c.b16 %v3926, %v3918
    %v4263 = vpack.c.b16 %v3935, %v3927
    %v4264 = vpack.c.b16 %v3936, %v3928
    %v4265 = vpack.c.b16 %v3937, %v3929
    %v4266 = vpack.c.b16 %v3938, %v3930
    %v4267 = vpack.c.b16 %v3939, %v3931
    %v4268 = vpack.c.b16 %v3940, %v3932
    %v4269 = vpack.c.b16 %v3941, %v3933
    %v4270 = vpack.c.b16 %v3942, %v3934
    %v4271 = vpack.c.b16 %v3951, %v3943
    %v4272 = vpack.c.b16 %v3952, %v3944
    %v4273 = vpack.c.b16 %v3953, %v3945
    %v4274 = vpack.c.b16 %v3954, %v3946
    %v4275 = vpack.c.b16 %v3955, %v3947
    %v4276 = vpack.c.b16 %v3956, %v3948
    %v4277 = vpack.c.b16 %v3957, %v3949
    %v4278 = vpack.c.b16 %v3958, %v3950
    %v4279 = vpack.c.b16 %v3967, %v3959
    %v4280 = vpack.c.b16 %v3968, %v3960
    %v4281 = vpack.c.b16 %v3969, %v3961
    %v4282 = vpack.c.b16 %v3970, %v3962
    %v4283 = vpack.c.b16 %v3971, %v3963
    %v4284 = vpack.c.b16 %v3972, %v3964
    %v4285 = vpack.c.b16 %v3973, %v3965
    %v4286 = vpack.c.b16 %v3974, %v3966
    %v4287 = vpack.c.b16 %v3983, %v3975
    %v4288 = vpack.c.b16 %v3984, %v3976
    %v4289 = vpack.c.b16 %v3985, %v3977
    %v4290 = vpack.c.b16 %v3986, %v3978
    %v4291 = vpack.c.b16 %v3987, %v3979
    %v4292 = vpack.c.b16 %v3988, %v3980
    %v4293 = vpack.c.b16 %v3989, %v3981
    %v4294 = vpack.c.b16 %v3990, %v3982
    %v4295 = vpack.c.b16 %v3999, %v3991
    %v4296 = vpack.c.b16 %v4000, %v3992
    %v4297 = vpack.c.b16 %v4001, %v3993
    %v4298 = vpack.c.b16 %v4002, %v3994
    %v4299 = vpack.c.b16 %v4003, %v3995
    %v4300 = vpack.c.b16 %v4004, %v3996
    %v4301 = vpack.c.b16 %v4005, %v3997
    %v4302 = vpack.c.b16 %v4006, %v3998
    %v4303 = vpack.c.b16 %v4015, %v4007
    %v4304 = vpack.c.b16 %v4016, %v4008
    %v4305 = vpack.c.b16 %v4017, %v4009
    %v4306 = vpack.c.b16 %v4018, %v4010
    %v4307 = vpack.c.b16 %v4019, %v4011
    %v4308 = vpack.c.b16 %v4020, %v4012
    %v4309 = vpack.c.b16 %v4021, %v4013
    %v4310 = vpack.c.b16 %v4022, %v4014
    %v4311 = vpack.c.b16 %v4031, %v4023
    %v4312 = vpack.c.b16 %v4032, %v4024
    %v4313 = vpack.c.b16 %v4033, %v4025
    %v4314 = vpack.c.b16 %v4034, %v4026
    %v4315 = vpack.c.b16 %v4035, %v4027
    %v4316 = vpack.c.b16 %v4036, %v4028
    %v4317 = vpack.c.b16 %v4037, %v4029
    %v4318 = vpack.c.b16 %v4038, %v4030
    %v4319 = vpack.c.b16 %v4047, %v4039
    %v4320 = vpack.c.b16 %v4048, %v4040
    %v4321 = vpack.c.b16 %v4049, %v4041
    %v4322 = vpack.c.b16 %v4050, %v4042
    %v4323 = vpack.c.b16 %v4051, %v4043
    %v4324 = vpack.c.b16 %v4052, %v4044
    %v4325 = vpack.c.b16 %v4053, %v4045
    %v4326 = vpack.c.b16 %v4054, %v4046
    %v4327 = vpack.c.b16 %v4063, %v4055
    %v4328 = vpack.c.b16 %v4064, %v4056
    %v4329 = vpack.c.b16 %v4065, %v4057
    %v4330 = vpack.c.b16 %v4066, %v4058
    %v4331 = vpack.c.b16 %v4067, %v4059
    %v4332 = vpack.c.b16 %v4068, %v4060
    %v4333 = vpack.c.b16 %v4069, %v4061
    %v4334 = vpack.c.b16 %v4070, %v4062
    %v4335 = vpack.c.b16 %v4079, %v4071
    %v4336 = vpack.c.b16 %v4080, %v4072
    %v4337 = vpack.c.b16 %v4081, %v4073
    %v4338 = vpack.c.b16 %v4082, %v4074
    %v4339 = vpack.c.b16 %v4083, %v4075
    %v4340 = vpack.c.b16 %v4084, %v4076
    %v4341 = vpack.c.b16 %v4085, %v4077
    %v4342 = vpack.c.b16 %v4086, %v4078
    %4599 = vmatprep.subr.bf16.mxu0 %v4144
    %4600 = vmatpush1.bf16.msra.mxu0 %v4143
    %4601 = vmatprep.subr.bf16.mxu0 %v4136
    %4602 = vmatpush1.bf16.msra.mxu0 %v4135
    %4603 = vmatprep.subr.bf16.mxu0 %v4128
    %4604 = vmatpush1.bf16.msra.mxu0 %v4127
    %4605 = vmatprep.subr.bf16.mxu0 %v4120
    %4606 = vmatpush1.bf16.msra.mxu0 %v4119
    %4607 = vmatprep.subr.bf16.mxu0 %v4112
    %4608 = vmatpush1.bf16.msra.mxu0 %v4111
    %4609 = vmatprep.subr.bf16.mxu0 %v4104
    %4610 = vmatpush1.bf16.msra.mxu0 %v4103
    %4611 = vmatprep.subr.bf16.mxu0 %v4096
    %4612 = vmatpush1.bf16.msra.mxu0 %v4095
    %4613 = vmatprep.subr.bf16.mxu0 %v4088
    %4614 = vmatpush1.bf16.msra.mxu0 %v4087
    %4615 = vmatprep.subr.bf16.mxu0 %v4208
    %4616 = vmatpush2.bf16.msra.mxu0 %v4207
    %4617 = vmatprep.subr.bf16.mxu0 %v4200
    %4618 = vmatpush2.bf16.msra.mxu0 %v4199
    %4619 = vmatprep.subr.bf16.mxu0 %v4192
    %4620 = vmatpush2.bf16.msra.mxu0 %v4191
    %4621 = vmatprep.subr.bf16.mxu0 %v4184
    %4622 = vmatpush2.bf16.msra.mxu0 %v4183
    %4623 = vmatprep.subr.bf16.mxu0 %v4176
    %4624 = vmatpush2.bf16.msra.mxu0 %v4175
    %4625 = vmatprep.subr.bf16.mxu0 %v4168
    %4626 = vmatpush2.bf16.msra.mxu0 %v4167
    %4627 = vmatprep.subr.bf16.mxu0 %v4160
    %4628 = vmatpush2.bf16.msra.mxu0 %v4159
    %4629 = vmatprep.subr.bf16.mxu0 %v4152
    %4630 = vmatpush2.bf16.msra.mxu0 %v4151
    %4631 = vmatprep.mubr.bf16.mxu0 %v3018
    %4632 = vmatmul.mubr.bf16.gmra.mxu0 %v3017
    %v4633 = vpop.f32.mrf.mxu0
    %v4634 = vadd.f32 %v3282, %v4633
    %v4635 = vpop.f32.mrf.mxu0
    %v4636 = vadd.f32 %v3286, %v4635
    %v4637 = vpop.f32.mrf.mxu0
    %v4638 = vpop.f32.mrf.mxu0
    %4639 = vdwg.mxu0
    %4640 = vmatprep.subr.bf16.mxu0 %v4272
    %4641 = vmatpush1.bf16.msra.mxu0 %v4271
    %4642 = vmatprep.subr.bf16.mxu0 %v4264
    %4643 = vmatpush1.bf16.msra.mxu0 %v4263
    %4644 = vmatprep.subr.bf16.mxu0 %v4256
    %4645 = vmatpush1.bf16.msra.mxu0 %v4255
    %4646 = vmatprep.subr.bf16.mxu0 %v4248
    %4647 = vmatpush1.bf16.msra.mxu0 %v4247
    %4648 = vmatprep.subr.bf16.mxu0 %v4240
    %4649 = vmatpush1.bf16.msra.mxu0 %v4239
    %4650 = vmatprep.subr.bf16.mxu0 %v4232
    %4651 = vmatpush1.bf16.msra.mxu0 %v4231
    %4652 = vmatprep.subr.bf16.mxu0 %v4224
    %4653 = vmatpush1.bf16.msra.mxu0 %v4223
    %4654 = vmatprep.subr.bf16.mxu0 %v4216
    %4655 = vmatpush1.bf16.msra.mxu0 %v4215
    %4656 = vmatprep.subr.bf16.mxu0 %v4336
    %4657 = vmatpush2.bf16.msra.mxu0 %v4335
    %4658 = vmatprep.subr.bf16.mxu0 %v4328
    %4659 = vmatpush2.bf16.msra.mxu0 %v4327
    %4660 = vmatprep.subr.bf16.mxu0 %v4320
    %4661 = vmatpush2.bf16.msra.mxu0 %v4319
    %4662 = vmatprep.subr.bf16.mxu0 %v4312
    %4663 = vmatpush2.bf16.msra.mxu0 %v4311
    %4664 = vmatprep.subr.bf16.mxu0 %v4304
    %4665 = vmatpush2.bf16.msra.mxu0 %v4303
    %4666 = vmatprep.subr.bf16.mxu0 %v4296
    %4667 = vmatpush2.bf16.msra.mxu0 %v4295
    %4668 = vmatprep.subr.bf16.mxu0 %v4288
    %4669 = vmatpush2.bf16.msra.mxu0 %v4287
    %4670 = vmatprep.subr.bf16.mxu0 %v4280
    %4671 = vmatpush2.bf16.msra.mxu0 %v4279
    %4672 = vmatprep.mubr.bf16.mxu0 %v3020
    %4673 = vmatmul.mubr.bf16.gmra.mxu0 %v3019
    %v4674 = vpop.f32.mrf.mxu0
    %v4675 = vadd.f32 %v4634, %v4674
    %v4676 = vpop.f32.mrf.mxu0
    %v4677 = vadd.f32 %v4636, %v4676
    %v4678 = vpop.f32.mrf.mxu0
    %v4679 = vpop.f32.mrf.mxu0
    %4680 = vdwg.mxu0
    %4681 = vmatprep.subr.bf16.mxu0 %v4146
    %4682 = vmatpush1.bf16.msra.mxu0 %v4145
    %4683 = vmatprep.subr.bf16.mxu0 %v4138
    %4684 = vmatpush1.bf16.msra.mxu0 %v4137
    %4685 = vmatprep.subr.bf16.mxu0 %v4130
    %4686 = vmatpush1.bf16.msra.mxu0 %v4129
    %4687 = vmatprep.subr.bf16.mxu0 %v4122
    %4688 = vmatpush1.bf16.msra.mxu0 %v4121
    %4689 = vmatprep.subr.bf16.mxu0 %v4114
    %4690 = vmatpush1.bf16.msra.mxu0 %v4113
    %4691 = vmatprep.subr.bf16.mxu0 %v4106
    %4692 = vmatpush1.bf16.msra.mxu0 %v4105
    %4693 = vmatprep.subr.bf16.mxu0 %v4098
    %4694 = vmatpush1.bf16.msra.mxu0 %v4097
    %4695 = vmatprep.subr.bf16.mxu0 %v4090
    %4696 = vmatpush1.bf16.msra.mxu0 %v4089
    %4697 = vmatprep.subr.bf16.mxu0 %v4210
    %4698 = vmatpush2.bf16.msra.mxu0 %v4209
    %4699 = vmatprep.subr.bf16.mxu0 %v4202
    %4700 = vmatpush2.bf16.msra.mxu0 %v4201
    %4701 = vmatprep.subr.bf16.mxu0 %v4194
    %4702 = vmatpush2.bf16.msra.mxu0 %v4193
    %4703 = vmatprep.subr.bf16.mxu0 %v4186
    %4704 = vmatpush2.bf16.msra.mxu0 %v4185
    %4705 = vmatprep.subr.bf16.mxu0 %v4178
    %4706 = vmatpush2.bf16.msra.mxu0 %v4177
    %4707 = vmatprep.subr.bf16.mxu0 %v4170
    %4708 = vmatpush2.bf16.msra.mxu0 %v4169
    %4709 = vmatprep.subr.bf16.mxu0 %v4162
    %4710 = vmatpush2.bf16.msra.mxu0 %v4161
    %4711 = vmatprep.subr.bf16.mxu0 %v4154
    %4712 = vmatpush2.bf16.msra.mxu0 %v4153
    %4713 = vmatprep.mubr.bf16.mxu0 %v3018
    %4714 = vmatmul.mubr.bf16.gmra.mxu0 %v3017
    %v4715 = vpop.f32.mrf.mxu0
    %v4716 = vadd.f32 %v3290, %v4715
    %v4717 = vpop.f32.mrf.mxu0
    %v4718 = vadd.f32 %v3294, %v4717
    %v4719 = vpop.f32.mrf.mxu0
    %v4720 = vpop.f32.mrf.mxu0
    %4721 = vdwg.mxu0
    %4722 = vmatprep.subr.bf16.mxu0 %v4274
    %4723 = vmatpush1.bf16.msra.mxu0 %v4273
    %4724 = vmatprep.subr.bf16.mxu0 %v4266
    %4725 = vmatpush1.bf16.msra.mxu0 %v4265
    %4726 = vmatprep.subr.bf16.mxu0 %v4258
    %4727 = vmatpush1.bf16.msra.mxu0 %v4257
    %4728 = vmatprep.subr.bf16.mxu0 %v4250
    %4729 = vmatpush1.bf16.msra.mxu0 %v4249
    %4730 = vmatprep.subr.bf16.mxu0 %v4242
    %4731 = vmatpush1.bf16.msra.mxu0 %v4241
    %4732 = vmatprep.subr.bf16.mxu0 %v4234
    %4733 = vmatpush1.bf16.msra.mxu0 %v4233
    %4734 = vmatprep.subr.bf16.mxu0 %v4226
    %4735 = vmatpush1.bf16.msra.mxu0 %v4225
    %4736 = vmatprep.subr.bf16.mxu0 %v4218
    %4737 = vmatpush1.bf16.msra.mxu0 %v4217
    %4738 = vmatprep.subr.bf16.mxu0 %v4338
    %4739 = vmatpush2.bf16.msra.mxu0 %v4337
    %4740 = vmatprep.subr.bf16.mxu0 %v4330
    %4741 = vmatpush2.bf16.msra.mxu0 %v4329
    %4742 = vmatprep.subr.bf16.mxu0 %v4322
    %4743 = vmatpush2.bf16.msra.mxu0 %v4321
    %4744 = vmatprep.subr.bf16.mxu0 %v4314
    %4745 = vmatpush2.bf16.msra.mxu0 %v4313
    %4746 = vmatprep.subr.bf16.mxu0 %v4306
    %4747 = vmatpush2.bf16.msra.mxu0 %v4305
    %4748 = vmatprep.subr.bf16.mxu0 %v4298
    %4749 = vmatpush2.bf16.msra.mxu0 %v4297
    %4750 = vmatprep.subr.bf16.mxu0 %v4290
    %4751 = vmatpush2.bf16.msra.mxu0 %v4289
    %4752 = vmatprep.subr.bf16.mxu0 %v4282
    %4753 = vmatpush2.bf16.msra.mxu0 %v4281
    %4754 = vmatprep.mubr.bf16.mxu0 %v3020
    %4755 = vmatmul.mubr.bf16.gmra.mxu0 %v3019
    %v4756 = vpop.f32.mrf.mxu0
    %v4757 = vadd.f32 %v4716, %v4756
    %v4758 = vpop.f32.mrf.mxu0
    %v4759 = vadd.f32 %v4718, %v4758
    %v4760 = vpop.f32.mrf.mxu0
    %v4761 = vpop.f32.mrf.mxu0
    %4762 = vdwg.mxu0
    %4763 = vmatprep.subr.bf16.mxu0 %v4148
    %4764 = vmatpush1.bf16.msra.mxu0 %v4147
    %4765 = vmatprep.subr.bf16.mxu0 %v4140
    %4766 = vmatpush1.bf16.msra.mxu0 %v4139
    %4767 = vmatprep.subr.bf16.mxu0 %v4132
    %4768 = vmatpush1.bf16.msra.mxu0 %v4131
    %4769 = vmatprep.subr.bf16.mxu0 %v4124
    %4770 = vmatpush1.bf16.msra.mxu0 %v4123
    %4771 = vmatprep.subr.bf16.mxu0 %v4116
    %4772 = vmatpush1.bf16.msra.mxu0 %v4115
    %4773 = vmatprep.subr.bf16.mxu0 %v4108
    %4774 = vmatpush1.bf16.msra.mxu0 %v4107
    %4775 = vmatprep.subr.bf16.mxu0 %v4100
    %4776 = vmatpush1.bf16.msra.mxu0 %v4099
    %4777 = vmatprep.subr.bf16.mxu0 %v4092
    %4778 = vmatpush1.bf16.msra.mxu0 %v4091
    %4779 = vmatprep.subr.bf16.mxu0 %v4212
    %4780 = vmatpush2.bf16.msra.mxu0 %v4211
    %4781 = vmatprep.subr.bf16.mxu0 %v4204
    %4782 = vmatpush2.bf16.msra.mxu0 %v4203
    %4783 = vmatprep.subr.bf16.mxu0 %v4196
    %4784 = vmatpush2.bf16.msra.mxu0 %v4195
    %4785 = vmatprep.subr.bf16.mxu0 %v4188
    %4786 = vmatpush2.bf16.msra.mxu0 %v4187
    %4787 = vmatprep.subr.bf16.mxu0 %v4180
    %4788 = vmatpush2.bf16.msra.mxu0 %v4179
    %4789 = vmatprep.subr.bf16.mxu0 %v4172
    %4790 = vmatpush2.bf16.msra.mxu0 %v4171
    %4791 = vmatprep.subr.bf16.mxu0 %v4164
    %4792 = vmatpush2.bf16.msra.mxu0 %v4163
    %4793 = vmatprep.subr.bf16.mxu0 %v4156
    %4794 = vmatpush2.bf16.msra.mxu0 %v4155
    %4795 = vmatprep.mubr.bf16.mxu0 %v3018
    %4796 = vmatmul.mubr.bf16.gmra.mxu0 %v3017
    %v4797 = vpop.f32.mrf.mxu0
    %v4798 = vadd.f32 %v3298, %v4797
    %v4799 = vpop.f32.mrf.mxu0
    %v4800 = vadd.f32 %v3302, %v4799
    %v4801 = vpop.f32.mrf.mxu0
    %v4802 = vpop.f32.mrf.mxu0
    %4803 = vdwg.mxu0
    %4804 = vmatprep.subr.bf16.mxu0 %v4276
    %4805 = vmatpush1.bf16.msra.mxu0 %v4275
    %4806 = vmatprep.subr.bf16.mxu0 %v4268
    %4807 = vmatpush1.bf16.msra.mxu0 %v4267
    %4808 = vmatprep.subr.bf16.mxu0 %v4260
    %4809 = vmatpush1.bf16.msra.mxu0 %v4259
    %4810 = vmatprep.subr.bf16.mxu0 %v4252
    %4811 = vmatpush1.bf16.msra.mxu0 %v4251
    %4812 = vmatprep.subr.bf16.mxu0 %v4244
    %4813 = vmatpush1.bf16.msra.mxu0 %v4243
    %4814 = vmatprep.subr.bf16.mxu0 %v4236
    %4815 = vmatpush1.bf16.msra.mxu0 %v4235
    %4816 = vmatprep.subr.bf16.mxu0 %v4228
    %4817 = vmatpush1.bf16.msra.mxu0 %v4227
    %4818 = vmatprep.subr.bf16.mxu0 %v4220
    %4819 = vmatpush1.bf16.msra.mxu0 %v4219
    %4820 = vmatprep.subr.bf16.mxu0 %v4340
    %4821 = vmatpush2.bf16.msra.mxu0 %v4339
    %4822 = vmatprep.subr.bf16.mxu0 %v4332
    %4823 = vmatpush2.bf16.msra.mxu0 %v4331
    %4824 = vmatprep.subr.bf16.mxu0 %v4324
    %4825 = vmatpush2.bf16.msra.mxu0 %v4323
    %4826 = vmatprep.subr.bf16.mxu0 %v4316
    %4827 = vmatpush2.bf16.msra.mxu0 %v4315
    %4828 = vmatprep.subr.bf16.mxu0 %v4308
    %4829 = vmatpush2.bf16.msra.mxu0 %v4307
    %4830 = vmatprep.subr.bf16.mxu0 %v4300
    %4831 = vmatpush2.bf16.msra.mxu0 %v4299
    %4832 = vmatprep.subr.bf16.mxu0 %v4292
    %4833 = vmatpush2.bf16.msra.mxu0 %v4291
    %4834 = vmatprep.subr.bf16.mxu0 %v4284
    %4835 = vmatpush2.bf16.msra.mxu0 %v4283
    %4836 = vmatprep.mubr.bf16.mxu0 %v3020
    %4837 = vmatmul.mubr.bf16.gmra.mxu0 %v3019
    %v4838 = vpop.f32.mrf.mxu0
    %v4839 = vadd.f32 %v4798, %v4838
    %v4840 = vpop.f32.mrf.mxu0
    %v4841 = vadd.f32 %v4800, %v4840
    %v4842 = vpop.f32.mrf.mxu0
    %v4843 = vpop.f32.mrf.mxu0
    %4844 = vdwg.mxu0
    %4845 = vmatprep.subr.bf16.mxu0 %v4150
    %4846 = vmatpush1.bf16.msra.mxu0 %v4149
    %4847 = vmatprep.subr.bf16.mxu0 %v4142
    %4848 = vmatpush1.bf16.msra.mxu0 %v4141
    %4849 = vmatprep.subr.bf16.mxu0 %v4134
    %4850 = vmatpush1.bf16.msra.mxu0 %v4133
    %4851 = vmatprep.subr.bf16.mxu0 %v4126
    %4852 = vmatpush1.bf16.msra.mxu0 %v4125
    %4853 = vmatprep.subr.bf16.mxu0 %v4118
    %4854 = vmatpush1.bf16.msra.mxu0 %v4117
    %4855 = vmatprep.subr.bf16.mxu0 %v4110
    %4856 = vmatpush1.bf16.msra.mxu0 %v4109
    %4857 = vmatprep.subr.bf16.mxu0 %v4102
    %4858 = vmatpush1.bf16.msra.mxu0 %v4101
    %4859 = vmatprep.subr.bf16.mxu0 %v4094
    %4860 = vmatpush1.bf16.msra.mxu0 %v4093
    %4861 = vmatprep.subr.bf16.mxu0 %v4214
    %4862 = vmatpush2.bf16.msra.mxu0 %v4213
    %4863 = vmatprep.subr.bf16.mxu0 %v4206
    %4864 = vmatpush2.bf16.msra.mxu0 %v4205
    %4865 = vmatprep.subr.bf16.mxu0 %v4198
    %4866 = vmatpush2.bf16.msra.mxu0 %v4197
    %4867 = vmatprep.subr.bf16.mxu0 %v4190
    %4868 = vmatpush2.bf16.msra.mxu0 %v4189
    %4869 = vmatprep.subr.bf16.mxu0 %v4182
    %4870 = vmatpush2.bf16.msra.mxu0 %v4181
    %4871 = vmatprep.subr.bf16.mxu0 %v4174
    %4872 = vmatpush2.bf16.msra.mxu0 %v4173
    %4873 = vmatprep.subr.bf16.mxu0 %v4166
    %4874 = vmatpush2.bf16.msra.mxu0 %v4165
    %4875 = vmatprep.subr.bf16.mxu0 %v4158
    %4876 = vmatpush2.bf16.msra.mxu0 %v4157
    %4877 = vmatprep.mubr.bf16.mxu0 %v3018
    %4878 = vmatmul.mubr.bf16.gmra.mxu0 %v3017
    %v4879 = vpop.f32.mrf.mxu0
    %v4880 = vadd.f32 %v3306, %v4879
    %v4881 = vpop.f32.mrf.mxu0
    %v4882 = vadd.f32 %v3310, %v4881
    %v4883 = vpop.f32.mrf.mxu0
    %v4884 = vpop.f32.mrf.mxu0
    %4885 = vdwg.mxu0
    %4886 = vmatprep.subr.bf16.mxu0 %v4278
    %4887 = vmatpush1.bf16.msra.mxu0 %v4277
    %4888 = vmatprep.subr.bf16.mxu0 %v4270
    %4889 = vmatpush1.bf16.msra.mxu0 %v4269
    %4890 = vmatprep.subr.bf16.mxu0 %v4262
    %4891 = vmatpush1.bf16.msra.mxu0 %v4261
    %4892 = vmatprep.subr.bf16.mxu0 %v4254
    %4893 = vmatpush1.bf16.msra.mxu0 %v4253
    %4894 = vmatprep.subr.bf16.mxu0 %v4246
    %4895 = vmatpush1.bf16.msra.mxu0 %v4245
    %4896 = vmatprep.subr.bf16.mxu0 %v4238
    %4897 = vmatpush1.bf16.msra.mxu0 %v4237
    %4898 = vmatprep.subr.bf16.mxu0 %v4230
    %4899 = vmatpush1.bf16.msra.mxu0 %v4229
    %4900 = vmatprep.subr.bf16.mxu0 %v4222
    %4901 = vmatpush1.bf16.msra.mxu0 %v4221
    %4902 = vmatprep.subr.bf16.mxu0 %v4342
    %4903 = vmatpush2.bf16.msra.mxu0 %v4341
    %4904 = vmatprep.subr.bf16.mxu0 %v4334
    %4905 = vmatpush2.bf16.msra.mxu0 %v4333
    %4906 = vmatprep.subr.bf16.mxu0 %v4326
    %4907 = vmatpush2.bf16.msra.mxu0 %v4325
    %4908 = vmatprep.subr.bf16.mxu0 %v4318
    %4909 = vmatpush2.bf16.msra.mxu0 %v4317
    %4910 = vmatprep.subr.bf16.mxu0 %v4310
    %4911 = vmatpush2.bf16.msra.mxu0 %v4309
    %4912 = vmatprep.subr.bf16.mxu0 %v4302
    %4913 = vmatpush2.bf16.msra.mxu0 %v4301
    %4914 = vmatprep.subr.bf16.mxu0 %v4294
    %4915 = vmatpush2.bf16.msra.mxu0 %v4293
    %4916 = vmatprep.subr.bf16.mxu0 %v4286
    %4917 = vmatpush2.bf16.msra.mxu0 %v4285
    %4918 = vmatprep.mubr.bf16.mxu0 %v3020
    %4919 = vmatmul.mubr.bf16.gmra.mxu0 %v3019
    %v4920 = vpop.f32.mrf.mxu0
    %v4921 = vadd.f32 %v4880, %v4920
    %v4922 = vpop.f32.mrf.mxu0
    %v4923 = vadd.f32 %v4882, %v4922
    %v4924 = vpop.f32.mrf.mxu0
    %v4925 = vpop.f32.mrf.mxu0
    %4926 = vdwg.mxu0
    %v4927 = vmax.f32 %v4675, 0.0
    %v4928 = vmax.f32 %v4677, 0.0
    %v4929 = vmax.f32 %v4757, 0.0
    %v4930 = vmax.f32 %v4759, 0.0
    %v4931 = vmax.f32 %v4839, 0.0
    %v4932 = vmax.f32 %v4841, 0.0
    %v4933 = vmax.f32 %v4921, 0.0
    %v4934 = vmax.f32 %v4923, 0.0
    %v4935 = vpack.c.bf16 %v4927, %v4927
    %v4936 = vpack.c.bf16 %v4928, %v4928
    %v4937 = vpack.c.bf16 %v4929, %v4929
    %v4938 = vpack.c.bf16 %v4930, %v4930
    %v4939 = vpack.c.bf16 %v4931, %v4931
    %v4940 = vpack.c.bf16 %v4932, %v4932
    %v4941 = vpack.c.bf16 %v4933, %v4933
    %v4942 = vpack.c.bf16 %v4934, %v4934
    %v4943 = vld [vmem:[%s7] sm:$0xff]
    %v4944 = vld [vmem:[%s7 + $0x8] sm:$0xff]
    %v4945 = vld [vmem:[%s7 + $0x10] sm:$0xff]
    %v4946 = vld [vmem:[%s7 + $0x18] sm:$0xff]
    %v4947 = vld [vmem:[%s7 + $0x20] sm:$0xff]
    %v4948 = vld [vmem:[%s7 + $0x28] sm:$0xff]
    %v4949 = vld [vmem:[%s7 + $0x30] sm:$0xff]
    %v4950 = vld [vmem:[%s7 + $0x38] sm:$0xff]
    %v4951 = vld [vmem:[%s7 + $0x40] sm:$0xff]
    %v4952 = vld [vmem:[%s7 + $0x48] sm:$0xff]
    %v4953 = vld [vmem:[%s7 + $0x50] sm:$0xff]
    %v4954 = vld [vmem:[%s7 + $0x58] sm:$0xff]
    %v4955 = vld [vmem:[%s7 + $0x60] sm:$0xff]
    %v4956 = vld [vmem:[%s7 + $0x68] sm:$0xff]
    %v4957 = vld [vmem:[%s7 + $0x70] sm:$0xff]
    %v4958 = vld [vmem:[%s7 + $0x78] sm:$0xff]
    %v4959 = vld [vmem:[%s7 + $0x80] sm:$0xff]
    %v4960 = vld [vmem:[%s7 + $0x88] sm:$0xff]
    %v4961 = vld [vmem:[%s7 + $0x90] sm:$0xff]
    %v4962 = vld [vmem:[%s7 + $0x98] sm:$0xff]
    %v4963 = vld [vmem:[%s7 + $0xa0] sm:$0xff]
    %v4964 = vld [vmem:[%s7 + $0xa8] sm:$0xff]
    %v4965 = vld [vmem:[%s7 + $0xb0] sm:$0xff]
    %v4966 = vld [vmem:[%s7 + $0xb8] sm:$0xff]
    %v4967 = vld [vmem:[%s7 + $0xc0] sm:$0xff]
    %v4968 = vld [vmem:[%s7 + $0xc8] sm:$0xff]
    %v4969 = vld [vmem:[%s7 + $0xd0] sm:$0xff]
    %v4970 = vld [vmem:[%s7 + $0xd8] sm:$0xff]
    %v4971 = vld [vmem:[%s7 + $0xe0] sm:$0xff]
    %v4972 = vld [vmem:[%s7 + $0xe8] sm:$0xff]
    %v4973 = vld [vmem:[%s7 + $0xf0] sm:$0xff]
    %v4974 = vld [vmem:[%s7 + $0xf8] sm:$0xff]
    %v4975 = vld [vmem:[%s7 + $0x100] sm:$0xff]
    %v4976 = vld [vmem:[%s7 + $0x108] sm:$0xff]
    %v4977 = vld [vmem:[%s7 + $0x110] sm:$0xff]
    %v4978 = vld [vmem:[%s7 + $0x118] sm:$0xff]
    %v4979 = vld [vmem:[%s7 + $0x120] sm:$0xff]
    %v4980 = vld [vmem:[%s7 + $0x128] sm:$0xff]
    %v4981 = vld [vmem:[%s7 + $0x130] sm:$0xff]
    %v4982 = vld [vmem:[%s7 + $0x138] sm:$0xff]
    %v4983 = vld [vmem:[%s7 + $0x140] sm:$0xff]
    %v4984 = vld [vmem:[%s7 + $0x148] sm:$0xff]
    %v4985 = vld [vmem:[%s7 + $0x150] sm:$0xff]
    %v4986 = vld [vmem:[%s7 + $0x158] sm:$0xff]
    %v4987 = vld [vmem:[%s7 + $0x160] sm:$0xff]
    %v4988 = vld [vmem:[%s7 + $0x168] sm:$0xff]
    %v4989 = vld [vmem:[%s7 + $0x170] sm:$0xff]
    %v4990 = vld [vmem:[%s7 + $0x178] sm:$0xff]
    %v4991 = vld [vmem:[%s7 + $0x180] sm:$0xff]
    %v4992 = vld [vmem:[%s7 + $0x188] sm:$0xff]
    %v4993 = vld [vmem:[%s7 + $0x190] sm:$0xff]
    %v4994 = vld [vmem:[%s7 + $0x198] sm:$0xff]
    %v4995 = vld [vmem:[%s7 + $0x1a0] sm:$0xff]
    %v4996 = vld [vmem:[%s7 + $0x1a8] sm:$0xff]
    %v4997 = vld [vmem:[%s7 + $0x1b0] sm:$0xff]
    %v4998 = vld [vmem:[%s7 + $0x1b8] sm:$0xff]
    %v4999 = vld [vmem:[%s7 + $0x1c0] sm:$0xff]
    %v5000 = vld [vmem:[%s7 + $0x1c8] sm:$0xff]
    %v5001 = vld [vmem:[%s7 + $0x1d0] sm:$0xff]
    %v5002 = vld [vmem:[%s7 + $0x1d8] sm:$0xff]
    %v5003 = vld [vmem:[%s7 + $0x1e0] sm:$0xff]
    %v5004 = vld [vmem:[%s7 + $0x1e8] sm:$0xff]
    %v5005 = vld [vmem:[%s7 + $0x1f0] sm:$0xff]
    %v5006 = vld [vmem:[%s7 + $0x1f8] sm:$0xff]
    %v5007 = vld [vmem:[%s7 + $0x200] sm:$0xff]
    %v5008 = vld [vmem:[%s7 + $0x208] sm:$0xff]
    %v5009 = vld [vmem:[%s7 + $0x210] sm:$0xff]
    %v5010 = vld [vmem:[%s7 + $0x218] sm:$0xff]
    %v5011 = vld [vmem:[%s7 + $0x220] sm:$0xff]
    %v5012 = vld [vmem:[%s7 + $0x228] sm:$0xff]
    %v5013 = vld [vmem:[%s7 + $0x230] sm:$0xff]
    %v5014 = vld [vmem:[%s7 + $0x238] sm:$0xff]
    %v5015 = vld [vmem:[%s7 + $0x240] sm:$0xff]
    %v5016 = vld [vmem:[%s7 + $0x248] sm:$0xff]
    %v5017 = vld [vmem:[%s7 + $0x250] sm:$0xff]
    %v5018 = vld [vmem:[%s7 + $0x258] sm:$0xff]
    %v5019 = vld [vmem:[%s7 + $0x260] sm:$0xff]
    %v5020 = vld [vmem:[%s7 + $0x268] sm:$0xff]
    %v5021 = vld [vmem:[%s7 + $0x270] sm:$0xff]
    %v5022 = vld [vmem:[%s7 + $0x278] sm:$0xff]
    %v5023 = vld [vmem:[%s7 + $0x280] sm:$0xff]
    %v5024 = vld [vmem:[%s7 + $0x288] sm:$0xff]
    %v5025 = vld [vmem:[%s7 + $0x290] sm:$0xff]
    %v5026 = vld [vmem:[%s7 + $0x298] sm:$0xff]
    %v5027 = vld [vmem:[%s7 + $0x2a0] sm:$0xff]
    %v5028 = vld [vmem:[%s7 + $0x2a8] sm:$0xff]
    %v5029 = vld [vmem:[%s7 + $0x2b0] sm:$0xff]
    %v5030 = vld [vmem:[%s7 + $0x2b8] sm:$0xff]
    %v5031 = vld [vmem:[%s7 + $0x2c0] sm:$0xff]
    %v5032 = vld [vmem:[%s7 + $0x2c8] sm:$0xff]
    %v5033 = vld [vmem:[%s7 + $0x2d0] sm:$0xff]
    %v5034 = vld [vmem:[%s7 + $0x2d8] sm:$0xff]
    %v5035 = vld [vmem:[%s7 + $0x2e0] sm:$0xff]
    %v5036 = vld [vmem:[%s7 + $0x2e8] sm:$0xff]
    %v5037 = vld [vmem:[%s7 + $0x2f0] sm:$0xff]
    %v5038 = vld [vmem:[%s7 + $0x2f8] sm:$0xff]
    %v5039 = vld [vmem:[%s7 + $0x300] sm:$0xff]
    %v5040 = vld [vmem:[%s7 + $0x308] sm:$0xff]
    %v5041 = vld [vmem:[%s7 + $0x310] sm:$0xff]
    %v5042 = vld [vmem:[%s7 + $0x318] sm:$0xff]
    %v5043 = vld [vmem:[%s7 + $0x320] sm:$0xff]
    %v5044 = vld [vmem:[%s7 + $0x328] sm:$0xff]
    %v5045 = vld [vmem:[%s7 + $0x330] sm:$0xff]
    %v5046 = vld [vmem:[%s7 + $0x338] sm:$0xff]
    %v5047 = vld [vmem:[%s7 + $0x340] sm:$0xff]
    %v5048 = vld [vmem:[%s7 + $0x348] sm:$0xff]
    %v5049 = vld [vmem:[%s7 + $0x350] sm:$0xff]
    %v5050 = vld [vmem:[%s7 + $0x358] sm:$0xff]
    %v5051 = vld [vmem:[%s7 + $0x360] sm:$0xff]
    %v5052 = vld [vmem:[%s7 + $0x368] sm:$0xff]
    %v5053 = vld [vmem:[%s7 + $0x370] sm:$0xff]
    %v5054 = vld [vmem:[%s7 + $0x378] sm:$0xff]
    %v5055 = vld [vmem:[%s7 + $0x380] sm:$0xff]
    %v5056 = vld [vmem:[%s7 + $0x388] sm:$0xff]
    %v5057 = vld [vmem:[%s7 + $0x390] sm:$0xff]
    %v5058 = vld [vmem:[%s7 + $0x398] sm:$0xff]
    %v5059 = vld [vmem:[%s7 + $0x3a0] sm:$0xff]
    %v5060 = vld [vmem:[%s7 + $0x3a8] sm:$0xff]
    %v5061 = vld [vmem:[%s7 + $0x3b0] sm:$0xff]
    %v5062 = vld [vmem:[%s7 + $0x3b8] sm:$0xff]
    %v5063 = vld [vmem:[%s7 + $0x3c0] sm:$0xff]
    %v5064 = vld [vmem:[%s7 + $0x3c8] sm:$0xff]
    %v5065 = vld [vmem:[%s7 + $0x3d0] sm:$0xff]
    %v5066 = vld [vmem:[%s7 + $0x3d8] sm:$0xff]
    %v5067 = vld [vmem:[%s7 + $0x3e0] sm:$0xff]
    %v5068 = vld [vmem:[%s7 + $0x3e8] sm:$0xff]
    %v5069 = vld [vmem:[%s7 + $0x3f0] sm:$0xff]
    %v5070 = vld [vmem:[%s7 + $0x3f8] sm:$0xff]
    %v5071 = vld [vmem:[%s8] sm:$0x3]
    %v5073 = vlaneseq
    %v5074 = vshrl.u32 %v5073, 7
    %v5075 = vsub.s32 0, %v5074
    %v5076 = vrot.slane %v5071, %v5075
    %v5077 = vlaneseq
    %v5078 = vshrl.u32 %v5077, 7
    %v5079 = vsub.s32 1, %v5078
    %v5080 = vrot.slane %v5071, %v5079
    %v5211 = vunpack.c.l.b16 %v4943
    %v5212 = vunpack.c.h.b16 %v4943
    %v5213 = vunpack.c.l.b16 %v4944
    %v5214 = vunpack.c.h.b16 %v4944
    %v5215 = vunpack.c.l.b16 %v4945
    %v5216 = vunpack.c.h.b16 %v4945
    %v5217 = vunpack.c.l.b16 %v4946
    %v5218 = vunpack.c.h.b16 %v4946
    %v5219 = vunpack.c.l.b16 %v4947
    %v5220 = vunpack.c.h.b16 %v4947
    %v5221 = vunpack.c.l.b16 %v4948
    %v5222 = vunpack.c.h.b16 %v4948
    %v5223 = vunpack.c.l.b16 %v4949
    %v5224 = vunpack.c.h.b16 %v4949
    %v5225 = vunpack.c.l.b16 %v4950
    %v5226 = vunpack.c.h.b16 %v4950
    %v5227 = vunpack.c.l.b16 %v4951
    %v5228 = vunpack.c.h.b16 %v4951
    %v5229 = vunpack.c.l.b16 %v4952
    %v5230 = vunpack.c.h.b16 %v4952
    %v5231 = vunpack.c.l.b16 %v4953
    %v5232 = vunpack.c.h.b16 %v4953
    %v5233 = vunpack.c.l.b16 %v4954
    %v5234 = vunpack.c.h.b16 %v4954
    %v5235 = vunpack.c.l.b16 %v4955
    %v5236 = vunpack.c.h.b16 %v4955
    %v5237 = vunpack.c.l.b16 %v4956
    %v5238 = vunpack.c.h.b16 %v4956
    %v5239 = vunpack.c.l.b16 %v4957
    %v5240 = vunpack.c.h.b16 %v4957
    %v5241 = vunpack.c.l.b16 %v4958
    %v5242 = vunpack.c.h.b16 %v4958
    %v5243 = vunpack.c.l.b16 %v4959
    %v5244 = vunpack.c.h.b16 %v4959
    %v5245 = vunpack.c.l.b16 %v4960
    %v5246 = vunpack.c.h.b16 %v4960
    %v5247 = vunpack.c.l.b16 %v4961
    %v5248 = vunpack.c.h.b16 %v4961
    %v5249 = vunpack.c.l.b16 %v4962
    %v5250 = vunpack.c.h.b16 %v4962
    %v5251 = vunpack.c.l.b16 %v4963
    %v5252 = vunpack.c.h.b16 %v4963
    %v5253 = vunpack.c.l.b16 %v4964
    %v5254 = vunpack.c.h.b16 %v4964
    %v5255 = vunpack.c.l.b16 %v4965
    %v5256 = vunpack.c.h.b16 %v4965
    %v5257 = vunpack.c.l.b16 %v4966
    %v5258 = vunpack.c.h.b16 %v4966
    %v5259 = vunpack.c.l.b16 %v4967
    %v5260 = vunpack.c.h.b16 %v4967
    %v5261 = vunpack.c.l.b16 %v4968
    %v5262 = vunpack.c.h.b16 %v4968
    %v5263 = vunpack.c.l.b16 %v4969
    %v5264 = vunpack.c.h.b16 %v4969
    %v5265 = vunpack.c.l.b16 %v4970
    %v5266 = vunpack.c.h.b16 %v4970
    %v5267 = vunpack.c.l.b16 %v4971
    %v5268 = vunpack.c.h.b16 %v4971
    %v5269 = vunpack.c.l.b16 %v4972
    %v5270 = vunpack.c.h.b16 %v4972
    %v5271 = vunpack.c.l.b16 %v4973
    %v5272 = vunpack.c.h.b16 %v4973
    %v5273 = vunpack.c.l.b16 %v4974
    %v5274 = vunpack.c.h.b16 %v4974
    %v5275 = vunpack.c.l.b16 %v4975
    %v5276 = vunpack.c.h.b16 %v4975
    %v5277 = vunpack.c.l.b16 %v4976
    %v5278 = vunpack.c.h.b16 %v4976
    %v5279 = vunpack.c.l.b16 %v4977
    %v5280 = vunpack.c.h.b16 %v4977
    %v5281 = vunpack.c.l.b16 %v4978
    %v5282 = vunpack.c.h.b16 %v4978
    %v5283 = vunpack.c.l.b16 %v4979
    %v5284 = vunpack.c.h.b16 %v4979
    %v5285 = vunpack.c.l.b16 %v4980
    %v5286 = vunpack.c.h.b16 %v4980
    %v5287 = vunpack.c.l.b16 %v4981
    %v5288 = vunpack.c.h.b16 %v4981
    %v5289 = vunpack.c.l.b16 %v4982
    %v5290 = vunpack.c.h.b16 %v4982
    %v5291 = vunpack.c.l.b16 %v4983
    %v5292 = vunpack.c.h.b16 %v4983
    %v5293 = vunpack.c.l.b16 %v4984
    %v5294 = vunpack.c.h.b16 %v4984
    %v5295 = vunpack.c.l.b16 %v4985
    %v5296 = vunpack.c.h.b16 %v4985
    %v5297 = vunpack.c.l.b16 %v4986
    %v5298 = vunpack.c.h.b16 %v4986
    %v5299 = vunpack.c.l.b16 %v4987
    %v5300 = vunpack.c.h.b16 %v4987
    %v5301 = vunpack.c.l.b16 %v4988
    %v5302 = vunpack.c.h.b16 %v4988
    %v5303 = vunpack.c.l.b16 %v4989
    %v5304 = vunpack.c.h.b16 %v4989
    %v5305 = vunpack.c.l.b16 %v4990
    %v5306 = vunpack.c.h.b16 %v4990
    %v5307 = vunpack.c.l.b16 %v4991
    %v5308 = vunpack.c.h.b16 %v4991
    %v5309 = vunpack.c.l.b16 %v4992
    %v5310 = vunpack.c.h.b16 %v4992
    %v5311 = vunpack.c.l.b16 %v4993
    %v5312 = vunpack.c.h.b16 %v4993
    %v5313 = vunpack.c.l.b16 %v4994
    %v5314 = vunpack.c.h.b16 %v4994
    %v5315 = vunpack.c.l.b16 %v4995
    %v5316 = vunpack.c.h.b16 %v4995
    %v5317 = vunpack.c.l.b16 %v4996
    %v5318 = vunpack.c.h.b16 %v4996
    %v5319 = vunpack.c.l.b16 %v4997
    %v5320 = vunpack.c.h.b16 %v4997
    %v5321 = vunpack.c.l.b16 %v4998
    %v5322 = vunpack.c.h.b16 %v4998
    %v5323 = vunpack.c.l.b16 %v4999
    %v5324 = vunpack.c.h.b16 %v4999
    %v5325 = vunpack.c.l.b16 %v5000
    %v5326 = vunpack.c.h.b16 %v5000
    %v5327 = vunpack.c.l.b16 %v5001
    %v5328 = vunpack.c.h.b16 %v5001
    %v5329 = vunpack.c.l.b16 %v5002
    %v5330 = vunpack.c.h.b16 %v5002
    %v5331 = vunpack.c.l.b16 %v5003
    %v5332 = vunpack.c.h.b16 %v5003
    %v5333 = vunpack.c.l.b16 %v5004
    %v5334 = vunpack.c.h.b16 %v5004
    %v5335 = vunpack.c.l.b16 %v5005
    %v5336 = vunpack.c.h.b16 %v5005
    %v5337 = vunpack.c.l.b16 %v5006
    %v5338 = vunpack.c.h.b16 %v5006
    %v5339 = vunpack.c.l.b16 %v5007
    %v5340 = vunpack.c.h.b16 %v5007
    %v5341 = vunpack.c.l.b16 %v5008
    %v5342 = vunpack.c.h.b16 %v5008
    %v5343 = vunpack.c.l.b16 %v5009
    %v5344 = vunpack.c.h.b16 %v5009
    %v5345 = vunpack.c.l.b16 %v5010
    %v5346 = vunpack.c.h.b16 %v5010
    %v5347 = vunpack.c.l.b16 %v5011
    %v5348 = vunpack.c.h.b16 %v5011
    %v5349 = vunpack.c.l.b16 %v5012
    %v5350 = vunpack.c.h.b16 %v5012
    %v5351 = vunpack.c.l.b16 %v5013
    %v5352 = vunpack.c.h.b16 %v5013
    %v5353 = vunpack.c.l.b16 %v5014
    %v5354 = vunpack.c.h.b16 %v5014
    %v5355 = vunpack.c.l.b16 %v5015
    %v5356 = vunpack.c.h.b16 %v5015
    %v5357 = vunpack.c.l.b16 %v5016
    %v5358 = vunpack.c.h.b16 %v5016
    %v5359 = vunpack.c.l.b16 %v5017
    %v5360 = vunpack.c.h.b16 %v5017
    %v5361 = vunpack.c.l.b16 %v5018
    %v5362 = vunpack.c.h.b16 %v5018
    %v5363 = vunpack.c.l.b16 %v5019
    %v5364 = vunpack.c.h.b16 %v5019
    %v5365 = vunpack.c.l.b16 %v5020
    %v5366 = vunpack.c.h.b16 %v5020
    %v5367 = vunpack.c.l.b16 %v5021
    %v5368 = vunpack.c.h.b16 %v5021
    %v5369 = vunpack.c.l.b16 %v5022
    %v5370 = vunpack.c.h.b16 %v5022
    %v5371 = vunpack.c.l.b16 %v5023
    %v5372 = vunpack.c.h.b16 %v5023
    %v5373 = vunpack.c.l.b16 %v5024
    %v5374 = vunpack.c.h.b16 %v5024
    %v5375 = vunpack.c.l.b16 %v5025
    %v5376 = vunpack.c.h.b16 %v5025
    %v5377 = vunpack.c.l.b16 %v5026
    %v5378 = vunpack.c.h.b16 %v5026
    %v5379 = vunpack.c.l.b16 %v5027
    %v5380 = vunpack.c.h.b16 %v5027
    %v5381 = vunpack.c.l.b16 %v5028
    %v5382 = vunpack.c.h.b16 %v5028
    %v5383 = vunpack.c.l.b16 %v5029
    %v5384 = vunpack.c.h.b16 %v5029
    %v5385 = vunpack.c.l.b16 %v5030
    %v5386 = vunpack.c.h.b16 %v5030
    %v5387 = vunpack.c.l.b16 %v5031
    %v5388 = vunpack.c.h.b16 %v5031
    %v5389 = vunpack.c.l.b16 %v5032
    %v5390 = vunpack.c.h.b16 %v5032
    %v5391 = vunpack.c.l.b16 %v5033
    %v5392 = vunpack.c.h.b16 %v5033
    %v5393 = vunpack.c.l.b16 %v5034
    %v5394 = vunpack.c.h.b16 %v5034
    %v5395 = vunpack.c.l.b16 %v5035
    %v5396 = vunpack.c.h.b16 %v5035
    %v5397 = vunpack.c.l.b16 %v5036
    %v5398 = vunpack.c.h.b16 %v5036
    %v5399 = vunpack.c.l.b16 %v5037
    %v5400 = vunpack.c.h.b16 %v5037
    %v5401 = vunpack.c.l.b16 %v5038
    %v5402 = vunpack.c.h.b16 %v5038
    %v5403 = vunpack.c.l.b16 %v5039
    %v5404 = vunpack.c.h.b16 %v5039
    %v5405 = vunpack.c.l.b16 %v5040
    %v5406 = vunpack.c.h.b16 %v5040
    %v5407 = vunpack.c.l.b16 %v5041
    %v5408 = vunpack.c.h.b16 %v5041
    %v5409 = vunpack.c.l.b16 %v5042
    %v5410 = vunpack.c.h.b16 %v5042
    %v5411 = vunpack.c.l.b16 %v5043
    %v5412 = vunpack.c.h.b16 %v5043
    %v5413 = vunpack.c.l.b16 %v5044
    %v5414 = vunpack.c.h.b16 %v5044
    %v5415 = vunpack.c.l.b16 %v5045
    %v5416 = vunpack.c.h.b16 %v5045
    %v5417 = vunpack.c.l.b16 %v5046
    %v5418 = vunpack.c.h.b16 %v5046
    %v5419 = vunpack.c.l.b16 %v5047
    %v5420 = vunpack.c.h.b16 %v5047
    %v5421 = vunpack.c.l.b16 %v5048
    %v5422 = vunpack.c.h.b16 %v5048
    %v5423 = vunpack.c.l.b16 %v5049
    %v5424 = vunpack.c.h.b16 %v5049
    %v5425 = vunpack.c.l.b16 %v5050
    %v5426 = vunpack.c.h.b16 %v5050
    %v5427 = vunpack.c.l.b16 %v5051
    %v5428 = vunpack.c.h.b16 %v5051
    %v5429 = vunpack.c.l.b16 %v5052
    %v5430 = vunpack.c.h.b16 %v5052
    %v5431 = vunpack.c.l.b16 %v5053
    %v5432 = vunpack.c.h.b16 %v5053
    %v5433 = vunpack.c.l.b16 %v5054
    %v5434 = vunpack.c.h.b16 %v5054
    %v5435 = vunpack.c.l.b16 %v5055
    %v5436 = vunpack.c.h.b16 %v5055
    %v5437 = vunpack.c.l.b16 %v5056
    %v5438 = vunpack.c.h.b16 %v5056
    %v5439 = vunpack.c.l.b16 %v5057
    %v5440 = vunpack.c.h.b16 %v5057
    %v5441 = vunpack.c.l.b16 %v5058
    %v5442 = vunpack.c.h.b16 %v5058
    %v5443 = vunpack.c.l.b16 %v5059
    %v5444 = vunpack.c.h.b16 %v5059
    %v5445 = vunpack.c.l.b16 %v5060
    %v5446 = vunpack.c.h.b16 %v5060
    %v5447 = vunpack.c.l.b16 %v5061
    %v5448 = vunpack.c.h.b16 %v5061
    %v5449 = vunpack.c.l.b16 %v5062
    %v5450 = vunpack.c.h.b16 %v5062
    %v5451 = vunpack.c.l.b16 %v5063
    %v5452 = vunpack.c.h.b16 %v5063
    %v5453 = vunpack.c.l.b16 %v5064
    %v5454 = vunpack.c.h.b16 %v5064
    %v5455 = vunpack.c.l.b16 %v5065
    %v5456 = vunpack.c.h.b16 %v5065
    %v5457 = vunpack.c.l.b16 %v5066
    %v5458 = vunpack.c.h.b16 %v5066
    %v5459 = vunpack.c.l.b16 %v5067
    %v5460 = vunpack.c.h.b16 %v5067
    %v5461 = vunpack.c.l.b16 %v5068
    %v5462 = vunpack.c.h.b16 %v5068
    %v5463 = vunpack.c.l.b16 %v5069
    %v5464 = vunpack.c.h.b16 %v5069
    %v5465 = vunpack.c.l.b16 %v5070
    %v5466 = vunpack.c.h.b16 %v5070
    %v5467 = vpack.c.b16 %v5213, %v5211
    %v5468 = vpack.c.b16 %v5214, %v5212
    %v5469 = vpack.c.b16 %v5217, %v5215
    %v5470 = vpack.c.b16 %v5218, %v5216
    %v5471 = vpack.c.b16 %v5221, %v5219
    %v5472 = vpack.c.b16 %v5222, %v5220
    %v5473 = vpack.c.b16 %v5225, %v5223
    %v5474 = vpack.c.b16 %v5226, %v5224
    %v5475 = vpack.c.b16 %v5229, %v5227
    %v5476 = vpack.c.b16 %v5230, %v5228
    %v5477 = vpack.c.b16 %v5233, %v5231
    %v5478 = vpack.c.b16 %v5234, %v5232
    %v5479 = vpack.c.b16 %v5237, %v5235
    %v5480 = vpack.c.b16 %v5238, %v5236
    %v5481 = vpack.c.b16 %v5241, %v5239
    %v5482 = vpack.c.b16 %v5242, %v5240
    %v5483 = vpack.c.b16 %v5245, %v5243
    %v5484 = vpack.c.b16 %v5246, %v5244
    %v5485 = vpack.c.b16 %v5249, %v5247
    %v5486 = vpack.c.b16 %v5250, %v5248
    %v5487 = vpack.c.b16 %v5253, %v5251
    %v5488 = vpack.c.b16 %v5254, %v5252
    %v5489 = vpack.c.b16 %v5257, %v5255
    %v5490 = vpack.c.b16 %v5258, %v5256
    %v5491 = vpack.c.b16 %v5261, %v5259
    %v5492 = vpack.c.b16 %v5262, %v5260
    %v5493 = vpack.c.b16 %v5265, %v5263
    %v5494 = vpack.c.b16 %v5266, %v5264
    %v5495 = vpack.c.b16 %v5269, %v5267
    %v5496 = vpack.c.b16 %v5270, %v5268
    %v5497 = vpack.c.b16 %v5273, %v5271
    %v5498 = vpack.c.b16 %v5274, %v5272
    %v5499 = vpack.c.b16 %v5277, %v5275
    %v5500 = vpack.c.b16 %v5278, %v5276
    %v5501 = vpack.c.b16 %v5281, %v5279
    %v5502 = vpack.c.b16 %v5282, %v5280
    %v5503 = vpack.c.b16 %v5285, %v5283
    %v5504 = vpack.c.b16 %v5286, %v5284
    %v5505 = vpack.c.b16 %v5289, %v5287
    %v5506 = vpack.c.b16 %v5290, %v5288
    %v5507 = vpack.c.b16 %v5293, %v5291
    %v5508 = vpack.c.b16 %v5294, %v5292
    %v5509 = vpack.c.b16 %v5297, %v5295
    %v5510 = vpack.c.b16 %v5298, %v5296
    %v5511 = vpack.c.b16 %v5301, %v5299
    %v5512 = vpack.c.b16 %v5302, %v5300
    %v5513 = vpack.c.b16 %v5305, %v5303
    %v5514 = vpack.c.b16 %v5306, %v5304
    %v5515 = vpack.c.b16 %v5309, %v5307
    %v5516 = vpack.c.b16 %v5310, %v5308
    %v5517 = vpack.c.b16 %v5313, %v5311
    %v5518 = vpack.c.b16 %v5314, %v5312
    %v5519 = vpack.c.b16 %v5317, %v5315
    %v5520 = vpack.c.b16 %v5318, %v5316
    %v5521 = vpack.c.b16 %v5321, %v5319
    %v5522 = vpack.c.b16 %v5322, %v5320
    %v5523 = vpack.c.b16 %v5325, %v5323
    %v5524 = vpack.c.b16 %v5326, %v5324
    %v5525 = vpack.c.b16 %v5329, %v5327
    %v5526 = vpack.c.b16 %v5330, %v5328
    %v5527 = vpack.c.b16 %v5333, %v5331
    %v5528 = vpack.c.b16 %v5334, %v5332
    %v5529 = vpack.c.b16 %v5337, %v5335
    %v5530 = vpack.c.b16 %v5338, %v5336
    %v5531 = vpack.c.b16 %v5341, %v5339
    %v5532 = vpack.c.b16 %v5342, %v5340
    %v5533 = vpack.c.b16 %v5345, %v5343
    %v5534 = vpack.c.b16 %v5346, %v5344
    %v5535 = vpack.c.b16 %v5349, %v5347
    %v5536 = vpack.c.b16 %v5350, %v5348
    %v5537 = vpack.c.b16 %v5353, %v5351
    %v5538 = vpack.c.b16 %v5354, %v5352
    %v5539 = vpack.c.b16 %v5357, %v5355
    %v5540 = vpack.c.b16 %v5358, %v5356
    %v5541 = vpack.c.b16 %v5361, %v5359
    %v5542 = vpack.c.b16 %v5362, %v5360
    %v5543 = vpack.c.b16 %v5365, %v5363
    %v5544 = vpack.c.b16 %v5366, %v5364
    %v5545 = vpack.c.b16 %v5369, %v5367
    %v5546 = vpack.c.b16 %v5370, %v5368
    %v5547 = vpack.c.b16 %v5373, %v5371
    %v5548 = vpack.c.b16 %v5374, %v5372
    %v5549 = vpack.c.b16 %v5377, %v5375
    %v5550 = vpack.c.b16 %v5378, %v5376
    %v5551 = vpack.c.b16 %v5381, %v5379
    %v5552 = vpack.c.b16 %v5382, %v5380
    %v5553 = vpack.c.b16 %v5385, %v5383
    %v5554 = vpack.c.b16 %v5386, %v5384
    %v5555 = vpack.c.b16 %v5389, %v5387
    %v5556 = vpack.c.b16 %v5390, %v5388
    %v5557 = vpack.c.b16 %v5393, %v5391
    %v5558 = vpack.c.b16 %v5394, %v5392
    %v5559 = vpack.c.b16 %v5397, %v5395
    %v5560 = vpack.c.b16 %v5398, %v5396
    %v5561 = vpack.c.b16 %v5401, %v5399
    %v5562 = vpack.c.b16 %v5402, %v5400
    %v5563 = vpack.c.b16 %v5405, %v5403
    %v5564 = vpack.c.b16 %v5406, %v5404
    %v5565 = vpack.c.b16 %v5409, %v5407
    %v5566 = vpack.c.b16 %v5410, %v5408
    %v5567 = vpack.c.b16 %v5413, %v5411
    %v5568 = vpack.c.b16 %v5414, %v5412
    %v5569 = vpack.c.b16 %v5417, %v5415
    %v5570 = vpack.c.b16 %v5418, %v5416
    %v5571 = vpack.c.b16 %v5421, %v5419
    %v5572 = vpack.c.b16 %v5422, %v5420
    %v5573 = vpack.c.b16 %v5425, %v5423
    %v5574 = vpack.c.b16 %v5426, %v5424
    %v5575 = vpack.c.b16 %v5429, %v5427
    %v5576 = vpack.c.b16 %v5430, %v5428
    %v5577 = vpack.c.b16 %v5433, %v5431
    %v5578 = vpack.c.b16 %v5434, %v5432
    %v5579 = vpack.c.b16 %v5437, %v5435
    %v5580 = vpack.c.b16 %v5438, %v5436
    %v5581 = vpack.c.b16 %v5441, %v5439
    %v5582 = vpack.c.b16 %v5442, %v5440
    %v5583 = vpack.c.b16 %v5445, %v5443
    %v5584 = vpack.c.b16 %v5446, %v5444
    %v5585 = vpack.c.b16 %v5449, %v5447
    %v5586 = vpack.c.b16 %v5450, %v5448
    %v5587 = vpack.c.b16 %v5453, %v5451
    %v5588 = vpack.c.b16 %v5454, %v5452
    %v5589 = vpack.c.b16 %v5457, %v5455
    %v5590 = vpack.c.b16 %v5458, %v5456
    %v5591 = vpack.c.b16 %v5461, %v5459
    %v5592 = vpack.c.b16 %v5462, %v5460
    %v5593 = vpack.c.b16 %v5465, %v5463
    %v5594 = vpack.c.b16 %v5466, %v5464
    %5723 = vmatprep.subr.bf16.mxu0 %v5482
    %5724 = vmatpush1.bf16.msra.mxu0 %v5481
    %5725 = vmatprep.subr.bf16.mxu0 %v5480
    %5726 = vmatpush1.bf16.msra.mxu0 %v5479
    %5727 = vmatprep.subr.bf16.mxu0 %v5478
    %5728 = vmatpush1.bf16.msra.mxu0 %v5477
    %5729 = vmatprep.subr.bf16.mxu0 %v5476
    %5730 = vmatpush1.bf16.msra.mxu0 %v5475
    %5731 = vmatprep.subr.bf16.mxu0 %v5474
    %5732 = vmatpush1.bf16.msra.mxu0 %v5473
    %5733 = vmatprep.subr.bf16.mxu0 %v5472
    %5734 = vmatpush1.bf16.msra.mxu0 %v5471
    %5735 = vmatprep.subr.bf16.mxu0 %v5470
    %5736 = vmatpush1.bf16.msra.mxu0 %v5469
    %5737 = vmatprep.subr.bf16.mxu0 %v5468
    %5738 = vmatpush1.bf16.msra.mxu0 %v5467
    %5739 = vmatprep.subr.bf16.mxu0 %v5498
    %5740 = vmatpush2.bf16.msra.mxu0 %v5497
    %5741 = vmatprep.subr.bf16.mxu0 %v5496
    %5742 = vmatpush2.bf16.msra.mxu0 %v5495
    %5743 = vmatprep.subr.bf16.mxu0 %v5494
    %5744 = vmatpush2.bf16.msra.mxu0 %v5493
    %5745 = vmatprep.subr.bf16.mxu0 %v5492
    %5746 = vmatpush2.bf16.msra.mxu0 %v5491
    %5747 = vmatprep.subr.bf16.mxu0 %v5490
    %5748 = vmatpush2.bf16.msra.mxu0 %v5489
    %5749 = vmatprep.subr.bf16.mxu0 %v5488
    %5750 = vmatpush2.bf16.msra.mxu0 %v5487
    %5751 = vmatprep.subr.bf16.mxu0 %v5486
    %5752 = vmatpush2.bf16.msra.mxu0 %v5485
    %5753 = vmatprep.subr.bf16.mxu0 %v5484
    %5754 = vmatpush2.bf16.msra.mxu0 %v5483
    %5755 = vmatprep.mubr.bf16.mxu0 %v4936
    %5756 = vmatmul.mubr.bf16.gmra.mxu0 %v4935
    %v5757 = vpop.f32.mrf.mxu0
    %v5758 = vadd.f32 %v5076, %v5757
    %v5759 = vpop.f32.mrf.mxu0
    %v5760 = vadd.f32 %v5080, %v5759
    %v5761 = vpop.f32.mrf.mxu0
    %v5762 = vpop.f32.mrf.mxu0
    %5763 = vdwg.mxu0
    %5764 = vmatprep.subr.bf16.mxu0 %v5514
    %5765 = vmatpush1.bf16.msra.mxu0 %v5513
    %5766 = vmatprep.subr.bf16.mxu0 %v5512
    %5767 = vmatpush1.bf16.msra.mxu0 %v5511
    %5768 = vmatprep.subr.bf16.mxu0 %v5510
    %5769 = vmatpush1.bf16.msra.mxu0 %v5509
    %5770 = vmatprep.subr.bf16.mxu0 %v5508
    %5771 = vmatpush1.bf16.msra.mxu0 %v5507
    %5772 = vmatprep.subr.bf16.mxu0 %v5506
    %5773 = vmatpush1.bf16.msra.mxu0 %v5505
    %5774 = vmatprep.subr.bf16.mxu0 %v5504
    %5775 = vmatpush1.bf16.msra.mxu0 %v5503
    %5776 = vmatprep.subr.bf16.mxu0 %v5502
    %5777 = vmatpush1.bf16.msra.mxu0 %v5501
    %5778 = vmatprep.subr.bf16.mxu0 %v5500
    %5779 = vmatpush1.bf16.msra.mxu0 %v5499
    %5780 = vmatprep.subr.bf16.mxu0 %v5530
    %5781 = vmatpush2.bf16.msra.mxu0 %v5529
    %5782 = vmatprep.subr.bf16.mxu0 %v5528
    %5783 = vmatpush2.bf16.msra.mxu0 %v5527
    %5784 = vmatprep.subr.bf16.mxu0 %v5526
    %5785 = vmatpush2.bf16.msra.mxu0 %v5525
    %5786 = vmatprep.subr.bf16.mxu0 %v5524
    %5787 = vmatpush2.bf16.msra.mxu0 %v5523
    %5788 = vmatprep.subr.bf16.mxu0 %v5522
    %5789 = vmatpush2.bf16.msra.mxu0 %v5521
    %5790 = vmatprep.subr.bf16.mxu0 %v5520
    %5791 = vmatpush2.bf16.msra.mxu0 %v5519
    %5792 = vmatprep.subr.bf16.mxu0 %v5518
    %5793 = vmatpush2.bf16.msra.mxu0 %v5517
    %5794 = vmatprep.subr.bf16.mxu0 %v5516
    %5795 = vmatpush2.bf16.msra.mxu0 %v5515
    %5796 = vmatprep.mubr.bf16.mxu0 %v4938
    %5797 = vmatmul.mubr.bf16.gmra.mxu0 %v4937
    %v5798 = vpop.f32.mrf.mxu0
    %v5799 = vadd.f32 %v5758, %v5798
    %v5800 = vpop.f32.mrf.mxu0
    %v5801 = vadd.f32 %v5760, %v5800
    %v5802 = vpop.f32.mrf.mxu0
    %v5803 = vpop.f32.mrf.mxu0
    %5804 = vdwg.mxu0
    %5805 = vmatprep.subr.bf16.mxu0 %v5546
    %5806 = vmatpush1.bf16.msra.mxu0 %v5545
    %5807 = vmatprep.subr.bf16.mxu0 %v5544
    %5808 = vmatpush1.bf16.msra.mxu0 %v5543
    %5809 = vmatprep.subr.bf16.mxu0 %v5542
    %5810 = vmatpush1.bf16.msra.mxu0 %v5541
    %5811 = vmatprep.subr.bf16.mxu0 %v5540
    %5812 = vmatpush1.bf16.msra.mxu0 %v5539
    %5813 = vmatprep.subr.bf16.mxu0 %v5538
    %5814 = vmatpush1.bf16.msra.mxu0 %v5537
    %5815 = vmatprep.subr.bf16.mxu0 %v5536
    %5816 = vmatpush1.bf16.msra.mxu0 %v5535
    %5817 = vmatprep.subr.bf16.mxu0 %v5534
    %5818 = vmatpush1.bf16.msra.mxu0 %v5533
    %5819 = vmatprep.subr.bf16.mxu0 %v5532
    %5820 = vmatpush1.bf16.msra.mxu0 %v5531
    %5821 = vmatprep.subr.bf16.mxu0 %v5562
    %5822 = vmatpush2.bf16.msra.mxu0 %v5561
    %5823 = vmatprep.subr.bf16.mxu0 %v5560
    %5824 = vmatpush2.bf16.msra.mxu0 %v5559
    %5825 = vmatprep.subr.bf16.mxu0 %v5558
    %5826 = vmatpush2.bf16.msra.mxu0 %v5557
    %5827 = vmatprep.subr.bf16.mxu0 %v5556
    %5828 = vmatpush2.bf16.msra.mxu0 %v5555
    %5829 = vmatprep.subr.bf16.mxu0 %v5554
    %5830 = vmatpush2.bf16.msra.mxu0 %v5553
    %5831 = vmatprep.subr.bf16.mxu0 %v5552
    %5832 = vmatpush2.bf16.msra.mxu0 %v5551
    %5833 = vmatprep.subr.bf16.mxu0 %v5550
    %5834 = vmatpush2.bf16.msra.mxu0 %v5549
    %5835 = vmatprep.subr.bf16.mxu0 %v5548
    %5836 = vmatpush2.bf16.msra.mxu0 %v5547
    %5837 = vmatprep.mubr.bf16.mxu0 %v4940
    %5838 = vmatmul.mubr.bf16.gmra.mxu0 %v4939
    %v5839 = vpop.f32.mrf.mxu0
    %v5840 = vadd.f32 %v5799, %v5839
    %v5841 = vpop.f32.mrf.mxu0
    %v5842 = vadd.f32 %v5801, %v5841
    %v5843 = vpop.f32.mrf.mxu0
    %v5844 = vpop.f32.mrf.mxu0
    %5845 = vdwg.mxu0
    %5846 = vmatprep.subr.bf16.mxu0 %v5578
    %5847 = vmatpush1.bf16.msra.mxu0 %v5577
    %5848 = vmatprep.subr.bf16.mxu0 %v5576
    %5849 = vmatpush1.bf16.msra.mxu0 %v5575
    %5850 = vmatprep.subr.bf16.mxu0 %v5574
    %5851 = vmatpush1.bf16.msra.mxu0 %v5573
    %5852 = vmatprep.subr.bf16.mxu0 %v5572
    %5853 = vmatpush1.bf16.msra.mxu0 %v5571
    %5854 = vmatprep.subr.bf16.mxu0 %v5570
    %5855 = vmatpush1.bf16.msra.mxu0 %v5569
    %5856 = vmatprep.subr.bf16.mxu0 %v5568
    %5857 = vmatpush1.bf16.msra.mxu0 %v5567
    %5858 = vmatprep.subr.bf16.mxu0 %v5566
    %5859 = vmatpush1.bf16.msra.mxu0 %v5565
    %5860 = vmatprep.subr.bf16.mxu0 %v5564
    %5861 = vmatpush1.bf16.msra.mxu0 %v5563
    %5862 = vmatprep.subr.bf16.mxu0 %v5594
    %5863 = vmatpush2.bf16.msra.mxu0 %v5593
    %5864 = vmatprep.subr.bf16.mxu0 %v5592
    %5865 = vmatpush2.bf16.msra.mxu0 %v5591
    %5866 = vmatprep.subr.bf16.mxu0 %v5590
    %5867 = vmatpush2.bf16.msra.mxu0 %v5589
    %5868 = vmatprep.subr.bf16.mxu0 %v5588
    %5869 = vmatpush2.bf16.msra.mxu0 %v5587
    %5870 = vmatprep.subr.bf16.mxu0 %v5586
    %5871 = vmatpush2.bf16.msra.mxu0 %v5585
    %5872 = vmatprep.subr.bf16.mxu0 %v5584
    %5873 = vmatpush2.bf16.msra.mxu0 %v5583
    %5874 = vmatprep.subr.bf16.mxu0 %v5582
    %5875 = vmatpush2.bf16.msra.mxu0 %v5581
    %5876 = vmatprep.subr.bf16.mxu0 %v5580
    %5877 = vmatpush2.bf16.msra.mxu0 %v5579
    %5878 = vmatprep.mubr.bf16.mxu0 %v4942
    %5879 = vmatmul.mubr.bf16.gmra.mxu0 %v4941
    %v5880 = vpop.f32.mrf.mxu0
    %v5881 = vadd.f32 %v5840, %v5880
    %v5882 = vpop.f32.mrf.mxu0
    %v5883 = vadd.f32 %v5842, %v5882
    %v5884 = vpop.f32.mrf.mxu0
    %v5885 = vpop.f32.mrf.mxu0
    %5886 = vdwg.mxu0
    %v5887 = vmax.f32 %v5881, 0.0
    %v5888 = vmax.f32 %v5883, 0.0
    %v5889 = vpack.c.bf16 %v5887, %v5887
    %v5890 = vpack.c.bf16 %v5888, %v5888
    %v5891 = vld [vmem:[%s9] sm:$0xf]
    %v5892 = vld [vmem:[%s9 + $0x4] sm:$0xf]
    %v5893 = vld [vmem:[%s9 + $0x8] sm:$0xf]
    %v5894 = vld [vmem:[%s9 + $0xc] sm:$0xf]
    %v5895 = vld [vmem:[%s9 + $0x10] sm:$0xf]
    %v5896 = vld [vmem:[%s9 + $0x14] sm:$0xf]
    %v5897 = vld [vmem:[%s9 + $0x18] sm:$0xf]
    %v5898 = vld [vmem:[%s9 + $0x1c] sm:$0xf]
    %v5899 = vld [vmem:[%s9 + $0x20] sm:$0xf]
    %v5900 = vld [vmem:[%s9 + $0x24] sm:$0xf]
    %v5901 = vld [vmem:[%s9 + $0x28] sm:$0xf]
    %v5902 = vld [vmem:[%s9 + $0x2c] sm:$0xf]
    %v5903 = vld [vmem:[%s9 + $0x30] sm:$0xf]
    %v5904 = vld [vmem:[%s9 + $0x34] sm:$0xf]
    %v5905 = vld [vmem:[%s9 + $0x38] sm:$0xf]
    %v5906 = vld [vmem:[%s9 + $0x3c] sm:$0xf]
    %v5907 = vld [vmem:[%s9 + $0x40] sm:$0xf]
    %v5908 = vld [vmem:[%s9 + $0x44] sm:$0xf]
    %v5909 = vld [vmem:[%s9 + $0x48] sm:$0xf]
    %v5910 = vld [vmem:[%s9 + $0x4c] sm:$0xf]
    %v5911 = vld [vmem:[%s9 + $0x50] sm:$0xf]
    %v5912 = vld [vmem:[%s9 + $0x54] sm:$0xf]
    %v5913 = vld [vmem:[%s9 + $0x58] sm:$0xf]
    %v5914 = vld [vmem:[%s9 + $0x5c] sm:$0xf]
    %v5915 = vld [vmem:[%s9 + $0x60] sm:$0xf]
    %v5916 = vld [vmem:[%s9 + $0x64] sm:$0xf]
    %v5917 = vld [vmem:[%s9 + $0x68] sm:$0xf]
    %v5918 = vld [vmem:[%s9 + $0x6c] sm:$0xf]
    %v5919 = vld [vmem:[%s9 + $0x70] sm:$0xf]
    %v5920 = vld [vmem:[%s9 + $0x74] sm:$0xf]
    %v5921 = vld [vmem:[%s9 + $0x78] sm:$0xf]
    %v5922 = vld [vmem:[%s9 + $0x7c] sm:$0xf]
    %v5923 = vld [vmem:[%s10] sm:$0x1]
    %v5925 = vlaneseq
    %v5926 = vshrl.u32 %v5925, 7
    %v5927 = vsub.s32 0, %v5926
    %v5928 = vrot.slane %v5923, %v5927
    %v5962 = vunpack.c.l.b16 %v5891
    %v5963 = vunpack.c.l.b16 %v5892
    %v5964 = vunpack.c.l.b16 %v5893
    %v5965 = vunpack.c.l.b16 %v5894
    %v5966 = vunpack.c.l.b16 %v5895
    %v5967 = vunpack.c.l.b16 %v5896
    %v5968 = vunpack.c.l.b16 %v5897
    %v5969 = vunpack.c.l.b16 %v5898
    %v5970 = vunpack.c.l.b16 %v5899
    %v5971 = vunpack.c.l.b16 %v5900
    %v5972 = vunpack.c.l.b16 %v5901
    %v5973 = vunpack.c.l.b16 %v5902
    %v5974 = vunpack.c.l.b16 %v5903
    %v5975 = vunpack.c.l.b16 %v5904
    %v5976 = vunpack.c.l.b16 %v5905
    %v5977 = vunpack.c.l.b16 %v5906
    %v5978 = vunpack.c.l.b16 %v5907
    %v5979 = vunpack.c.l.b16 %v5908
    %v5980 = vunpack.c.l.b16 %v5909
    %v5981 = vunpack.c.l.b16 %v5910
    %v5982 = vunpack.c.l.b16 %v5911
    %v5983 = vunpack.c.l.b16 %v5912
    %v5984 = vunpack.c.l.b16 %v5913
    %v5985 = vunpack.c.l.b16 %v5914
    %v5986 = vunpack.c.l.b16 %v5915
    %v5987 = vunpack.c.l.b16 %v5916
    %v5988 = vunpack.c.l.b16 %v5917
    %v5989 = vunpack.c.l.b16 %v5918
    %v5990 = vunpack.c.l.b16 %v5919
    %v5991 = vunpack.c.l.b16 %v5920
    %v5992 = vunpack.c.l.b16 %v5921
    %v5993 = vunpack.c.l.b16 %v5922
    %v5994 = vpack.c.b16 %v5963, %v5962
    %v5995 = vpack.c.b16 %v5965, %v5964
    %v5996 = vpack.c.b16 %v5967, %v5966
    %v5997 = vpack.c.b16 %v5969, %v5968
    %v5998 = vpack.c.b16 %v5971, %v5970
    %v5999 = vpack.c.b16 %v5973, %v5972
    %v6000 = vpack.c.b16 %v5975, %v5974
    %v6001 = vpack.c.b16 %v5977, %v5976
    %v6002 = vpack.c.b16 %v5979, %v5978
    %v6003 = vpack.c.b16 %v5981, %v5980
    %v6004 = vpack.c.b16 %v5983, %v5982
    %v6005 = vpack.c.b16 %v5985, %v5984
    %v6006 = vpack.c.b16 %v5987, %v5986
    %v6007 = vpack.c.b16 %v5989, %v5988
    %v6008 = vpack.c.b16 %v5991, %v5990
    %v6009 = vpack.c.b16 %v5993, %v5992
    %6026 = vmatprep.subr.bf16.mxu0 0
    %6027 = vmatpush1.bf16.msra.mxu0 %v6001
    %6028 = vmatprep.subr.bf16.mxu0 0
    %6029 = vmatpush1.bf16.msra.mxu0 %v6000
    %6030 = vmatprep.subr.bf16.mxu0 0
    %6031 = vmatpush1.bf16.msra.mxu0 %v5999
    %6032 = vmatprep.subr.bf16.mxu0 0
    %6033 = vmatpush1.bf16.msra.mxu0 %v5998
    %6034 = vmatprep.subr.bf16.mxu0 0
    %6035 = vmatpush1.bf16.msra.mxu0 %v5997
    %6036 = vmatprep.subr.bf16.mxu0 0
    %6037 = vmatpush1.bf16.msra.mxu0 %v5996
    %6038 = vmatprep.subr.bf16.mxu0 0
    %6039 = vmatpush1.bf16.msra.mxu0 %v5995
    %6040 = vmatprep.subr.bf16.mxu0 0
    %6041 = vmatpush1.bf16.msra.mxu0 %v5994
    %6042 = vmatprep.subr.bf16.mxu0 0
    %6043 = vmatpush2.bf16.msra.mxu0 %v6009
    %6044 = vmatprep.subr.bf16.mxu0 0
    %6045 = vmatpush2.bf16.msra.mxu0 %v6008
    %6046 = vmatprep.subr.bf16.mxu0 0
    %6047 = vmatpush2.bf16.msra.mxu0 %v6007
    %6048 = vmatprep.subr.bf16.mxu0 0
    %6049 = vmatpush2.bf16.msra.mxu0 %v6006
    %6050 = vmatprep.subr.bf16.mxu0 0
    %6051 = vmatpush2.bf16.msra.mxu0 %v6005
    %6052 = vmatprep.subr.bf16.mxu0 0
    %6053 = vmatpush2.bf16.msra.mxu0 %v6004
    %6054 = vmatprep.subr.bf16.mxu0 0
    %6055 = vmatpush2.bf16.msra.mxu0 %v6003
    %6056 = vmatprep.subr.bf16.mxu0 0
    %6057 = vmatpush2.bf16.msra.mxu0 %v6002
    %6058 = vmatprep.mubr.bf16.mxu0 %v5890
    %6059 = vmatmul.mubr.bf16.gmra.mxu0 %v5889
    %v6060 = vpop.f32.mrf.mxu0
    %v6061 = vadd.f32 %v5928, %v6060
    %v6062 = vpop.f32.mrf.mxu0
    %v6063 = vpop.f32.mrf.mxu0
    %v6064 = vpop.f32.mrf.mxu0
    %6065 = vdwg.mxu0
    %6066 = vst [vmem:[#allocation4] sm:$0x3] %v6061
    // Predicated region
    $region46: #{net_forward.1} parent=1 // pred_check
      _
    $region47: #{net_forward.1} parent=1 // pred_check_branch
      %6068 = sbr.rel (0) target = $region49
    $region48: #{net_forward.1} parent=1 // pred_region
      %s6070 = ssub.s32 32, 32
      %6071 = vsyncadd [#allocation5], %s6070
      %s6073 = sshll.u32 [#allocation4], 4
      %s6074 = int_to_ptr.vmem [resolvable:$true] %s6073
      %6076 = dma.vmem_to_hbm [thread:$0]  %s6074, 32, %s11, [#allocation5]
    $region49: #{net_forward.1} parent=1 // pred_fallthru
      _
    // Predicated region
    $region50: #{net_forward.1} parent=1 // pred_check
      _
    $region51: #{net_forward.1} parent=1 // pred_check_branch
      %6078 = sbr.rel (0) target = $region53
    $region52: #{net_forward.1} parent=1 // pred_region
      %6079 = dma.done [#allocation5], 32
    $region53: #{net_forward.1} parent=1 // pred_fallthru
      _
    %6080 = vsyncpa [#allocation5], 1

</llo_original>
